<compile_context>
chip_gen: v6e
topology: v6e:2x2x1
jax: 0.10.0
libtpu: 0.0.40
codegen_flags: <defaults>
</compile_context>

<pallas_src>
import functools

import jax
import jax.numpy as jnp
from jax import lax
from jax.experimental import pallas as pl
from jax.experimental.pallas import tpu as pltpu

# ----- module hyper-parameters (chosen so the hard-coded nn.Linear(1200, 1) and
#       the computed mlp2 size are consistent with the actual conv/pool output) --
MAX_NODES = 8          # Conv1d in_channels
GRAPH_OUT_CHS = 104    # -> y path length 104 -> 16*26 = 416 = mlp2_size
EMB_SIZE = 196         # -> z path length 300 -> 16*75 = 1200 = mlp1 in_features

C1_OUT, C1_K = 128, 3            # feature1: Conv1d(max_nodes, 128, k=3, pad=1)
C2_OUT, C2_K = 16, 2             # feature2: Conv1d(128, 16, k=2, pad=1)
CIN_IM2COL = C1_K * MAX_NODES    # 24 = conv1 taps folded into the lane axis

CONV_CHUNK = 256                 # rows per streamed conv1 matmul chunk
POOL_CHUNK = 128                 # rows per streamed pool1 max chunk


def get_conv_mp_out_size(in_size, out_channels, mps):
    size = in_size
    for k, s in mps:
        size = round((size - k) / s + 1)
    size = size + 1 if size % 2 != 0 else size
    return int(size * out_channels)


def _seq_sizes(L):
    # conv1 (pad 1, k 3) keeps L; maxpool1 k3 s2; conv2 (pad 1, k 2) -> +1; maxpool2 k2 s2
    L2 = (L - 3) // 2 + 1
    L3 = L2 + 1
    L4 = (L3 - 2) // 2 + 1
    return L2, L3, L4


def _pick_block(B, cap=8):
    # largest divisor of B that is <= cap (batch elements per grid step)
    for bb in range(min(cap, B), 0, -1):
        if B % bb == 0:
            return bb
    return 1


# --------------------------------------------------------------------------- #
#                                 Pallas kernel                               #
# --------------------------------------------------------------------------- #
def _readout_kernel(Bb, LT, Lz, Ly,
                    zy_ref, w1_ref, b1_ref, w2_ref, b2_ref,
                    w1r_ref, w2r_ref, mb_ref, o_ref,
                    a1_buf, m_buf, p1_buf, a2_buf):
    """One grid step handles Bb batch elements, both (z, y) branches fused."""
    rows_total = Bb * LT

    # ---- Conv1d(8 -> 128, k=3, pad=1) + ReLU, all rows at once (im2col) ----
    # Streamed in chunks so the f32 result never lives as a giant vreg value.
    for r0 in range(0, rows_total, CONV_CHUNK):
        rc = min(CONV_CHUNK, rows_total - r0)
        a1_buf[pl.ds(r0, rc), :] = jnp.maximum(
            jnp.dot(zy_ref[pl.ds(r0, rc), :], w1_ref[...],
                    preferred_element_type=jnp.float32) + b1_ref[...], 0.0)

    def trunk(off, L):
        L2, L3, L4 = _seq_sizes(L)

        # ---- MaxPool1d(k=3, s=2): max of 3 contiguous views (chunked), then
        #      a single sublane-strided pick ----
        for r0 in range(0, L - 2, POOL_CHUNK):
            rc = min(POOL_CHUNK, (L - 2) - r0)
            m_buf[pl.ds(r0, rc), :] = jnp.maximum(
                jnp.maximum(a1_buf[pl.ds(off + r0, rc), :],
                            a1_buf[pl.ds(off + r0 + 1, rc), :]),
                a1_buf[pl.ds(off + r0 + 2, rc), :])

        # zero-pad (padding=1) for conv2
        p1_buf[pl.ds(0, 1), :] = jnp.zeros((1, C1_OUT), jnp.float32)
        p1_buf[pl.ds(1, L2), :] = m_buf[pl.ds(0, L2, stride=2), :]
        p1_buf[pl.ds(L2 + 1, 1), :] = jnp.zeros((1, C1_OUT), jnp.float32)

        # ---- Conv1d(128 -> 16, k=2, pad=1) + ReLU ----
        a2_buf[pl.ds(0, L3), :] = jnp.maximum(
            jnp.dot(p1_buf[pl.ds(0, L3), :], w2_ref[0],
                    preferred_element_type=jnp.float32)
            + jnp.dot(p1_buf[pl.ds(1, L3), :], w2_ref[1],
                      preferred_element_type=jnp.float32)
            + b2_ref[...], 0.0)

        # ---- MaxPool1d(k=2, s=2) ----
        return jnp.maximum(a2_buf[pl.ds(0, L4, stride=2), :],
                           a2_buf[pl.ds(1, L4, stride=2), :])   # (L4, 16)

    lane = lax.broadcasted_iota(jnp.int32, (1, 2), 1)           # hoisted out of loop
    for b in range(Bb):
        base = b * LT
        # z branch: cat([h, x], 1)  ->  trunk  ->  mlp1 (1 output)
        p2_z = trunk(base, Lz)
        # y branch: h alone          ->  trunk  ->  mlp2 (2 outputs)
        p2_y = trunk(base + Lz, Ly)

        out_z = jnp.sum(w1r_ref[...] * p2_z) + mb_ref[0]
        out_y0 = jnp.sum(w2r_ref[0] * p2_y) + mb_ref[1]
        out_y1 = jnp.sum(w2r_ref[1] * p2_y) + mb_ref[2]

        # dense 2-lane output row: out = out_z * out_y
        o_ref[pl.ds(b, 1), :] = jnp.where(lane == 0,
                                          out_z * out_y0, out_z * out_y1)


# --------------------------------------------------------------------------- #
#                                   Wrapper                                   #
# --------------------------------------------------------------------------- #
def readout_forward(h, x, w1, b1, w2, b2, wm1, bm1, wm2, bm2):
    N, Ly = h.shape
    B = N // MAX_NODES
    Lz = Ly + x.shape[1]
    L2z, L3z, L4z = _seq_sizes(Lz)
    _L2y, _L3y, L4y = _seq_sizes(Ly)

    # inputs: NCL -> (B, L, C) channels-last (channels into the lane axis)
    z_t = jnp.concatenate([h, x], axis=1).reshape(B, MAX_NODES, Lz).transpose(0, 2, 1)
    y_t = h.reshape(B, MAX_NODES, Ly).transpose(0, 2, 1)

    def im2col(a, L):  # (B, L, C) -> (B, L, 3*C): taps k=0,1,2 <-> rows l-1, l, l+1
        ap = jnp.pad(a, ((0, 0), (1, 1), (0, 0)))
        return jnp.concatenate([ap[:, 0:L], ap[:, 1:L + 1], ap[:, 2:L + 2]], axis=-1)

    LT = -(-(Lz + Ly) // 8) * 8             # rows per batch element (multiple of 8)
    zy = jnp.concatenate(
        [im2col(z_t, Lz), im2col(y_t, Ly),
         jnp.zeros((B, LT - Lz - Ly, CIN_IM2COL), z_t.dtype)], axis=1)   # (B, LT, 24)

    Bb = _pick_block(B)
    G = B // Bb
    zy = zy.reshape(G, Bb * LT, CIN_IM2COL)

    # conv weights: (C_out, C_in, K) -> im2col (K*C_in, C_out) / (K, C_in, C_out)
    w1k = jnp.transpose(w1, (2, 1, 0)).reshape(CIN_IM2COL, C1_OUT)       # (24, 128)
    w2k = jnp.transpose(w2, (2, 1, 0))                                    # (2, 128, 16)
    b1r = b1.reshape(1, C1_OUT)
    b2r = b2.reshape(1, C2_OUT)

    # mlp weights rearranged to the kernel's (length, channel) activation layout
    w1r = wm1.reshape(C2_OUT, L4z).T                                      # (L4z, 16)
    w2r = wm2.reshape(2, C2_OUT, L4y).transpose(0, 2, 1)                  # (2, L4y, 16)
    mb = jnp.concatenate([bm1, bm2]).astype(jnp.float32)                  # (3,) SMEM

    kernel = functools.partial(_readout_kernel, Bb, LT, Lz, Ly)

    out = pl.pallas_call(
        kernel,
        out_shape=jax.ShapeDtypeStruct((G, Bb, 2), jnp.float32),
        grid=(G,),
        in_specs=[
            pl.BlockSpec((None, Bb * LT, CIN_IM2COL), lambda g: (g, 0, 0)),
            pl.BlockSpec((CIN_IM2COL, C1_OUT), lambda g: (0, 0)),
            pl.BlockSpec((1, C1_OUT), lambda g: (0, 0)),
            pl.BlockSpec((C2_K, C1_OUT, C2_OUT), lambda g: (0, 0, 0)),
            pl.BlockSpec((1, C2_OUT), lambda g: (0, 0)),
            pl.BlockSpec((L4z, C2_OUT), lambda g: (0, 0)),
            pl.BlockSpec((2, L4y, C2_OUT), lambda g: (0, 0, 0)),
            pl.BlockSpec(memory_space=pltpu.MemorySpace.SMEM),
        ],
        out_specs=pl.BlockSpec((None, Bb, 2), lambda g: (g, 0, 0)),
        scratch_shapes=[
            pltpu.VMEM((Bb * LT, C1_OUT), jnp.float32),   # conv1+ReLU (all rows)
            pltpu.VMEM((Lz, C1_OUT), jnp.float32),        # pool1 pre-stride max
            pltpu.VMEM((L2z + 2, C1_OUT), jnp.float32),   # padded pool1 output
            pltpu.VMEM((L3z, C2_OUT), jnp.float32),       # conv2+ReLU output
        ],
        compiler_params=pltpu.CompilerParams(dimension_semantics=("parallel",)),
    )(zy, w1k, b1r, w2k, b2r, w1r, w2r, mb)

    return out.reshape(B, 2)


# --------------------------------------------------------------------------- #
#                         Pure-JAX reference (for checking)                   #
# --------------------------------------------------------------------------- #
def readout_reference(h, x, w1, b1, w2, b2, wm1, bm1, wm2, bm2):
    B = h.shape[0] // MAX_NODES

    def conv1d(inp, w, b, pad):  # inp (B, C, L) NCL
        out = lax.conv_general_dilated(inp, w, window_strides=(1,),
                                       padding=[(pad, pad)],
                                       dimension_numbers=("NCH", "OIH", "NCH"))
        return out + b[None, :, None]

    def maxpool(inp, k, s):
        return lax.reduce_window(inp, -jnp.inf, lax.max, (1, 1, k), (1, 1, s), "VALID")

    def trunk(feat):
        o = maxpool(jax.nn.relu(conv1d(feat, w1, b1, 1)), 3, 2)
        o = maxpool(jax.nn.relu(conv1d(o, w2, b2, 1)), 2, 2)
        return o.reshape(o.shape[0], -1)

    zf = jnp.concatenate([h, x], axis=1).reshape(B, MAX_NODES, -1)
    yf = h.reshape(B, MAX_NODES, -1)
    out_z = trunk(zf) @ wm1.T + bm1
    out_y = trunk(yf) @ wm2.T + bm2
    return out_z * out_y


# --------------------------------------------------------------------------- #
if __name__ == "__main__":
    B = 2
    N = B * MAX_NODES
    Lz = GRAPH_OUT_CHS + EMB_SIZE
    _, _, L4z = _seq_sizes(Lz)
    _, _, L4y = _seq_sizes(GRAPH_OUT_CHS)

    mlp1_in = 1200  # hard-coded in the PyTorch module
    mlp2_in = get_conv_mp_out_size(GRAPH_OUT_CHS, C2_OUT, [(3, 2), (2, 2)])
    assert mlp1_in == C2_OUT * L4z and mlp2_in == C2_OUT * L4y

    key = jax.random.PRNGKey(0)
    ks = jax.random.split(key, 8)
    h = jax.random.normal(ks[0], (N, GRAPH_OUT_CHS), jnp.float32)
    x = jax.random.normal(ks[1], (N, EMB_SIZE), jnp.float32)

    # deterministic synthetic parameters (same shapes as the nn.Module layers)
    w1 = 0.05 * jax.random.normal(ks[2], (C1_OUT, MAX_NODES, C1_K), jnp.float32)
    b1 = 0.05 * jax.random.normal(ks[3], (C1_OUT,), jnp.float32)
    w2 = 0.05 * jax.random.normal(ks[4], (C2_OUT, C1_OUT, C2_K), jnp.float32)
    b2 = 0.05 * jax.random.normal(ks[5], (C2_OUT,), jnp.float32)
    wm1 = 0.05 * jax.random.normal(ks[6], (1, mlp1_in), jnp.float32)
    bm1 = jnp.array([0.03], jnp.float32)
    wm2 = 0.05 * jax.random.normal(ks[7], (2, mlp2_in), jnp.float32)
    bm2 = jnp.array([0.01, -0.02], jnp.float32)

    out = readout_forward(h, x, w1, b1, w2, b2, wm1, bm1, wm2, bm2)
    out = jax.block_until_ready(out)

    ref = readout_reference(h, x, w1, b1, w2, b2, wm1, bm1, wm2, bm2)
    err = float(jnp.max(jnp.abs(out - ref)))
    scale = float(jnp.max(jnp.abs(ref)))
    if err <= 2e-2 * max(1.0, scale):
        print("KERNEL_OK")
    else:
        print(f"MISMATCH max_abs_err={err} ref_scale={scale}")
</pallas_src>

<mosaic_0001>
module attributes {stable_mosaic.version = 11 : i64} {
  func.func @_readout_kernel(%arg0: i32, %arg1: memref<1x816x24xf32, #tpu.memory_space<vmem>>, %arg2: memref<24x128xf32, #tpu.memory_space<vmem>>, %arg3: memref<1x128xf32, #tpu.memory_space<vmem>>, %arg4: memref<2x128x16xf32, #tpu.memory_space<vmem>>, %arg5: memref<1x16xf32, #tpu.memory_space<vmem>>, %arg6: memref<75x16xf32, #tpu.memory_space<vmem>>, %arg7: memref<2x26x16xf32, #tpu.memory_space<vmem>>, %arg8: memref<3xf32, #tpu.memory_space<smem>>, %arg9: memref<1x2x2xf32, #tpu.memory_space<vmem>>, %arg10: memref<816x128xf32, #tpu.memory_space<vmem>>, %arg11: memref<300x128xf32, #tpu.memory_space<vmem>>, %arg12: memref<151x128xf32, #tpu.memory_space<vmem>>, %arg13: memref<150x16xf32, #tpu.memory_space<vmem>>) attributes {dimension_semantics = [#tpu.dimension_semantics<parallel>], iteration_bounds = array<i64: 1>, scalar_prefetch = 0 : i64, scratch_operands = 4 : i64, tpu.core_type = #tpu.core_type<tc>, window_params = [{transform_indices = @transform_0, window_bounds = array<i64: 1, 816, 24>}, {pipeline_mode = #tpu.pipeline_mode<synchronous>, transform_indices = @transform_1, window_bounds = array<i64: 24, 128>}, {pipeline_mode = #tpu.pipeline_mode<synchronous>, transform_indices = @transform_2, window_bounds = array<i64: 1, 128>}, {pipeline_mode = #tpu.pipeline_mode<synchronous>, transform_indices = @transform_3, window_bounds = array<i64: 2, 128, 16>}, {pipeline_mode = #tpu.pipeline_mode<synchronous>, transform_indices = @transform_4, window_bounds = array<i64: 1, 16>}, {pipeline_mode = #tpu.pipeline_mode<synchronous>, transform_indices = @transform_5, window_bounds = array<i64: 75, 16>}, {pipeline_mode = #tpu.pipeline_mode<synchronous>, transform_indices = @transform_6, window_bounds = array<i64: 2, 26, 16>}, {transform_indices = @transform_7, window_bounds = array<i64: 3>}, {transform_indices = @transform_8, window_bounds = array<i64: 1, 2, 2>}]} {
    %c0 = arith.constant 0 : index
    %c0_0 = arith.constant 0 : index
    %c0_1 = arith.constant 0 : index
    %0 = vector.load %arg1[%c0, %c0_0, %c0_1] : memref<1x816x24xf32, #tpu.memory_space<vmem>>, vector<1x256x24xf32>
    %1 = vector.shape_cast %0 : vector<1x256x24xf32> to vector<256x24xf32>
    %c0_2 = arith.constant 0 : index
    %c0_3 = arith.constant 0 : index
    %2 = vector.load %arg2[%c0_2, %c0_3] : memref<24x128xf32, #tpu.memory_space<vmem>>, vector<24x128xf32>
    %cst = arith.constant dense<0.000000e+00> : vector<256x128xf32>
    %3 = tpu.matmul %1, %2, %cst {dimension_numbers = #tpu.dot_dimension_numbers<[1], [0], [0], [1], [0, 0, 1, 1], [], []>} : vector<256x24xf32>, vector<24x128xf32>, vector<256x128xf32> -> vector<256x128xf32>
    %c0_4 = arith.constant 0 : index
    %c0_5 = arith.constant 0 : index
    %4 = vector.load %arg3[%c0_4, %c0_5] : memref<1x128xf32, #tpu.memory_space<vmem>>, vector<1x128xf32>
    %5 = vector.broadcast %4 : vector<1x128xf32> to vector<256x128xf32>
    %6 = arith.addf %3, %5 : vector<256x128xf32>
    %cst_6 = arith.constant 0.000000e+00 : f32
    %7 = vector.broadcast %cst_6 : f32 to vector<256x128xf32>
    %8 = arith.maximumf %6, %7 : vector<256x128xf32>
    %c0_7 = arith.constant 0 : index
    %c0_8 = arith.constant 0 : index
    %9 = vector.load %arg10[%c0_7, %c0_8] : memref<816x128xf32, #tpu.memory_space<vmem>>, vector<256x128xf32>
    tpu.vector_store %arg10[%c0_7, %c0_8], %8 {strides = array<i32>} : memref<816x128xf32, #tpu.memory_space<vmem>>, vector<256x128xf32>,
    %c0_9 = arith.constant 0 : index
    %c256 = arith.constant 256 : index
    %c0_10 = arith.constant 0 : index
    %10 = vector.load %arg1[%c0_9, %c256, %c0_10] : memref<1x816x24xf32, #tpu.memory_space<vmem>>, vector<1x256x24xf32>
    %11 = vector.shape_cast %10 : vector<1x256x24xf32> to vector<256x24xf32>
    %c0_11 = arith.constant 0 : index
    %c0_12 = arith.constant 0 : index
    %12 = vector.load %arg2[%c0_11, %c0_12] : memref<24x128xf32, #tpu.memory_space<vmem>>, vector<24x128xf32>
    %cst_13 = arith.constant dense<0.000000e+00> : vector<256x128xf32>
    %13 = tpu.matmul %11, %12, %cst_13 {dimension_numbers = #tpu.dot_dimension_numbers<[1], [0], [0], [1], [0, 0, 1, 1], [], []>} : vector<256x24xf32>, vector<24x128xf32>, vector<256x128xf32> -> vector<256x128xf32>
    %c0_14 = arith.constant 0 : index
    %c0_15 = arith.constant 0 : index
    %14 = vector.load %arg3[%c0_14, %c0_15] : memref<1x128xf32, #tpu.memory_space<vmem>>, vector<1x128xf32>
    %15 = vector.broadcast %14 : vector<1x128xf32> to vector<256x128xf32>
    %16 = arith.addf %13, %15 : vector<256x128xf32>
    %cst_16 = arith.constant 0.000000e+00 : f32
    %17 = vector.broadcast %cst_16 : f32 to vector<256x128xf32>
    %18 = arith.maximumf %16, %17 : vector<256x128xf32>
    %c256_17 = arith.constant 256 : index
    %c0_18 = arith.constant 0 : index
    %19 = vector.load %arg10[%c256_17, %c0_18] : memref<816x128xf32, #tpu.memory_space<vmem>>, vector<256x128xf32>
    tpu.vector_store %arg10[%c256_17, %c0_18], %18 {strides = array<i32>} : memref<816x128xf32, #tpu.memory_space<vmem>>, vector<256x128xf32>,
    %c0_19 = arith.constant 0 : index
    %c512 = arith.constant 512 : index
    %c0_20 = arith.constant 0 : index
    %20 = vector.load %arg1[%c0_19, %c512, %c0_20] : memref<1x816x24xf32, #tpu.memory_space<vmem>>, vector<1x256x24xf32>
    %21 = vector.shape_cast %20 : vector<1x256x24xf32> to vector<256x24xf32>
    %c0_21 = arith.constant 0 : index
    %c0_22 = arith.constant 0 : index
    %22 = vector.load %arg2[%c0_21, %c0_22] : memref<24x128xf32, #tpu.memory_space<vmem>>, vector<24x128xf32>
    %cst_23 = arith.constant dense<0.000000e+00> : vector<256x128xf32>
    %23 = tpu.matmul %21, %22, %cst_23 {dimension_numbers = #tpu.dot_dimension_numbers<[1], [0], [0], [1], [0, 0, 1, 1], [], []>} : vector<256x24xf32>, vector<24x128xf32>, vector<256x128xf32> -> vector<256x128xf32>
    %c0_24 = arith.constant 0 : index
    %c0_25 = arith.constant 0 : index
    %24 = vector.load %arg3[%c0_24, %c0_25] : memref<1x128xf32, #tpu.memory_space<vmem>>, vector<1x128xf32>
    %25 = vector.broadcast %24 : vector<1x128xf32> to vector<256x128xf32>
    %26 = arith.addf %23, %25 : vector<256x128xf32>
    %cst_26 = arith.constant 0.000000e+00 : f32
    %27 = vector.broadcast %cst_26 : f32 to vector<256x128xf32>
    %28 = arith.maximumf %26, %27 : vector<256x128xf32>
    %c512_27 = arith.constant 512 : index
    %c0_28 = arith.constant 0 : index
    %29 = vector.load %arg10[%c512_27, %c0_28] : memref<816x128xf32, #tpu.memory_space<vmem>>, vector<256x128xf32>
    tpu.vector_store %arg10[%c512_27, %c0_28], %28 {strides = array<i32>} : memref<816x128xf32, #tpu.memory_space<vmem>>, vector<256x128xf32>,
    %c0_29 = arith.constant 0 : index
    %c768 = arith.constant 768 : index
    %c0_30 = arith.constant 0 : index
    %30 = vector.load %arg1[%c0_29, %c768, %c0_30] : memref<1x816x24xf32, #tpu.memory_space<vmem>>, vector<1x48x24xf32>
    %31 = vector.shape_cast %30 : vector<1x48x24xf32> to vector<48x24xf32>
    %c0_31 = arith.constant 0 : index
    %c0_32 = arith.constant 0 : index
    %32 = vector.load %arg2[%c0_31, %c0_32] : memref<24x128xf32, #tpu.memory_space<vmem>>, vector<24x128xf32>
    %cst_33 = arith.constant dense<0.000000e+00> : vector<48x128xf32>
    %33 = tpu.matmul %31, %32, %cst_33 {dimension_numbers = #tpu.dot_dimension_numbers<[1], [0], [0], [1], [0, 0, 1, 1], [], []>} : vector<48x24xf32>, vector<24x128xf32>, vector<48x128xf32> -> vector<48x128xf32>
    %c0_34 = arith.constant 0 : index
    %c0_35 = arith.constant 0 : index
    %34 = vector.load %arg3[%c0_34, %c0_35] : memref<1x128xf32, #tpu.memory_space<vmem>>, vector<1x128xf32>
    %35 = vector.broadcast %34 : vector<1x128xf32> to vector<48x128xf32>
    %36 = arith.addf %33, %35 : vector<48x128xf32>
    %cst_36 = arith.constant 0.000000e+00 : f32
    %37 = vector.broadcast %cst_36 : f32 to vector<48x128xf32>
    %38 = arith.maximumf %36, %37 : vector<48x128xf32>
    %c768_37 = arith.constant 768 : index
    %c0_38 = arith.constant 0 : index
    %39 = vector.load %arg10[%c768_37, %c0_38] : memref<816x128xf32, #tpu.memory_space<vmem>>, vector<48x128xf32>
    tpu.vector_store %arg10[%c768_37, %c0_38], %38 {strides = array<i32>} : memref<816x128xf32, #tpu.memory_space<vmem>>, vector<48x128xf32>,
    %40 = tpu.iota {dimensions = array<i32: 1>} : vector<1x2xi32>
    %c0_39 = arith.constant 0 : index
    %c0_40 = arith.constant 0 : index
    %41 = vector.load %arg10[%c0_39, %c0_40] : memref<816x128xf32, #tpu.memory_space<vmem>>, vector<128x128xf32>
    %c1 = arith.constant 1 : index
    %c0_41 = arith.constant 0 : index
    %42 = vector.load %arg10[%c1, %c0_41] : memref<816x128xf32, #tpu.memory_space<vmem>>, vector<128x128xf32>
    %43 = arith.maximumf %41, %42 : vector<128x128xf32>
    %c2 = arith.constant 2 : index
    %c0_42 = arith.constant 0 : index
    %44 = vector.load %arg10[%c2, %c0_42] : memref<816x128xf32, #tpu.memory_space<vmem>>, vector<128x128xf32>
    %45 = arith.maximumf %43, %44 : vector<128x128xf32>
    %c0_43 = arith.constant 0 : index
    %c0_44 = arith.constant 0 : index
    %46 = vector.load %arg11[%c0_43, %c0_44] : memref<300x128xf32, #tpu.memory_space<vmem>>, vector<128x128xf32>
    tpu.vector_store %arg11[%c0_43, %c0_44], %45 {strides = array<i32>} : memref<300x128xf32, #tpu.memory_space<vmem>>, vector<128x128xf32>,
    %c128 = arith.constant 128 : index
    %c0_45 = arith.constant 0 : index
    %47 = vector.load %arg10[%c128, %c0_45] : memref<816x128xf32, #tpu.memory_space<vmem>>, vector<128x128xf32>
    %c129 = arith.constant 129 : index
    %c0_46 = arith.constant 0 : index
    %48 = vector.load %arg10[%c129, %c0_46] : memref<816x128xf32, #tpu.memory_space<vmem>>, vector<128x128xf32>
    %49 = arith.maximumf %47, %48 : vector<128x128xf32>
    %c130 = arith.constant 130 : index
    %c0_47 = arith.constant 0 : index
    %50 = vector.load %arg10[%c130, %c0_47] : memref<816x128xf32, #tpu.memory_space<vmem>>, vector<128x128xf32>
    %51 = arith.maximumf %49, %50 : vector<128x128xf32>
    %c128_48 = arith.constant 128 : index
    %c0_49 = arith.constant 0 : index
    %52 = vector.load %arg11[%c128_48, %c0_49] : memref<300x128xf32, #tpu.memory_space<vmem>>, vector<128x128xf32>
    tpu.vector_store %arg11[%c128_48, %c0_49], %51 {strides = array<i32>} : memref<300x128xf32, #tpu.memory_space<vmem>>, vector<128x128xf32>,
    %c256_50 = arith.constant 256 : index
    %c0_51 = arith.constant 0 : index
    %53 = vector.load %arg10[%c256_50, %c0_51] : memref<816x128xf32, #tpu.memory_space<vmem>>, vector<42x128xf32>
    %c257 = arith.constant 257 : index
    %c0_52 = arith.constant 0 : index
    %54 = vector.load %arg10[%c257, %c0_52] : memref<816x128xf32, #tpu.memory_space<vmem>>, vector<42x128xf32>
    %55 = arith.maximumf %53, %54 : vector<42x128xf32>
    %c258 = arith.constant 258 : index
    %c0_53 = arith.constant 0 : index
    %56 = vector.load %arg10[%c258, %c0_53] : memref<816x128xf32, #tpu.memory_space<vmem>>, vector<42x128xf32>
    %57 = arith.maximumf %55, %56 : vector<42x128xf32>
    %c256_54 = arith.constant 256 : index
    %c0_55 = arith.constant 0 : index
    %58 = vector.load %arg11[%c256_54, %c0_55] : memref<300x128xf32, #tpu.memory_space<vmem>>, vector<42x128xf32>
    tpu.vector_store %arg11[%c256_54, %c0_55], %57 {strides = array<i32>} : memref<300x128xf32, #tpu.memory_space<vmem>>, vector<42x128xf32>,
    %cst_56 = arith.constant 0.000000e+00 : f32
    %59 = vector.broadcast %cst_56 : f32 to vector<1x128xf32>
    %c0_57 = arith.constant 0 : index
    %c0_58 = arith.constant 0 : index
    %60 = vector.load %arg12[%c0_57, %c0_58] : memref<151x128xf32, #tpu.memory_space<vmem>>, vector<1x128xf32>
    tpu.vector_store %arg12[%c0_57, %c0_58], %59 {strides = array<i32>} : memref<151x128xf32, #tpu.memory_space<vmem>>, vector<1x128xf32>,
    %c0_59 = arith.constant 0 : index
    %c0_60 = arith.constant 0 : index
    %61 = tpu.strided_load %arg11[%c0_59, %c0_60] {strides = array<i32: 2, 1>} : memref<300x128xf32, #tpu.memory_space<vmem>>, vector<149x128xf32>
    %c1_61 = arith.constant 1 : index
    %c0_62 = arith.constant 0 : index
    %62 = vector.load %arg12[%c1_61, %c0_62] : memref<151x128xf32, #tpu.memory_space<vmem>>, vector<149x128xf32>
    tpu.vector_store %arg12[%c1_61, %c0_62], %61 {strides = array<i32>} : memref<151x128xf32, #tpu.memory_space<vmem>>, vector<149x128xf32>,
    %cst_63 = arith.constant 0.000000e+00 : f32
    %63 = vector.broadcast %cst_63 : f32 to vector<1x128xf32>
    %c150 = arith.constant 150 : index
    %c0_64 = arith.constant 0 : index
    %64 = vector.load %arg12[%c150, %c0_64] : memref<151x128xf32, #tpu.memory_space<vmem>>, vector<1x128xf32>
    tpu.vector_store %arg12[%c150, %c0_64], %63 {strides = array<i32>} : memref<151x128xf32, #tpu.memory_space<vmem>>, vector<1x128xf32>,
    %c0_65 = arith.constant 0 : index
    %c0_66 = arith.constant 0 : index
    %65 = vector.load %arg12[%c0_65, %c0_66] : memref<151x128xf32, #tpu.memory_space<vmem>>, vector<150x128xf32>
    %c0_67 = arith.constant 0 : index
    %c0_68 = arith.constant 0 : index
    %c0_69 = arith.constant 0 : index
    %66 = vector.load %arg4[%c0_67, %c0_68, %c0_69] : memref<2x128x16xf32, #tpu.memory_space<vmem>>, vector<1x128x16xf32>
    %67 = vector.shape_cast %66 : vector<1x128x16xf32> to vector<128x16xf32>
    %cst_70 = arith.constant dense<0.000000e+00> : vector<150x16xf32>
    %68 = tpu.matmul %65, %67, %cst_70 {dimension_numbers = #tpu.dot_dimension_numbers<[1], [0], [0], [1], [0, 0, 1, 1], [], []>} : vector<150x128xf32>, vector<128x16xf32>, vector<150x16xf32> -> vector<150x16xf32>
    %c1_71 = arith.constant 1 : index
    %c0_72 = arith.constant 0 : index
    %69 = vector.load %arg12[%c1_71, %c0_72] : memref<151x128xf32, #tpu.memory_space<vmem>>, vector<150x128xf32>
    %c1_73 = arith.constant 1 : index
    %c0_74 = arith.constant 0 : index
    %c0_75 = arith.constant 0 : index
    %70 = vector.load %arg4[%c1_73, %c0_74, %c0_75] : memref<2x128x16xf32, #tpu.memory_space<vmem>>, vector<1x128x16xf32>
    %71 = vector.shape_cast %70 : vector<1x128x16xf32> to vector<128x16xf32>
    %cst_76 = arith.constant dense<0.000000e+00> : vector<150x16xf32>
    %72 = tpu.matmul %69, %71, %cst_76 {dimension_numbers = #tpu.dot_dimension_numbers<[1], [0], [0], [1], [0, 0, 1, 1], [], []>} : vector<150x128xf32>, vector<128x16xf32>, vector<150x16xf32> -> vector<150x16xf32>
    %73 = arith.addf %68, %72 : vector<150x16xf32>
    %c0_77 = arith.constant 0 : index
    %c0_78 = arith.constant 0 : index
    %74 = vector.load %arg5[%c0_77, %c0_78] : memref<1x16xf32, #tpu.memory_space<vmem>>, vector<1x16xf32>
    %75 = vector.broadcast %74 : vector<1x16xf32> to vector<150x16xf32>
    %76 = arith.addf %73, %75 : vector<150x16xf32>
    %cst_79 = arith.constant 0.000000e+00 : f32
    %77 = vector.broadcast %cst_79 : f32 to vector<150x16xf32>
    %78 = arith.maximumf %76, %77 : vector<150x16xf32>
    %c0_80 = arith.constant 0 : index
    %c0_81 = arith.constant 0 : index
    %79 = vector.load %arg13[%c0_80, %c0_81] : memref<150x16xf32, #tpu.memory_space<vmem>>, vector<150x16xf32>
    tpu.vector_store %arg13[%c0_80, %c0_81], %78 {strides = array<i32>} : memref<150x16xf32, #tpu.memory_space<vmem>>, vector<150x16xf32>,
    %c0_82 = arith.constant 0 : index
    %c0_83 = arith.constant 0 : index
    %80 = tpu.strided_load %arg13[%c0_82, %c0_83] {strides = array<i32: 2, 1>} : memref<150x16xf32, #tpu.memory_space<vmem>>, vector<75x16xf32>
    %c1_84 = arith.constant 1 : index
    %c0_85 = arith.constant 0 : index
    %81 = tpu.strided_load %arg13[%c1_84, %c0_85] {strides = array<i32: 2, 1>} : memref<150x16xf32, #tpu.memory_space<vmem>>, vector<75x16xf32>
    %82 = arith.maximumf %80, %81 : vector<75x16xf32>
    %c300 = arith.constant 300 : index
    %c0_86 = arith.constant 0 : index
    %83 = vector.load %arg10[%c300, %c0_86] : memref<816x128xf32, #tpu.memory_space<vmem>>, vector<102x128xf32>
    %c301 = arith.constant 301 : index
    %c0_87 = arith.constant 0 : index
    %84 = vector.load %arg10[%c301, %c0_87] : memref<816x128xf32, #tpu.memory_space<vmem>>, vector<102x128xf32>
    %85 = arith.maximumf %83, %84 : vector<102x128xf32>
    %c302 = arith.constant 302 : index
    %c0_88 = arith.constant 0 : index
    %86 = vector.load %arg10[%c302, %c0_88] : memref<816x128xf32, #tpu.memory_space<vmem>>, vector<102x128xf32>
    %87 = arith.maximumf %85, %86 : vector<102x128xf32>
    %c0_89 = arith.constant 0 : index
    %c0_90 = arith.constant 0 : index
    %88 = vector.load %arg11[%c0_89, %c0_90] : memref<300x128xf32, #tpu.memory_space<vmem>>, vector<102x128xf32>
    tpu.vector_store %arg11[%c0_89, %c0_90], %87 {strides = array<i32>} : memref<300x128xf32, #tpu.memory_space<vmem>>, vector<102x128xf32>,
    %cst_91 = arith.constant 0.000000e+00 : f32
    %89 = vector.broadcast %cst_91 : f32 to vector<1x128xf32>
    %c0_92 = arith.constant 0 : index
    %c0_93 = arith.constant 0 : index
    %90 = vector.load %arg12[%c0_92, %c0_93] : memref<151x128xf32, #tpu.memory_space<vmem>>, vector<1x128xf32>
    tpu.vector_store %arg12[%c0_92, %c0_93], %89 {strides = array<i32>} : memref<151x128xf32, #tpu.memory_space<vmem>>, vector<1x128xf32>,
    %c0_94 = arith.constant 0 : index
    %c0_95 = arith.constant 0 : index
    %91 = tpu.strided_load %arg11[%c0_94, %c0_95] {strides = array<i32: 2, 1>} : memref<300x128xf32, #tpu.memory_space<vmem>>, vector<51x128xf32>
    %c1_96 = arith.constant 1 : index
    %c0_97 = arith.constant 0 : index
    %92 = vector.load %arg12[%c1_96, %c0_97] : memref<151x128xf32, #tpu.memory_space<vmem>>, vector<51x128xf32>
    tpu.vector_store %arg12[%c1_96, %c0_97], %91 {strides = array<i32>} : memref<151x128xf32, #tpu.memory_space<vmem>>, vector<51x128xf32>,
    %cst_98 = arith.constant 0.000000e+00 : f32
    %93 = vector.broadcast %cst_98 : f32 to vector<1x128xf32>
    %c52 = arith.constant 52 : index
    %c0_99 = arith.constant 0 : index
    %94 = vector.load %arg12[%c52, %c0_99] : memref<151x128xf32, #tpu.memory_space<vmem>>, vector<1x128xf32>
    tpu.vector_store %arg12[%c52, %c0_99], %93 {strides = array<i32>} : memref<151x128xf32, #tpu.memory_space<vmem>>, vector<1x128xf32>,
    %c0_100 = arith.constant 0 : index
    %c0_101 = arith.constant 0 : index
    %95 = vector.load %arg12[%c0_100, %c0_101] : memref<151x128xf32, #tpu.memory_space<vmem>>, vector<52x128xf32>
    %c0_102 = arith.constant 0 : index
    %c0_103 = arith.constant 0 : index
    %c0_104 = arith.constant 0 : index
    %96 = vector.load %arg4[%c0_102, %c0_103, %c0_104] : memref<2x128x16xf32, #tpu.memory_space<vmem>>, vector<1x128x16xf32>
    %97 = vector.shape_cast %96 : vector<1x128x16xf32> to vector<128x16xf32>
    %cst_105 = arith.constant dense<0.000000e+00> : vector<52x16xf32>
    %98 = tpu.matmul %95, %97, %cst_105 {dimension_numbers = #tpu.dot_dimension_numbers<[1], [0], [0], [1], [0, 0, 1, 1], [], []>} : vector<52x128xf32>, vector<128x16xf32>, vector<52x16xf32> -> vector<52x16xf32>
    %c1_106 = arith.constant 1 : index
    %c0_107 = arith.constant 0 : index
    %99 = vector.load %arg12[%c1_106, %c0_107] : memref<151x128xf32, #tpu.memory_space<vmem>>, vector<52x128xf32>
    %c1_108 = arith.constant 1 : index
    %c0_109 = arith.constant 0 : index
    %c0_110 = arith.constant 0 : index
    %100 = vector.load %arg4[%c1_108, %c0_109, %c0_110] : memref<2x128x16xf32, #tpu.memory_space<vmem>>, vector<1x128x16xf32>
    %101 = vector.shape_cast %100 : vector<1x128x16xf32> to vector<128x16xf32>
    %cst_111 = arith.constant dense<0.000000e+00> : vector<52x16xf32>
    %102 = tpu.matmul %99, %101, %cst_111 {dimension_numbers = #tpu.dot_dimension_numbers<[1], [0], [0], [1], [0, 0, 1, 1], [], []>} : vector<52x128xf32>, vector<128x16xf32>, vector<52x16xf32> -> vector<52x16xf32>
    %103 = arith.addf %98, %102 : vector<52x16xf32>
    %c0_112 = arith.constant 0 : index
    %c0_113 = arith.constant 0 : index
    %104 = vector.load %arg5[%c0_112, %c0_113] : memref<1x16xf32, #tpu.memory_space<vmem>>, vector<1x16xf32>
    %105 = vector.broadcast %104 : vector<1x16xf32> to vector<52x16xf32>
    %106 = arith.addf %103, %105 : vector<52x16xf32>
    %cst_114 = arith.constant 0.000000e+00 : f32
    %107 = vector.broadcast %cst_114 : f32 to vector<52x16xf32>
    %108 = arith.maximumf %106, %107 : vector<52x16xf32>
    %c0_115 = arith.constant 0 : index
    %c0_116 = arith.constant 0 : index
    %109 = vector.load %arg13[%c0_115, %c0_116] : memref<150x16xf32, #tpu.memory_space<vmem>>, vector<52x16xf32>
    tpu.vector_store %arg13[%c0_115, %c0_116], %108 {strides = array<i32>} : memref<150x16xf32, #tpu.memory_space<vmem>>, vector<52x16xf32>,
    %c0_117 = arith.constant 0 : index
    %c0_118 = arith.constant 0 : index
    %110 = tpu.strided_load %arg13[%c0_117, %c0_118] {strides = array<i32: 2, 1>} : memref<150x16xf32, #tpu.memory_space<vmem>>, vector<26x16xf32>
    %c1_119 = arith.constant 1 : index
    %c0_120 = arith.constant 0 : index
    %111 = tpu.strided_load %arg13[%c1_119, %c0_120] {strides = array<i32: 2, 1>} : memref<150x16xf32, #tpu.memory_space<vmem>>, vector<26x16xf32>
    %112 = arith.maximumf %110, %111 : vector<26x16xf32>
    %c0_121 = arith.constant 0 : index
    %c0_122 = arith.constant 0 : index
    %113 = vector.load %arg6[%c0_121, %c0_122] : memref<75x16xf32, #tpu.memory_space<vmem>>, vector<75x16xf32>
    %114 = arith.mulf %113, %82 : vector<75x16xf32>
    %115 = vector.shape_cast %114 : vector<75x16xf32> to vector<1x75x16xf32>
    %cst_123 = arith.constant dense<0.000000e+00> : vector<1xf32>
    %116 = vector.multi_reduction <add>, %115, %cst_123 [1, 2] : vector<1x75x16xf32> to vector<1xf32>
    %117 = vector.shape_cast %116 : vector<1xf32> to vector<1x1x1xf32>
    %118 = vector.extract %117[0, 0, 0] : f32 from vector<1x1x1xf32>
    %c0_124 = arith.constant 0 : index
    %119 = memref.load %arg8[%c0_124] : memref<3xf32, #tpu.memory_space<smem>>
    %120 = arith.addf %118, %119 : f32
    %c0_125 = arith.constant 0 : index
    %c0_126 = arith.constant 0 : index
    %c0_127 = arith.constant 0 : index
    %121 = vector.load %arg7[%c0_125, %c0_126, %c0_127] : memref<2x26x16xf32, #tpu.memory_space<vmem>>, vector<1x26x16xf32>
    %122 = vector.shape_cast %121 : vector<1x26x16xf32> to vector<26x16xf32>
    %123 = arith.mulf %122, %112 : vector<26x16xf32>
    %124 = vector.shape_cast %123 : vector<26x16xf32> to vector<1x26x16xf32>
    %cst_128 = arith.constant dense<0.000000e+00> : vector<1xf32>
    %125 = vector.multi_reduction <add>, %124, %cst_128 [1, 2] : vector<1x26x16xf32> to vector<1xf32>
    %126 = vector.shape_cast %125 : vector<1xf32> to vector<1x1x1xf32>
    %127 = vector.extract %126[0, 0, 0] : f32 from vector<1x1x1xf32>
    %c1_129 = arith.constant 1 : index
    %128 = memref.load %arg8[%c1_129] : memref<3xf32, #tpu.memory_space<smem>>
    %129 = arith.addf %127, %128 : f32
    %c1_130 = arith.constant 1 : index
    %c0_131 = arith.constant 0 : index
    %c0_132 = arith.constant 0 : index
    %130 = vector.load %arg7[%c1_130, %c0_131, %c0_132] : memref<2x26x16xf32, #tpu.memory_space<vmem>>, vector<1x26x16xf32>
    %131 = vector.shape_cast %130 : vector<1x26x16xf32> to vector<26x16xf32>
    %132 = arith.mulf %131, %112 : vector<26x16xf32>
    %133 = vector.shape_cast %132 : vector<26x16xf32> to vector<1x26x16xf32>
    %cst_133 = arith.constant dense<0.000000e+00> : vector<1xf32>
    %134 = vector.multi_reduction <add>, %133, %cst_133 [1, 2] : vector<1x26x16xf32> to vector<1xf32>
    %135 = vector.shape_cast %134 : vector<1xf32> to vector<1x1x1xf32>
    %136 = vector.extract %135[0, 0, 0] : f32 from vector<1x1x1xf32>
    %c2_134 = arith.constant 2 : index
    %137 = memref.load %arg8[%c2_134] : memref<3xf32, #tpu.memory_space<smem>>
    %138 = arith.addf %136, %137 : f32
    %c0_i32 = arith.constant 0 : i32
    %139 = vector.broadcast %c0_i32 : i32 to vector<1x2xi32>
    %140 = arith.cmpi eq, %40, %139 : vector<1x2xi32>
    %141 = arith.mulf %120, %129 : f32
    %142 = arith.mulf %120, %138 : f32
    %143 = vector.broadcast %141 : f32 to vector<1x2xf32>
    %144 = vector.broadcast %142 : f32 to vector<1x2xf32>
    %145 = arith.select %140, %143, %144 : vector<1x2xi1>, vector<1x2xf32>
    %c0_135 = arith.constant 0 : index
    %c0_136 = arith.constant 0 : index
    %c0_137 = arith.constant 0 : index
    %146 = vector.load %arg9[%c0_135, %c0_136, %c0_137] : memref<1x2x2xf32, #tpu.memory_space<vmem>>, vector<1x1x2xf32>
    %147 = vector.shape_cast %146 : vector<1x1x2xf32> to vector<1x2xf32>
    %148 = vector.shape_cast %145 : vector<1x2xf32> to vector<1x1x2xf32>
    tpu.vector_store %arg9[%c0_135, %c0_136, %c0_137], %148 {strides = array<i32>} : memref<1x2x2xf32, #tpu.memory_space<vmem>>, vector<1x1x2xf32>,
    %c408 = arith.constant 408 : index
    %c0_138 = arith.constant 0 : index
    %149 = vector.load %arg10[%c408, %c0_138] : memref<816x128xf32, #tpu.memory_space<vmem>>, vector<128x128xf32>
    %c409 = arith.constant 409 : index
    %c0_139 = arith.constant 0 : index
    %150 = vector.load %arg10[%c409, %c0_139] : memref<816x128xf32, #tpu.memory_space<vmem>>, vector<128x128xf32>
    %151 = arith.maximumf %149, %150 : vector<128x128xf32>
    %c410 = arith.constant 410 : index
    %c0_140 = arith.constant 0 : index
    %152 = vector.load %arg10[%c410, %c0_140] : memref<816x128xf32, #tpu.memory_space<vmem>>, vector<128x128xf32>
    %153 = arith.maximumf %151, %152 : vector<128x128xf32>
    %c0_141 = arith.constant 0 : index
    %c0_142 = arith.constant 0 : index
    %154 = vector.load %arg11[%c0_141, %c0_142] : memref<300x128xf32, #tpu.memory_space<vmem>>, vector<128x128xf32>
    tpu.vector_store %arg11[%c0_141, %c0_142], %153 {strides = array<i32>} : memref<300x128xf32, #tpu.memory_space<vmem>>, vector<128x128xf32>,
    %c536 = arith.constant 536 : index
    %c0_143 = arith.constant 0 : index
    %155 = vector.load %arg10[%c536, %c0_143] : memref<816x128xf32, #tpu.memory_space<vmem>>, vector<128x128xf32>
    %c537 = arith.constant 537 : index
    %c0_144 = arith.constant 0 : index
    %156 = vector.load %arg10[%c537, %c0_144] : memref<816x128xf32, #tpu.memory_space<vmem>>, vector<128x128xf32>
    %157 = arith.maximumf %155, %156 : vector<128x128xf32>
    %c538 = arith.constant 538 : index
    %c0_145 = arith.constant 0 : index
    %158 = vector.load %arg10[%c538, %c0_145] : memref<816x128xf32, #tpu.memory_space<vmem>>, vector<128x128xf32>
    %159 = arith.maximumf %157, %158 : vector<128x128xf32>
    %c128_146 = arith.constant 128 : index
    %c0_147 = arith.constant 0 : index
    %160 = vector.load %arg11[%c128_146, %c0_147] : memref<300x128xf32, #tpu.memory_space<vmem>>, vector<128x128xf32>
    tpu.vector_store %arg11[%c128_146, %c0_147], %159 {strides = array<i32>} : memref<300x128xf32, #tpu.memory_space<vmem>>, vector<128x128xf32>,
    %c664 = arith.constant 664 : index
    %c0_148 = arith.constant 0 : index
    %161 = vector.load %arg10[%c664, %c0_148] : memref<816x128xf32, #tpu.memory_space<vmem>>, vector<42x128xf32>
    %c665 = arith.constant 665 : index
    %c0_149 = arith.constant 0 : index
    %162 = vector.load %arg10[%c665, %c0_149] : memref<816x128xf32, #tpu.memory_space<vmem>>, vector<42x128xf32>
    %163 = arith.maximumf %161, %162 : vector<42x128xf32>
    %c666 = arith.constant 666 : index
    %c0_150 = arith.constant 0 : index
    %164 = vector.load %arg10[%c666, %c0_150] : memref<816x128xf32, #tpu.memory_space<vmem>>, vector<42x128xf32>
    %165 = arith.maximumf %163, %164 : vector<42x128xf32>
    %c256_151 = arith.constant 256 : index
    %c0_152 = arith.constant 0 : index
    %166 = vector.load %arg11[%c256_151, %c0_152] : memref<300x128xf32, #tpu.memory_space<vmem>>, vector<42x128xf32>
    tpu.vector_store %arg11[%c256_151, %c0_152], %165 {strides = array<i32>} : memref<300x128xf32, #tpu.memory_space<vmem>>, vector<42x128xf32>,
    %cst_153 = arith.constant 0.000000e+00 : f32
    %167 = vector.broadcast %cst_153 : f32 to vector<1x128xf32>
    %c0_154 = arith.constant 0 : index
    %c0_155 = arith.constant 0 : index
    %168 = vector.load %arg12[%c0_154, %c0_155] : memref<151x128xf32, #tpu.memory_space<vmem>>, vector<1x128xf32>
    tpu.vector_store %arg12[%c0_154, %c0_155], %167 {strides = array<i32>} : memref<151x128xf32, #tpu.memory_space<vmem>>, vector<1x128xf32>,
    %c0_156 = arith.constant 0 : index
    %c0_157 = arith.constant 0 : index
    %169 = tpu.strided_load %arg11[%c0_156, %c0_157] {strides = array<i32: 2, 1>} : memref<300x128xf32, #tpu.memory_space<vmem>>, vector<149x128xf32>
    %c1_158 = arith.constant 1 : index
    %c0_159 = arith.constant 0 : index
    %170 = vector.load %arg12[%c1_158, %c0_159] : memref<151x128xf32, #tpu.memory_space<vmem>>, vector<149x128xf32>
    tpu.vector_store %arg12[%c1_158, %c0_159], %169 {strides = array<i32>} : memref<151x128xf32, #tpu.memory_space<vmem>>, vector<149x128xf32>,
    %cst_160 = arith.constant 0.000000e+00 : f32
    %171 = vector.broadcast %cst_160 : f32 to vector<1x128xf32>
    %c150_161 = arith.constant 150 : index
    %c0_162 = arith.constant 0 : index
    %172 = vector.load %arg12[%c150_161, %c0_162] : memref<151x128xf32, #tpu.memory_space<vmem>>, vector<1x128xf32>
    tpu.vector_store %arg12[%c150_161, %c0_162], %171 {strides = array<i32>} : memref<151x128xf32, #tpu.memory_space<vmem>>, vector<1x128xf32>,
    %c0_163 = arith.constant 0 : index
    %c0_164 = arith.constant 0 : index
    %173 = vector.load %arg12[%c0_163, %c0_164] : memref<151x128xf32, #tpu.memory_space<vmem>>, vector<150x128xf32>
    %c0_165 = arith.constant 0 : index
    %c0_166 = arith.constant 0 : index
    %c0_167 = arith.constant 0 : index
    %174 = vector.load %arg4[%c0_165, %c0_166, %c0_167] : memref<2x128x16xf32, #tpu.memory_space<vmem>>, vector<1x128x16xf32>
    %175 = vector.shape_cast %174 : vector<1x128x16xf32> to vector<128x16xf32>
    %cst_168 = arith.constant dense<0.000000e+00> : vector<150x16xf32>
    %176 = tpu.matmul %173, %175, %cst_168 {dimension_numbers = #tpu.dot_dimension_numbers<[1], [0], [0], [1], [0, 0, 1, 1], [], []>} : vector<150x128xf32>, vector<128x16xf32>, vector<150x16xf32> -> vector<150x16xf32>
    %c1_169 = arith.constant 1 : index
    %c0_170 = arith.constant 0 : index
    %177 = vector.load %arg12[%c1_169, %c0_170] : memref<151x128xf32, #tpu.memory_space<vmem>>, vector<150x128xf32>
    %c1_171 = arith.constant 1 : index
    %c0_172 = arith.constant 0 : index
    %c0_173 = arith.constant 0 : index
    %178 = vector.load %arg4[%c1_171, %c0_172, %c0_173] : memref<2x128x16xf32, #tpu.memory_space<vmem>>, vector<1x128x16xf32>
    %179 = vector.shape_cast %178 : vector<1x128x16xf32> to vector<128x16xf32>
    %cst_174 = arith.constant dense<0.000000e+00> : vector<150x16xf32>
    %180 = tpu.matmul %177, %179, %cst_174 {dimension_numbers = #tpu.dot_dimension_numbers<[1], [0], [0], [1], [0, 0, 1, 1], [], []>} : vector<150x128xf32>, vector<128x16xf32>, vector<150x16xf32> -> vector<150x16xf32>
    %181 = arith.addf %176, %180 : vector<150x16xf32>
    %c0_175 = arith.constant 0 : index
    %c0_176 = arith.constant 0 : index
    %182 = vector.load %arg5[%c0_175, %c0_176] : memref<1x16xf32, #tpu.memory_space<vmem>>, vector<1x16xf32>
    %183 = vector.broadcast %182 : vector<1x16xf32> to vector<150x16xf32>
    %184 = arith.addf %181, %183 : vector<150x16xf32>
    %cst_177 = arith.constant 0.000000e+00 : f32
    %185 = vector.broadcast %cst_177 : f32 to vector<150x16xf32>
    %186 = arith.maximumf %184, %185 : vector<150x16xf32>
    %c0_178 = arith.constant 0 : index
    %c0_179 = arith.constant 0 : index
    %187 = vector.load %arg13[%c0_178, %c0_179] : memref<150x16xf32, #tpu.memory_space<vmem>>, vector<150x16xf32>
    tpu.vector_store %arg13[%c0_178, %c0_179], %186 {strides = array<i32>} : memref<150x16xf32, #tpu.memory_space<vmem>>, vector<150x16xf32>,
    %c0_180 = arith.constant 0 : index
    %c0_181 = arith.constant 0 : index
    %188 = tpu.strided_load %arg13[%c0_180, %c0_181] {strides = array<i32: 2, 1>} : memref<150x16xf32, #tpu.memory_space<vmem>>, vector<75x16xf32>
    %c1_182 = arith.constant 1 : index
    %c0_183 = arith.constant 0 : index
    %189 = tpu.strided_load %arg13[%c1_182, %c0_183] {strides = array<i32: 2, 1>} : memref<150x16xf32, #tpu.memory_space<vmem>>, vector<75x16xf32>
    %190 = arith.maximumf %188, %189 : vector<75x16xf32>
    %c708 = arith.constant 708 : index
    %c0_184 = arith.constant 0 : index
    %191 = vector.load %arg10[%c708, %c0_184] : memref<816x128xf32, #tpu.memory_space<vmem>>, vector<102x128xf32>
    %c709 = arith.constant 709 : index
    %c0_185 = arith.constant 0 : index
    %192 = vector.load %arg10[%c709, %c0_185] : memref<816x128xf32, #tpu.memory_space<vmem>>, vector<102x128xf32>
    %193 = arith.maximumf %191, %192 : vector<102x128xf32>
    %c710 = arith.constant 710 : index
    %c0_186 = arith.constant 0 : index
    %194 = vector.load %arg10[%c710, %c0_186] : memref<816x128xf32, #tpu.memory_space<vmem>>, vector<102x128xf32>
    %195 = arith.maximumf %193, %194 : vector<102x128xf32>
    %c0_187 = arith.constant 0 : index
    %c0_188 = arith.constant 0 : index
    %196 = vector.load %arg11[%c0_187, %c0_188] : memref<300x128xf32, #tpu.memory_space<vmem>>, vector<102x128xf32>
    tpu.vector_store %arg11[%c0_187, %c0_188], %195 {strides = array<i32>} : memref<300x128xf32, #tpu.memory_space<vmem>>, vector<102x128xf32>,
    %cst_189 = arith.constant 0.000000e+00 : f32
    %197 = vector.broadcast %cst_189 : f32 to vector<1x128xf32>
    %c0_190 = arith.constant 0 : index
    %c0_191 = arith.constant 0 : index
    %198 = vector.load %arg12[%c0_190, %c0_191] : memref<151x128xf32, #tpu.memory_space<vmem>>, vector<1x128xf32>
    tpu.vector_store %arg12[%c0_190, %c0_191], %197 {strides = array<i32>} : memref<151x128xf32, #tpu.memory_space<vmem>>, vector<1x128xf32>,
    %c0_192 = arith.constant 0 : index
    %c0_193 = arith.constant 0 : index
    %199 = tpu.strided_load %arg11[%c0_192, %c0_193] {strides = array<i32: 2, 1>} : memref<300x128xf32, #tpu.memory_space<vmem>>, vector<51x128xf32>
    %c1_194 = arith.constant 1 : index
    %c0_195 = arith.constant 0 : index
    %200 = vector.load %arg12[%c1_194, %c0_195] : memref<151x128xf32, #tpu.memory_space<vmem>>, vector<51x128xf32>
    tpu.vector_store %arg12[%c1_194, %c0_195], %199 {strides = array<i32>} : memref<151x128xf32, #tpu.memory_space<vmem>>, vector<51x128xf32>,
    %cst_196 = arith.constant 0.000000e+00 : f32
    %201 = vector.broadcast %cst_196 : f32 to vector<1x128xf32>
    %c52_197 = arith.constant 52 : index
    %c0_198 = arith.constant 0 : index
    %202 = vector.load %arg12[%c52_197, %c0_198] : memref<151x128xf32, #tpu.memory_space<vmem>>, vector<1x128xf32>
    tpu.vector_store %arg12[%c52_197, %c0_198], %201 {strides = array<i32>} : memref<151x128xf32, #tpu.memory_space<vmem>>, vector<1x128xf32>,
    %c0_199 = arith.constant 0 : index
    %c0_200 = arith.constant 0 : index
    %203 = vector.load %arg12[%c0_199, %c0_200] : memref<151x128xf32, #tpu.memory_space<vmem>>, vector<52x128xf32>
    %c0_201 = arith.constant 0 : index
    %c0_202 = arith.constant 0 : index
    %c0_203 = arith.constant 0 : index
    %204 = vector.load %arg4[%c0_201, %c0_202, %c0_203] : memref<2x128x16xf32, #tpu.memory_space<vmem>>, vector<1x128x16xf32>
    %205 = vector.shape_cast %204 : vector<1x128x16xf32> to vector<128x16xf32>
    %cst_204 = arith.constant dense<0.000000e+00> : vector<52x16xf32>
    %206 = tpu.matmul %203, %205, %cst_204 {dimension_numbers = #tpu.dot_dimension_numbers<[1], [0], [0], [1], [0, 0, 1, 1], [], []>} : vector<52x128xf32>, vector<128x16xf32>, vector<52x16xf32> -> vector<52x16xf32>
    %c1_205 = arith.constant 1 : index
    %c0_206 = arith.constant 0 : index
    %207 = vector.load %arg12[%c1_205, %c0_206] : memref<151x128xf32, #tpu.memory_space<vmem>>, vector<52x128xf32>
    %c1_207 = arith.constant 1 : index
    %c0_208 = arith.constant 0 : index
    %c0_209 = arith.constant 0 : index
    %208 = vector.load %arg4[%c1_207, %c0_208, %c0_209] : memref<2x128x16xf32, #tpu.memory_space<vmem>>, vector<1x128x16xf32>
    %209 = vector.shape_cast %208 : vector<1x128x16xf32> to vector<128x16xf32>
    %cst_210 = arith.constant dense<0.000000e+00> : vector<52x16xf32>
    %210 = tpu.matmul %207, %209, %cst_210 {dimension_numbers = #tpu.dot_dimension_numbers<[1], [0], [0], [1], [0, 0, 1, 1], [], []>} : vector<52x128xf32>, vector<128x16xf32>, vector<52x16xf32> -> vector<52x16xf32>
    %211 = arith.addf %206, %210 : vector<52x16xf32>
    %c0_211 = arith.constant 0 : index
    %c0_212 = arith.constant 0 : index
    %212 = vector.load %arg5[%c0_211, %c0_212] : memref<1x16xf32, #tpu.memory_space<vmem>>, vector<1x16xf32>
    %213 = vector.broadcast %212 : vector<1x16xf32> to vector<52x16xf32>
    %214 = arith.addf %211, %213 : vector<52x16xf32>
    %cst_213 = arith.constant 0.000000e+00 : f32
    %215 = vector.broadcast %cst_213 : f32 to vector<52x16xf32>
    %216 = arith.maximumf %214, %215 : vector<52x16xf32>
    %c0_214 = arith.constant 0 : index
    %c0_215 = arith.constant 0 : index
    %217 = vector.load %arg13[%c0_214, %c0_215] : memref<150x16xf32, #tpu.memory_space<vmem>>, vector<52x16xf32>
    tpu.vector_store %arg13[%c0_214, %c0_215], %216 {strides = array<i32>} : memref<150x16xf32, #tpu.memory_space<vmem>>, vector<52x16xf32>,
    %c0_216 = arith.constant 0 : index
    %c0_217 = arith.constant 0 : index
    %218 = tpu.strided_load %arg13[%c0_216, %c0_217] {strides = array<i32: 2, 1>} : memref<150x16xf32, #tpu.memory_space<vmem>>, vector<26x16xf32>
    %c1_218 = arith.constant 1 : index
    %c0_219 = arith.constant 0 : index
    %219 = tpu.strided_load %arg13[%c1_218, %c0_219] {strides = array<i32: 2, 1>} : memref<150x16xf32, #tpu.memory_space<vmem>>, vector<26x16xf32>
    %220 = arith.maximumf %218, %219 : vector<26x16xf32>
    %c0_220 = arith.constant 0 : index
    %c0_221 = arith.constant 0 : index
    %221 = vector.load %arg6[%c0_220, %c0_221] : memref<75x16xf32, #tpu.memory_space<vmem>>, vector<75x16xf32>
    %222 = arith.mulf %221, %190 : vector<75x16xf32>
    %223 = vector.shape_cast %222 : vector<75x16xf32> to vector<1x75x16xf32>
    %cst_222 = arith.constant dense<0.000000e+00> : vector<1xf32>
    %224 = vector.multi_reduction <add>, %223, %cst_222 [1, 2] : vector<1x75x16xf32> to vector<1xf32>
    %225 = vector.shape_cast %224 : vector<1xf32> to vector<1x1x1xf32>
    %226 = vector.extract %225[0, 0, 0] : f32 from vector<1x1x1xf32>
    %c0_223 = arith.constant 0 : index
    %227 = memref.load %arg8[%c0_223] : memref<3xf32, #tpu.memory_space<smem>>
    %228 = arith.addf %226, %227 : f32
    %c0_224 = arith.constant 0 : index
    %c0_225 = arith.constant 0 : index
    %c0_226 = arith.constant 0 : index
    %229 = vector.load %arg7[%c0_224, %c0_225, %c0_226] : memref<2x26x16xf32, #tpu.memory_space<vmem>>, vector<1x26x16xf32>
    %230 = vector.shape_cast %229 : vector<1x26x16xf32> to vector<26x16xf32>
    %231 = arith.mulf %230, %220 : vector<26x16xf32>
    %232 = vector.shape_cast %231 : vector<26x16xf32> to vector<1x26x16xf32>
    %cst_227 = arith.constant dense<0.000000e+00> : vector<1xf32>
    %233 = vector.multi_reduction <add>, %232, %cst_227 [1, 2] : vector<1x26x16xf32> to vector<1xf32>
    %234 = vector.shape_cast %233 : vector<1xf32> to vector<1x1x1xf32>
    %235 = vector.extract %234[0, 0, 0] : f32 from vector<1x1x1xf32>
    %c1_228 = arith.constant 1 : index
    %236 = memref.load %arg8[%c1_228] : memref<3xf32, #tpu.memory_space<smem>>
    %237 = arith.addf %235, %236 : f32
    %c1_229 = arith.constant 1 : index
    %c0_230 = arith.constant 0 : index
    %c0_231 = arith.constant 0 : index
    %238 = vector.load %arg7[%c1_229, %c0_230, %c0_231] : memref<2x26x16xf32, #tpu.memory_space<vmem>>, vector<1x26x16xf32>
    %239 = vector.shape_cast %238 : vector<1x26x16xf32> to vector<26x16xf32>
    %240 = arith.mulf %239, %220 : vector<26x16xf32>
    %241 = vector.shape_cast %240 : vector<26x16xf32> to vector<1x26x16xf32>
    %cst_232 = arith.constant dense<0.000000e+00> : vector<1xf32>
    %242 = vector.multi_reduction <add>, %241, %cst_232 [1, 2] : vector<1x26x16xf32> to vector<1xf32>
    %243 = vector.shape_cast %242 : vector<1xf32> to vector<1x1x1xf32>
    %244 = vector.extract %243[0, 0, 0] : f32 from vector<1x1x1xf32>
    %c2_233 = arith.constant 2 : index
    %245 = memref.load %arg8[%c2_233] : memref<3xf32, #tpu.memory_space<smem>>
    %246 = arith.addf %244, %245 : f32
    %c0_i32_234 = arith.constant 0 : i32
    %247 = vector.broadcast %c0_i32_234 : i32 to vector<1x2xi32>
    %248 = arith.cmpi eq, %40, %247 : vector<1x2xi32>
    %249 = arith.mulf %228, %237 : f32
    %250 = arith.mulf %228, %246 : f32
    %251 = vector.broadcast %249 : f32 to vector<1x2xf32>
    %252 = vector.broadcast %250 : f32 to vector<1x2xf32>
    %253 = arith.select %248, %251, %252 : vector<1x2xi1>, vector<1x2xf32>
    %c0_235 = arith.constant 0 : index
    %c1_236 = arith.constant 1 : index
    %c0_237 = arith.constant 0 : index
    %254 = vector.load %arg9[%c0_235, %c1_236, %c0_237] : memref<1x2x2xf32, #tpu.memory_space<vmem>>, vector<1x1x2xf32>
    %255 = vector.shape_cast %254 : vector<1x1x2xf32> to vector<1x2xf32>
    %256 = vector.shape_cast %253 : vector<1x2xf32> to vector<1x1x2xf32>
    tpu.vector_store %arg9[%c0_235, %c1_236, %c0_237], %256 {strides = array<i32>} : memref<1x2x2xf32, #tpu.memory_space<vmem>>, vector<1x1x2xf32>,
    return
  }
  func.func @transform_0(%arg0: i32) -> (i32, i32, i32) {
    %c0_i32 = arith.constant 0 : i32
    %c0_i32_0 = arith.constant 0 : i32
    %c0_i32_1 = arith.constant 0 : i32
    return %arg0, %c0_i32, %c0_i32_0 : i32, i32, i32
  }
  func.func @transform_1(%arg0: i32) -> (i32, i32) {
    %c0_i32 = arith.constant 0 : i32
    %c0_i32_0 = arith.constant 0 : i32
    %c0_i32_1 = arith.constant 0 : i32
    return %c0_i32, %c0_i32_0 : i32, i32
  }
  func.func @transform_2(%arg0: i32) -> (i32, i32) {
    %c0_i32 = arith.constant 0 : i32
    %c0_i32_0 = arith.constant 0 : i32
    %c0_i32_1 = arith.constant 0 : i32
    return %c0_i32, %c0_i32_0 : i32, i32
  }
  func.func @transform_3(%arg0: i32) -> (i32, i32, i32) {
    %c0_i32 = arith.constant 0 : i32
    %c0_i32_0 = arith.constant 0 : i32
    %c0_i32_1 = arith.constant 0 : i32
    %c0_i32_2 = arith.constant 0 : i32
    return %c0_i32, %c0_i32_0, %c0_i32_1 : i32, i32, i32
  }
  func.func @transform_4(%arg0: i32) -> (i32, i32) {
    %c0_i32 = arith.constant 0 : i32
    %c0_i32_0 = arith.constant 0 : i32
    %c0_i32_1 = arith.constant 0 : i32
    return %c0_i32, %c0_i32_0 : i32, i32
  }
  func.func @transform_5(%arg0: i32) -> (i32, i32) {
    %c0_i32 = arith.constant 0 : i32
    %c0_i32_0 = arith.constant 0 : i32
    %c0_i32_1 = arith.constant 0 : i32
    return %c0_i32, %c0_i32_0 : i32, i32
  }
  func.func @transform_6(%arg0: i32) -> (i32, i32, i32) {
    %c0_i32 = arith.constant 0 : i32
    %c0_i32_0 = arith.constant 0 : i32
    %c0_i32_1 = arith.constant 0 : i32
    %c0_i32_2 = arith.constant 0 : i32
    return %c0_i32, %c0_i32_0, %c0_i32_1 : i32, i32, i32
  }
  func.func @transform_7(%arg0: i32) -> i32 {
    %c0_i32 = arith.constant 0 : i32
    %c0_i32_0 = arith.constant 0 : i32
    return %c0_i32 : i32
  }
  func.func @transform_8(%arg0: i32) -> (i32, i32, i32) {
    %c0_i32 = arith.constant 0 : i32
    %c0_i32_0 = arith.constant 0 : i32
    %c0_i32_1 = arith.constant 0 : i32
    return %arg0, %c0_i32, %c0_i32_0 : i32, i32, i32
  }
}

</mosaic_0001>

<llo_original>
// kernel: tpu_custom_call.1
$region0: #{tpu_custom_call.1}
  #allocation0 [shape = 'u32[]', space=smem, size = 0x4, offset = 0x4, fixed_abs, tag = 'smem constant byte address 0x4 - core index']
  #allocation1 [shape = 'u32[144,128]{1,0:T(1,128)}', space=vmem, size = 0x12000, scoped, tag = 'internal scratch']
  #allocation2 [shape = 'f32[816,128]{1,0:T(8,128)}', space=vmem, size = 0x66000, scoped, tag = 'scratch operand']
  #allocation3 [shape = 'f32[300,128]{1,0:T(8,128)}', space=vmem, size = 0x26000, scoped, tag = 'scratch operand']
  #allocation4 [shape = 'f32[151,128]{1,0:T(8,128)}', space=vmem, size = 0x13000, scoped, tag = 'scratch operand']
  #allocation5 [shape = 'f32[150,16]{1,0:T(8,128)}', space=vmem, size = 0x13000, scoped, tag = 'scratch operand']
  %s0 = inlined_call_operand.vmem [shape: f32[1,816,24], index: 0, kind: input, shape index: {}]
  %s1 = inlined_call_operand.vmem [shape: f32[24,128], index: 1, kind: input, shape index: {}]
  %s2 = inlined_call_operand.vmem [shape: f32[1,128], index: 2, kind: input, shape index: {}]
  %s3 = inlined_call_operand.vmem [shape: f32[2,128,16], index: 3, kind: input, shape index: {}]
  %s4 = inlined_call_operand.vmem [shape: f32[1,16], index: 4, kind: input, shape index: {}]
  %s5 = inlined_call_operand.vmem [shape: f32[75,16], index: 5, kind: input, shape index: {}]
  %s6 = inlined_call_operand.vmem [shape: f32[2,26,16], index: 6, kind: input, shape index: {}]
  %s7 = inlined_call_operand.vmem [shape: f32[3], index: 7, kind: input, shape index: {}]
  %s8 = inlined_call_operand.hbm [shape: f32[1,2,2], index: 8, kind: output, shape index: {}]
  %s9 = sld [smem:[#allocation0]]
  $region46: #{tpu_custom_call.1} parent=0
    _
  %s11 = ssub.s32 1, %s9
  %s12 = scalar_select 0, %s11, %s9
  $region1: #{tpu_custom_call.1} parent=0
    #allocation6 [shape = 'u8[512]{0}', space=smem, size = 0x200, scoped, tag = 'input window, operand 7, single buffered']
    #allocation7 [shape = 's32[1]{0}', space=sflag, size = 0x4, scoped, tag = 'scoped memory for tpu_custom_call.1']
    #allocation8 [shape = 's32[1]{0}', space=sflag, size = 0x4, scoped, tag = 'scoped memory for tpu_custom_call.1']
    #allocation9 [shape = 'u8[1024]{0}', space=vmem, size = 0x400, scoped, tag = 'output window, operand 0, single buffered']
    %13 = vsyncpa [#allocation8], 0
    %14 = vsyncpa [#allocation7], 0
    // Predicated region
    $region2: #{tpu_custom_call.1} parent=1 // pred_check
      _
    $region3: #{tpu_custom_call.1} parent=1 // pred_check_branch
      %16 = sbr.rel (0) target = $region5
    $region4: #{tpu_custom_call.1} parent=1 // pred_region
      _
    $region5: #{tpu_custom_call.1} parent=1 // pred_fallthru
      _
    // Predicated region
    $region6: #{tpu_custom_call.1} parent=1 // pred_check
      _
    $region7: #{tpu_custom_call.1} parent=1 // pred_check_branch
      %18 = sbr.rel (0) target = $region9
    $region8: #{tpu_custom_call.1} parent=1 // pred_region
      _
    $region9: #{tpu_custom_call.1} parent=1 // pred_fallthru
      _
    // Predicated region
    $region10: #{tpu_custom_call.1} parent=1 // pred_check
      _
    $region11: #{tpu_custom_call.1} parent=1 // pred_check_branch
      %20 = sbr.rel (0) target = $region13
    $region12: #{tpu_custom_call.1} parent=1 // pred_region
      _
    $region13: #{tpu_custom_call.1} parent=1 // pred_fallthru
      _
    // Predicated region
    $region14: #{tpu_custom_call.1} parent=1 // pred_check
      _
    $region15: #{tpu_custom_call.1} parent=1 // pred_check_branch
      %22 = sbr.rel (0) target = $region17
    $region16: #{tpu_custom_call.1} parent=1 // pred_region
      _
    $region17: #{tpu_custom_call.1} parent=1 // pred_fallthru
      _
    // Predicated region
    $region18: #{tpu_custom_call.1} parent=1 // pred_check
      _
    $region19: #{tpu_custom_call.1} parent=1 // pred_check_branch
      %24 = sbr.rel (0) target = $region21
    $region20: #{tpu_custom_call.1} parent=1 // pred_region
      _
    $region21: #{tpu_custom_call.1} parent=1 // pred_fallthru
      _
    // Predicated region
    $region22: #{tpu_custom_call.1} parent=1 // pred_check
      _
    $region23: #{tpu_custom_call.1} parent=1 // pred_check_branch
      %26 = sbr.rel (0) target = $region25
    $region24: #{tpu_custom_call.1} parent=1 // pred_region
      _
    $region25: #{tpu_custom_call.1} parent=1 // pred_fallthru
      _
    // Predicated region
    $region26: #{tpu_custom_call.1} parent=1 // pred_check
      _
    $region27: #{tpu_custom_call.1} parent=1 // pred_check_branch
      %28 = sbr.rel (0) target = $region29
    $region28: #{tpu_custom_call.1} parent=1 // pred_region
      _
    $region29: #{tpu_custom_call.1} parent=1 // pred_fallthru
      _
    // Predicated region
    $region30: #{tpu_custom_call.1} parent=1 // pred_check
      _
    $region31: #{tpu_custom_call.1} parent=1 // pred_check_branch
      %30 = sbr.rel (0) target = $region33
    $region32: #{tpu_custom_call.1} parent=1 // pred_region
      %s32 = ssub.s32 16, 16
      %33 = vsyncadd [#allocation8], %s32
      %s35 = sshll.u32 %s7, 4
      %s36 = int_to_ptr.vmem [resolvable:$true] %s35
      %38 = dma.vmem_to_smem %s36, 16, [#allocation6], [#allocation8]
    $region33: #{tpu_custom_call.1} parent=1 // pred_fallthru
      _
    // Predicated region
    $region34: #{tpu_custom_call.1} parent=1 // pred_check
      _
    $region35: #{tpu_custom_call.1} parent=1 // pred_check_branch
      %40 = sbr.rel (0) target = $region37
    $region36: #{tpu_custom_call.1} parent=1 // pred_region
      %41 = dma.done [#allocation8], 16
    $region37: #{tpu_custom_call.1} parent=1 // pred_fallthru
      _
    %42 = sfence
    %v43 = vld [vmem:[%s0] sm:$0xff]
    %v44 = vld [vmem:[%s0 + $0x8] sm:$0xff]
    %v45 = vld [vmem:[%s0 + $0x10] sm:$0xff]
    %v46 = vld [vmem:[%s0 + $0x18] sm:$0xff]
    %v47 = vld [vmem:[%s0 + $0x20] sm:$0xff]
    %v48 = vld [vmem:[%s0 + $0x28] sm:$0xff]
    %v49 = vld [vmem:[%s0 + $0x30] sm:$0xff]
    %v50 = vld [vmem:[%s0 + $0x38] sm:$0xff]
    %v51 = vld [vmem:[%s0 + $0x40] sm:$0xff]
    %v52 = vld [vmem:[%s0 + $0x48] sm:$0xff]
    %v53 = vld [vmem:[%s0 + $0x50] sm:$0xff]
    %v54 = vld [vmem:[%s0 + $0x58] sm:$0xff]
    %v55 = vld [vmem:[%s0 + $0x60] sm:$0xff]
    %v56 = vld [vmem:[%s0 + $0x68] sm:$0xff]
    %v57 = vld [vmem:[%s0 + $0x70] sm:$0xff]
    %v58 = vld [vmem:[%s0 + $0x78] sm:$0xff]
    %v59 = vld [vmem:[%s0 + $0x80] sm:$0xff]
    %v60 = vld [vmem:[%s0 + $0x88] sm:$0xff]
    %v61 = vld [vmem:[%s0 + $0x90] sm:$0xff]
    %v62 = vld [vmem:[%s0 + $0x98] sm:$0xff]
    %v63 = vld [vmem:[%s0 + $0xa0] sm:$0xff]
    %v64 = vld [vmem:[%s0 + $0xa8] sm:$0xff]
    %v65 = vld [vmem:[%s0 + $0xb0] sm:$0xff]
    %v66 = vld [vmem:[%s0 + $0xb8] sm:$0xff]
    %v67 = vld [vmem:[%s0 + $0xc0] sm:$0xff]
    %v68 = vld [vmem:[%s0 + $0xc8] sm:$0xff]
    %v69 = vld [vmem:[%s0 + $0xd0] sm:$0xff]
    %v70 = vld [vmem:[%s0 + $0xd8] sm:$0xff]
    %v71 = vld [vmem:[%s0 + $0xe0] sm:$0xff]
    %v72 = vld [vmem:[%s0 + $0xe8] sm:$0xff]
    %v73 = vld [vmem:[%s0 + $0xf0] sm:$0xff]
    %v74 = vld [vmem:[%s0 + $0xf8] sm:$0xff]
    %v75 = vld [vmem:[%s1] sm:$0xff]
    %v76 = vld [vmem:[%s1 + $0x8] sm:$0xff]
    %v77 = vld [vmem:[%s1 + $0x10] sm:$0xff]
    %v78 = vld [vmem:[%s2] sm:$0x1]
    %v80 = vlaneseq
    %v81 = vshrl.u32 %v80, 7
    %v82 = vsub.s32 0, %v81
    %v83 = vrot.slane %v78, %v82
    %vm85 = vcmask 195584
    %v87 = vsel %vm85, %v43, 0
    %v90 = vsel %vm85, %v44, 0
    %v93 = vsel %vm85, %v45, 0
    %v96 = vsel %vm85, %v46, 0
    %v99 = vsel %vm85, %v47, 0
    %v102 = vsel %vm85, %v48, 0
    %v105 = vsel %vm85, %v49, 0
    %v108 = vsel %vm85, %v50, 0
    %v111 = vsel %vm85, %v51, 0
    %v114 = vsel %vm85, %v52, 0
    %v117 = vsel %vm85, %v53, 0
    %v120 = vsel %vm85, %v54, 0
    %v123 = vsel %vm85, %v55, 0
    %v126 = vsel %vm85, %v56, 0
    %v129 = vsel %vm85, %v57, 0
    %v132 = vsel %vm85, %v58, 0
    %v135 = vsel %vm85, %v59, 0
    %v138 = vsel %vm85, %v60, 0
    %v141 = vsel %vm85, %v61, 0
    %v144 = vsel %vm85, %v62, 0
    %v147 = vsel %vm85, %v63, 0
    %v150 = vsel %vm85, %v64, 0
    %v153 = vsel %vm85, %v65, 0
    %v156 = vsel %vm85, %v66, 0
    %v159 = vsel %vm85, %v67, 0
    %v162 = vsel %vm85, %v68, 0
    %v165 = vsel %vm85, %v69, 0
    %v168 = vsel %vm85, %v70, 0
    %v171 = vsel %vm85, %v71, 0
    %v174 = vsel %vm85, %v72, 0
    %v177 = vsel %vm85, %v73, 0
    %v180 = vsel %vm85, %v74, 0
    %182 = vmatprep.subr.mxu0 0.0
    %183 = vmatpush1.msra.mxu0 0.0
    %184 = vmatprep.subr.mxu0 0.0
    %185 = vmatpush1.msra.mxu0 0.0
    %186 = vmatprep.subr.mxu0 0.0
    %187 = vmatpush1.msra.mxu0 0.0
    %188 = vmatprep.subr.mxu0 0.0
    %189 = vmatpush1.msra.mxu0 0.0
    %190 = vmatprep.subr.mxu0 0.0
    %191 = vmatpush1.msra.mxu0 0.0
    %192 = vmatprep.subr.mxu0 0.0
    %193 = vmatpush1.msra.mxu0 0.0
    %194 = vmatprep.subr.mxu0 0.0
    %195 = vmatpush1.msra.mxu0 0.0
    %196 = vmatprep.subr.mxu0 0.0
    %197 = vmatpush1.msra.mxu0 0.0
    %198 = vmatprep.subr.mxu0 0.0
    %199 = vmatpush1.msra.mxu0 0.0
    %200 = vmatprep.subr.mxu0 0.0
    %201 = vmatpush1.msra.mxu0 0.0
    %202 = vmatprep.subr.mxu0 0.0
    %203 = vmatpush1.msra.mxu0 0.0
    %204 = vmatprep.subr.mxu0 0.0
    %205 = vmatpush1.msra.mxu0 0.0
    %206 = vmatprep.subr.mxu0 0.0
    %207 = vmatpush1.msra.mxu0 0.0
    %208 = vmatprep.subr.mxu0 0.0
    %209 = vmatpush1.msra.mxu0 %v77
    %210 = vmatprep.subr.mxu0 0.0
    %211 = vmatpush1.msra.mxu0 %v76
    %212 = vmatprep.subr.mxu0 0.0
    %213 = vmatpush1.msra.mxu0 %v75
    %214 = vmatprep.subr.mxu0 0.0
    %215 = vmatpush2.msra.mxu0 0.0
    %216 = vmatprep.subr.mxu0 0.0
    %217 = vmatpush2.msra.mxu0 0.0
    %218 = vmatprep.subr.mxu0 0.0
    %219 = vmatpush2.msra.mxu0 0.0
    %220 = vmatprep.subr.mxu0 0.0
    %221 = vmatpush2.msra.mxu0 0.0
    %222 = vmatprep.subr.mxu0 0.0
    %223 = vmatpush2.msra.mxu0 0.0
    %224 = vmatprep.subr.mxu0 0.0
    %225 = vmatpush2.msra.mxu0 0.0
    %226 = vmatprep.subr.mxu0 0.0
    %227 = vmatpush2.msra.mxu0 0.0
    %228 = vmatprep.subr.mxu0 0.0
    %229 = vmatpush2.msra.mxu0 0.0
    %230 = vmatprep.subr.mxu0 0.0
    %231 = vmatpush2.msra.mxu0 0.0
    %232 = vmatprep.subr.mxu0 0.0
    %233 = vmatpush2.msra.mxu0 0.0
    %234 = vmatprep.subr.mxu0 0.0
    %235 = vmatpush2.msra.mxu0 0.0
    %236 = vmatprep.subr.mxu0 0.0
    %237 = vmatpush2.msra.mxu0 0.0
    %238 = vmatprep.subr.mxu0 0.0
    %239 = vmatpush2.msra.mxu0 0.0
    %240 = vmatprep.subr.mxu0 0.0
    %241 = vmatpush2.msra.mxu0 0.0
    %242 = vmatprep.subr.mxu0 0.0
    %243 = vmatpush2.msra.mxu0 0.0
    %244 = vmatprep.subr.mxu0 0.0
    %245 = vmatpush2.msra.mxu0 0.0
    %246 = vmatprep.mubr.f32.mxu0 0.0
    %247 = vmatmul.mubr.f32.gmra.mxu0 %v87
    %v248 = vpop.f32.mrf.mxu0
    %v249 = vadd.f32 %v83, %v248
    %v250 = vpop.f32.mrf.mxu0
    %251 = vmatprep.mubr.f32.mxu0 0.0
    %252 = vmatmul.mubr.f32.gmra.mxu0 %v90
    %v253 = vpop.f32.mrf.mxu0
    %v254 = vadd.f32 %v83, %v253
    %v255 = vpop.f32.mrf.mxu0
    %256 = vmatprep.mubr.f32.mxu0 0.0
    %257 = vmatmul.mubr.f32.gmra.mxu0 %v93
    %v258 = vpop.f32.mrf.mxu0
    %v259 = vadd.f32 %v83, %v258
    %v260 = vpop.f32.mrf.mxu0
    %261 = vmatprep.mubr.f32.mxu0 0.0
    %262 = vmatmul.mubr.f32.gmra.mxu0 %v96
    %v263 = vpop.f32.mrf.mxu0
    %v264 = vadd.f32 %v83, %v263
    %v265 = vpop.f32.mrf.mxu0
    %266 = vmatprep.mubr.f32.mxu0 0.0
    %267 = vmatmul.mubr.f32.gmra.mxu0 %v99
    %v268 = vpop.f32.mrf.mxu0
    %v269 = vadd.f32 %v83, %v268
    %v270 = vpop.f32.mrf.mxu0
    %271 = vmatprep.mubr.f32.mxu0 0.0
    %272 = vmatmul.mubr.f32.gmra.mxu0 %v102
    %v273 = vpop.f32.mrf.mxu0
    %v274 = vadd.f32 %v83, %v273
    %v275 = vpop.f32.mrf.mxu0
    %276 = vmatprep.mubr.f32.mxu0 0.0
    %277 = vmatmul.mubr.f32.gmra.mxu0 %v105
    %v278 = vpop.f32.mrf.mxu0
    %v279 = vadd.f32 %v83, %v278
    %v280 = vpop.f32.mrf.mxu0
    %281 = vmatprep.mubr.f32.mxu0 0.0
    %282 = vmatmul.mubr.f32.gmra.mxu0 %v108
    %v283 = vpop.f32.mrf.mxu0
    %v284 = vadd.f32 %v83, %v283
    %v285 = vpop.f32.mrf.mxu0
    %286 = vmatprep.mubr.f32.mxu0 0.0
    %287 = vmatmul.mubr.f32.gmra.mxu0 %v111
    %v288 = vpop.f32.mrf.mxu0
    %v289 = vadd.f32 %v83, %v288
    %v290 = vpop.f32.mrf.mxu0
    %291 = vmatprep.mubr.f32.mxu0 0.0
    %292 = vmatmul.mubr.f32.gmra.mxu0 %v114
    %v293 = vpop.f32.mrf.mxu0
    %v294 = vadd.f32 %v83, %v293
    %v295 = vpop.f32.mrf.mxu0
    %296 = vmatprep.mubr.f32.mxu0 0.0
    %297 = vmatmul.mubr.f32.gmra.mxu0 %v117
    %v298 = vpop.f32.mrf.mxu0
    %v299 = vadd.f32 %v83, %v298
    %v300 = vpop.f32.mrf.mxu0
    %301 = vmatprep.mubr.f32.mxu0 0.0
    %302 = vmatmul.mubr.f32.gmra.mxu0 %v120
    %v303 = vpop.f32.mrf.mxu0
    %v304 = vadd.f32 %v83, %v303
    %v305 = vpop.f32.mrf.mxu0
    %306 = vmatprep.mubr.f32.mxu0 0.0
    %307 = vmatmul.mubr.f32.gmra.mxu0 %v123
    %v308 = vpop.f32.mrf.mxu0
    %v309 = vadd.f32 %v83, %v308
    %v310 = vpop.f32.mrf.mxu0
    %311 = vmatprep.mubr.f32.mxu0 0.0
    %312 = vmatmul.mubr.f32.gmra.mxu0 %v126
    %v313 = vpop.f32.mrf.mxu0
    %v314 = vadd.f32 %v83, %v313
    %v315 = vpop.f32.mrf.mxu0
    %316 = vmatprep.mubr.f32.mxu0 0.0
    %317 = vmatmul.mubr.f32.gmra.mxu0 %v129
    %v318 = vpop.f32.mrf.mxu0
    %v319 = vadd.f32 %v83, %v318
    %v320 = vpop.f32.mrf.mxu0
    %321 = vmatprep.mubr.f32.mxu0 0.0
    %322 = vmatmul.mubr.f32.gmra.mxu0 %v132
    %v323 = vpop.f32.mrf.mxu0
    %v324 = vadd.f32 %v83, %v323
    %v325 = vpop.f32.mrf.mxu0
    %326 = vmatprep.mubr.f32.mxu0 0.0
    %327 = vmatmul.mubr.f32.gmra.mxu0 %v135
    %v328 = vpop.f32.mrf.mxu0
    %v329 = vadd.f32 %v83, %v328
    %v330 = vpop.f32.mrf.mxu0
    %331 = vmatprep.mubr.f32.mxu0 0.0
    %332 = vmatmul.mubr.f32.gmra.mxu0 %v138
    %v333 = vpop.f32.mrf.mxu0
    %v334 = vadd.f32 %v83, %v333
    %v335 = vpop.f32.mrf.mxu0
    %336 = vmatprep.mubr.f32.mxu0 0.0
    %337 = vmatmul.mubr.f32.gmra.mxu0 %v141
    %v338 = vpop.f32.mrf.mxu0
    %v339 = vadd.f32 %v83, %v338
    %v340 = vpop.f32.mrf.mxu0
    %341 = vmatprep.mubr.f32.mxu0 0.0
    %342 = vmatmul.mubr.f32.gmra.mxu0 %v144
    %v343 = vpop.f32.mrf.mxu0
    %v344 = vadd.f32 %v83, %v343
    %v345 = vpop.f32.mrf.mxu0
    %346 = vmatprep.mubr.f32.mxu0 0.0
    %347 = vmatmul.mubr.f32.gmra.mxu0 %v147
    %v348 = vpop.f32.mrf.mxu0
    %v349 = vadd.f32 %v83, %v348
    %v350 = vpop.f32.mrf.mxu0
    %351 = vmatprep.mubr.f32.mxu0 0.0
    %352 = vmatmul.mubr.f32.gmra.mxu0 %v150
    %v353 = vpop.f32.mrf.mxu0
    %v354 = vadd.f32 %v83, %v353
    %v355 = vpop.f32.mrf.mxu0
    %356 = vmatprep.mubr.f32.mxu0 0.0
    %357 = vmatmul.mubr.f32.gmra.mxu0 %v153
    %v358 = vpop.f32.mrf.mxu0
    %v359 = vadd.f32 %v83, %v358
    %v360 = vpop.f32.mrf.mxu0
    %361 = vmatprep.mubr.f32.mxu0 0.0
    %362 = vmatmul.mubr.f32.gmra.mxu0 %v156
    %v363 = vpop.f32.mrf.mxu0
    %v364 = vadd.f32 %v83, %v363
    %v365 = vpop.f32.mrf.mxu0
    %366 = vmatprep.mubr.f32.mxu0 0.0
    %367 = vmatmul.mubr.f32.gmra.mxu0 %v159
    %v368 = vpop.f32.mrf.mxu0
    %v369 = vadd.f32 %v83, %v368
    %v370 = vpop.f32.mrf.mxu0
    %371 = vmatprep.mubr.f32.mxu0 0.0
    %372 = vmatmul.mubr.f32.gmra.mxu0 %v162
    %v373 = vpop.f32.mrf.mxu0
    %v374 = vadd.f32 %v83, %v373
    %v375 = vpop.f32.mrf.mxu0
    %376 = vmatprep.mubr.f32.mxu0 0.0
    %377 = vmatmul.mubr.f32.gmra.mxu0 %v165
    %v378 = vpop.f32.mrf.mxu0
    %v379 = vadd.f32 %v83, %v378
    %v380 = vpop.f32.mrf.mxu0
    %381 = vmatprep.mubr.f32.mxu0 0.0
    %382 = vmatmul.mubr.f32.gmra.mxu0 %v168
    %v383 = vpop.f32.mrf.mxu0
    %v384 = vadd.f32 %v83, %v383
    %v385 = vpop.f32.mrf.mxu0
    %386 = vmatprep.mubr.f32.mxu0 0.0
    %387 = vmatmul.mubr.f32.gmra.mxu0 %v171
    %v388 = vpop.f32.mrf.mxu0
    %v389 = vadd.f32 %v83, %v388
    %v390 = vpop.f32.mrf.mxu0
    %391 = vmatprep.mubr.f32.mxu0 0.0
    %392 = vmatmul.mubr.f32.gmra.mxu0 %v174
    %v393 = vpop.f32.mrf.mxu0
    %v394 = vadd.f32 %v83, %v393
    %v395 = vpop.f32.mrf.mxu0
    %396 = vmatprep.mubr.f32.mxu0 0.0
    %397 = vmatmul.mubr.f32.gmra.mxu0 %v177
    %v398 = vpop.f32.mrf.mxu0
    %v399 = vadd.f32 %v83, %v398
    %v400 = vpop.f32.mrf.mxu0
    %401 = vmatprep.mubr.f32.mxu0 0.0
    %402 = vmatmul.mubr.f32.gmra.mxu0 %v180
    %v403 = vpop.f32.mrf.mxu0
    %v404 = vadd.f32 %v83, %v403
    %v405 = vpop.f32.mrf.mxu0
    %406 = vdwg.mxu0
    %v407 = vmax.f32 %v249, 0.0
    %v408 = vmax.f32 %v254, 0.0
    %v409 = vmax.f32 %v259, 0.0
    %v410 = vmax.f32 %v264, 0.0
    %v411 = vmax.f32 %v269, 0.0
    %v412 = vmax.f32 %v274, 0.0
    %v413 = vmax.f32 %v279, 0.0
    %v414 = vmax.f32 %v284, 0.0
    %v415 = vmax.f32 %v289, 0.0
    %v416 = vmax.f32 %v294, 0.0
    %v417 = vmax.f32 %v299, 0.0
    %v418 = vmax.f32 %v304, 0.0
    %v419 = vmax.f32 %v309, 0.0
    %v420 = vmax.f32 %v314, 0.0
    %v421 = vmax.f32 %v319, 0.0
    %v422 = vmax.f32 %v324, 0.0
    %v423 = vmax.f32 %v329, 0.0
    %v424 = vmax.f32 %v334, 0.0
    %v425 = vmax.f32 %v339, 0.0
    %v426 = vmax.f32 %v344, 0.0
    %v427 = vmax.f32 %v349, 0.0
    %v428 = vmax.f32 %v354, 0.0
    %v429 = vmax.f32 %v359, 0.0
    %v430 = vmax.f32 %v364, 0.0
    %v431 = vmax.f32 %v369, 0.0
    %v432 = vmax.f32 %v374, 0.0
    %v433 = vmax.f32 %v379, 0.0
    %v434 = vmax.f32 %v384, 0.0
    %v435 = vmax.f32 %v389, 0.0
    %v436 = vmax.f32 %v394, 0.0
    %v437 = vmax.f32 %v399, 0.0
    %v438 = vmax.f32 %v404, 0.0
    %439 = vst [vmem:[#allocation2] sm:$0xff] %v407
    %440 = vst [vmem:[#allocation2 + $0x8] sm:$0xff] %v408
    %441 = vst [vmem:[#allocation2 + $0x10] sm:$0xff] %v409
    %442 = vst [vmem:[#allocation2 + $0x18] sm:$0xff] %v410
    %443 = vst [vmem:[#allocation2 + $0x20] sm:$0xff] %v411
    %444 = vst [vmem:[#allocation2 + $0x28] sm:$0xff] %v412
    %445 = vst [vmem:[#allocation2 + $0x30] sm:$0xff] %v413
    %446 = vst [vmem:[#allocation2 + $0x38] sm:$0xff] %v414
    %447 = vst [vmem:[#allocation2 + $0x40] sm:$0xff] %v415
    %448 = vst [vmem:[#allocation2 + $0x48] sm:$0xff] %v416
    %449 = vst [vmem:[#allocation2 + $0x50] sm:$0xff] %v417
    %450 = vst [vmem:[#allocation2 + $0x58] sm:$0xff] %v418
    %451 = vst [vmem:[#allocation2 + $0x60] sm:$0xff] %v419
    %452 = vst [vmem:[#allocation2 + $0x68] sm:$0xff] %v420
    %453 = vst [vmem:[#allocation2 + $0x70] sm:$0xff] %v421
    %454 = vst [vmem:[#allocation2 + $0x78] sm:$0xff] %v422
    %455 = vst [vmem:[#allocation2 + $0x80] sm:$0xff] %v423
    %456 = vst [vmem:[#allocation2 + $0x88] sm:$0xff] %v424
    %457 = vst [vmem:[#allocation2 + $0x90] sm:$0xff] %v425
    %458 = vst [vmem:[#allocation2 + $0x98] sm:$0xff] %v426
    %459 = vst [vmem:[#allocation2 + $0xa0] sm:$0xff] %v427
    %460 = vst [vmem:[#allocation2 + $0xa8] sm:$0xff] %v428
    %461 = vst [vmem:[#allocation2 + $0xb0] sm:$0xff] %v429
    %462 = vst [vmem:[#allocation2 + $0xb8] sm:$0xff] %v430
    %463 = vst [vmem:[#allocation2 + $0xc0] sm:$0xff] %v431
    %464 = vst [vmem:[#allocation2 + $0xc8] sm:$0xff] %v432
    %465 = vst [vmem:[#allocation2 + $0xd0] sm:$0xff] %v433
    %466 = vst [vmem:[#allocation2 + $0xd8] sm:$0xff] %v434
    %467 = vst [vmem:[#allocation2 + $0xe0] sm:$0xff] %v435
    %468 = vst [vmem:[#allocation2 + $0xe8] sm:$0xff] %v436
    %469 = vst [vmem:[#allocation2 + $0xf0] sm:$0xff] %v437
    %470 = vst [vmem:[#allocation2 + $0xf8] sm:$0xff] %v438
    %v471 = vld [vmem:[%s0 + $0x100] sm:$0xff]
    %v472 = vld [vmem:[%s0 + $0x108] sm:$0xff]
    %v473 = vld [vmem:[%s0 + $0x110] sm:$0xff]
    %v474 = vld [vmem:[%s0 + $0x118] sm:$0xff]
    %v475 = vld [vmem:[%s0 + $0x120] sm:$0xff]
    %v476 = vld [vmem:[%s0 + $0x128] sm:$0xff]
    %v477 = vld [vmem:[%s0 + $0x130] sm:$0xff]
    %v478 = vld [vmem:[%s0 + $0x138] sm:$0xff]
    %v479 = vld [vmem:[%s0 + $0x140] sm:$0xff]
    %v480 = vld [vmem:[%s0 + $0x148] sm:$0xff]
    %v481 = vld [vmem:[%s0 + $0x150] sm:$0xff]
    %v482 = vld [vmem:[%s0 + $0x158] sm:$0xff]
    %v483 = vld [vmem:[%s0 + $0x160] sm:$0xff]
    %v484 = vld [vmem:[%s0 + $0x168] sm:$0xff]
    %v485 = vld [vmem:[%s0 + $0x170] sm:$0xff]
    %v486 = vld [vmem:[%s0 + $0x178] sm:$0xff]
    %v487 = vld [vmem:[%s0 + $0x180] sm:$0xff]
    %v488 = vld [vmem:[%s0 + $0x188] sm:$0xff]
    %v489 = vld [vmem:[%s0 + $0x190] sm:$0xff]
    %v490 = vld [vmem:[%s0 + $0x198] sm:$0xff]
    %v491 = vld [vmem:[%s0 + $0x1a0] sm:$0xff]
    %v492 = vld [vmem:[%s0 + $0x1a8] sm:$0xff]
    %v493 = vld [vmem:[%s0 + $0x1b0] sm:$0xff]
    %v494 = vld [vmem:[%s0 + $0x1b8] sm:$0xff]
    %v495 = vld [vmem:[%s0 + $0x1c0] sm:$0xff]
    %v496 = vld [vmem:[%s0 + $0x1c8] sm:$0xff]
    %v497 = vld [vmem:[%s0 + $0x1d0] sm:$0xff]
    %v498 = vld [vmem:[%s0 + $0x1d8] sm:$0xff]
    %v499 = vld [vmem:[%s0 + $0x1e0] sm:$0xff]
    %v500 = vld [vmem:[%s0 + $0x1e8] sm:$0xff]
    %v501 = vld [vmem:[%s0 + $0x1f0] sm:$0xff]
    %v502 = vld [vmem:[%s0 + $0x1f8] sm:$0xff]
    %v503 = vld [vmem:[%s1] sm:$0xff]
    %v504 = vld [vmem:[%s1 + $0x8] sm:$0xff]
    %v505 = vld [vmem:[%s1 + $0x10] sm:$0xff]
    %v506 = vld [vmem:[%s2] sm:$0x1]
    %v508 = vlaneseq
    %v509 = vshrl.u32 %v508, 7
    %v510 = vsub.s32 0, %v509
    %v511 = vrot.slane %v506, %v510
    %v514 = vsel %vm85, %v471, 0
    %v517 = vsel %vm85, %v472, 0
    %v520 = vsel %vm85, %v473, 0
    %v523 = vsel %vm85, %v474, 0
    %v526 = vsel %vm85, %v475, 0
    %v529 = vsel %vm85, %v476, 0
    %v532 = vsel %vm85, %v477, 0
    %v535 = vsel %vm85, %v478, 0
    %v538 = vsel %vm85, %v479, 0
    %v541 = vsel %vm85, %v480, 0
    %v544 = vsel %vm85, %v481, 0
    %v547 = vsel %vm85, %v482, 0
    %v550 = vsel %vm85, %v483, 0
    %v553 = vsel %vm85, %v484, 0
    %v556 = vsel %vm85, %v485, 0
    %v559 = vsel %vm85, %v486, 0
    %v562 = vsel %vm85, %v487, 0
    %v565 = vsel %vm85, %v488, 0
    %v568 = vsel %vm85, %v489, 0
    %v571 = vsel %vm85, %v490, 0
    %v574 = vsel %vm85, %v491, 0
    %v577 = vsel %vm85, %v492, 0
    %v580 = vsel %vm85, %v493, 0
    %v583 = vsel %vm85, %v494, 0
    %v586 = vsel %vm85, %v495, 0
    %v589 = vsel %vm85, %v496, 0
    %v592 = vsel %vm85, %v497, 0
    %v595 = vsel %vm85, %v498, 0
    %v598 = vsel %vm85, %v499, 0
    %v601 = vsel %vm85, %v500, 0
    %v604 = vsel %vm85, %v501, 0
    %v607 = vsel %vm85, %v502, 0
    %609 = vmatprep.subr.mxu0 0.0
    %610 = vmatpush1.msra.mxu0 0.0
    %611 = vmatprep.subr.mxu0 0.0
    %612 = vmatpush1.msra.mxu0 0.0
    %613 = vmatprep.subr.mxu0 0.0
    %614 = vmatpush1.msra.mxu0 0.0
    %615 = vmatprep.subr.mxu0 0.0
    %616 = vmatpush1.msra.mxu0 0.0
    %617 = vmatprep.subr.mxu0 0.0
    %618 = vmatpush1.msra.mxu0 0.0
    %619 = vmatprep.subr.mxu0 0.0
    %620 = vmatpush1.msra.mxu0 0.0
    %621 = vmatprep.subr.mxu0 0.0
    %622 = vmatpush1.msra.mxu0 0.0
    %623 = vmatprep.subr.mxu0 0.0
    %624 = vmatpush1.msra.mxu0 0.0
    %625 = vmatprep.subr.mxu0 0.0
    %626 = vmatpush1.msra.mxu0 0.0
    %627 = vmatprep.subr.mxu0 0.0
    %628 = vmatpush1.msra.mxu0 0.0
    %629 = vmatprep.subr.mxu0 0.0
    %630 = vmatpush1.msra.mxu0 0.0
    %631 = vmatprep.subr.mxu0 0.0
    %632 = vmatpush1.msra.mxu0 0.0
    %633 = vmatprep.subr.mxu0 0.0
    %634 = vmatpush1.msra.mxu0 0.0
    %635 = vmatprep.subr.mxu0 0.0
    %636 = vmatpush1.msra.mxu0 %v505
    %637 = vmatprep.subr.mxu0 0.0
    %638 = vmatpush1.msra.mxu0 %v504
    %639 = vmatprep.subr.mxu0 0.0
    %640 = vmatpush1.msra.mxu0 %v503
    %641 = vmatprep.subr.mxu0 0.0
    %642 = vmatpush2.msra.mxu0 0.0
    %643 = vmatprep.subr.mxu0 0.0
    %644 = vmatpush2.msra.mxu0 0.0
    %645 = vmatprep.subr.mxu0 0.0
    %646 = vmatpush2.msra.mxu0 0.0
    %647 = vmatprep.subr.mxu0 0.0
    %648 = vmatpush2.msra.mxu0 0.0
    %649 = vmatprep.subr.mxu0 0.0
    %650 = vmatpush2.msra.mxu0 0.0
    %651 = vmatprep.subr.mxu0 0.0
    %652 = vmatpush2.msra.mxu0 0.0
    %653 = vmatprep.subr.mxu0 0.0
    %654 = vmatpush2.msra.mxu0 0.0
    %655 = vmatprep.subr.mxu0 0.0
    %656 = vmatpush2.msra.mxu0 0.0
    %657 = vmatprep.subr.mxu0 0.0
    %658 = vmatpush2.msra.mxu0 0.0
    %659 = vmatprep.subr.mxu0 0.0
    %660 = vmatpush2.msra.mxu0 0.0
    %661 = vmatprep.subr.mxu0 0.0
    %662 = vmatpush2.msra.mxu0 0.0
    %663 = vmatprep.subr.mxu0 0.0
    %664 = vmatpush2.msra.mxu0 0.0
    %665 = vmatprep.subr.mxu0 0.0
    %666 = vmatpush2.msra.mxu0 0.0
    %667 = vmatprep.subr.mxu0 0.0
    %668 = vmatpush2.msra.mxu0 0.0
    %669 = vmatprep.subr.mxu0 0.0
    %670 = vmatpush2.msra.mxu0 0.0
    %671 = vmatprep.subr.mxu0 0.0
    %672 = vmatpush2.msra.mxu0 0.0
    %673 = vmatprep.mubr.f32.mxu0 0.0
    %674 = vmatmul.mubr.f32.gmra.mxu0 %v514
    %v675 = vpop.f32.mrf.mxu0
    %v676 = vadd.f32 %v511, %v675
    %v677 = vpop.f32.mrf.mxu0
    %678 = vmatprep.mubr.f32.mxu0 0.0
    %679 = vmatmul.mubr.f32.gmra.mxu0 %v517
    %v680 = vpop.f32.mrf.mxu0
    %v681 = vadd.f32 %v511, %v680
    %v682 = vpop.f32.mrf.mxu0
    %683 = vmatprep.mubr.f32.mxu0 0.0
    %684 = vmatmul.mubr.f32.gmra.mxu0 %v520
    %v685 = vpop.f32.mrf.mxu0
    %v686 = vadd.f32 %v511, %v685
    %v687 = vpop.f32.mrf.mxu0
    %688 = vmatprep.mubr.f32.mxu0 0.0
    %689 = vmatmul.mubr.f32.gmra.mxu0 %v523
    %v690 = vpop.f32.mrf.mxu0
    %v691 = vadd.f32 %v511, %v690
    %v692 = vpop.f32.mrf.mxu0
    %693 = vmatprep.mubr.f32.mxu0 0.0
    %694 = vmatmul.mubr.f32.gmra.mxu0 %v526
    %v695 = vpop.f32.mrf.mxu0
    %v696 = vadd.f32 %v511, %v695
    %v697 = vpop.f32.mrf.mxu0
    %698 = vmatprep.mubr.f32.mxu0 0.0
    %699 = vmatmul.mubr.f32.gmra.mxu0 %v529
    %v700 = vpop.f32.mrf.mxu0
    %v701 = vadd.f32 %v511, %v700
    %v702 = vpop.f32.mrf.mxu0
    %703 = vmatprep.mubr.f32.mxu0 0.0
    %704 = vmatmul.mubr.f32.gmra.mxu0 %v532
    %v705 = vpop.f32.mrf.mxu0
    %v706 = vadd.f32 %v511, %v705
    %v707 = vpop.f32.mrf.mxu0
    %708 = vmatprep.mubr.f32.mxu0 0.0
    %709 = vmatmul.mubr.f32.gmra.mxu0 %v535
    %v710 = vpop.f32.mrf.mxu0
    %v711 = vadd.f32 %v511, %v710
    %v712 = vpop.f32.mrf.mxu0
    %713 = vmatprep.mubr.f32.mxu0 0.0
    %714 = vmatmul.mubr.f32.gmra.mxu0 %v538
    %v715 = vpop.f32.mrf.mxu0
    %v716 = vadd.f32 %v511, %v715
    %v717 = vpop.f32.mrf.mxu0
    %718 = vmatprep.mubr.f32.mxu0 0.0
    %719 = vmatmul.mubr.f32.gmra.mxu0 %v541
    %v720 = vpop.f32.mrf.mxu0
    %v721 = vadd.f32 %v511, %v720
    %v722 = vpop.f32.mrf.mxu0
    %723 = vmatprep.mubr.f32.mxu0 0.0
    %724 = vmatmul.mubr.f32.gmra.mxu0 %v544
    %v725 = vpop.f32.mrf.mxu0
    %v726 = vadd.f32 %v511, %v725
    %v727 = vpop.f32.mrf.mxu0
    %728 = vmatprep.mubr.f32.mxu0 0.0
    %729 = vmatmul.mubr.f32.gmra.mxu0 %v547
    %v730 = vpop.f32.mrf.mxu0
    %v731 = vadd.f32 %v511, %v730
    %v732 = vpop.f32.mrf.mxu0
    %733 = vmatprep.mubr.f32.mxu0 0.0
    %734 = vmatmul.mubr.f32.gmra.mxu0 %v550
    %v735 = vpop.f32.mrf.mxu0
    %v736 = vadd.f32 %v511, %v735
    %v737 = vpop.f32.mrf.mxu0
    %738 = vmatprep.mubr.f32.mxu0 0.0
    %739 = vmatmul.mubr.f32.gmra.mxu0 %v553
    %v740 = vpop.f32.mrf.mxu0
    %v741 = vadd.f32 %v511, %v740
    %v742 = vpop.f32.mrf.mxu0
    %743 = vmatprep.mubr.f32.mxu0 0.0
    %744 = vmatmul.mubr.f32.gmra.mxu0 %v556
    %v745 = vpop.f32.mrf.mxu0
    %v746 = vadd.f32 %v511, %v745
    %v747 = vpop.f32.mrf.mxu0
    %748 = vmatprep.mubr.f32.mxu0 0.0
    %749 = vmatmul.mubr.f32.gmra.mxu0 %v559
    %v750 = vpop.f32.mrf.mxu0
    %v751 = vadd.f32 %v511, %v750
    %v752 = vpop.f32.mrf.mxu0
    %753 = vmatprep.mubr.f32.mxu0 0.0
    %754 = vmatmul.mubr.f32.gmra.mxu0 %v562
    %v755 = vpop.f32.mrf.mxu0
    %v756 = vadd.f32 %v511, %v755
    %v757 = vpop.f32.mrf.mxu0
    %758 = vmatprep.mubr.f32.mxu0 0.0
    %759 = vmatmul.mubr.f32.gmra.mxu0 %v565
    %v760 = vpop.f32.mrf.mxu0
    %v761 = vadd.f32 %v511, %v760
    %v762 = vpop.f32.mrf.mxu0
    %763 = vmatprep.mubr.f32.mxu0 0.0
    %764 = vmatmul.mubr.f32.gmra.mxu0 %v568
    %v765 = vpop.f32.mrf.mxu0
    %v766 = vadd.f32 %v511, %v765
    %v767 = vpop.f32.mrf.mxu0
    %768 = vmatprep.mubr.f32.mxu0 0.0
    %769 = vmatmul.mubr.f32.gmra.mxu0 %v571
    %v770 = vpop.f32.mrf.mxu0
    %v771 = vadd.f32 %v511, %v770
    %v772 = vpop.f32.mrf.mxu0
    %773 = vmatprep.mubr.f32.mxu0 0.0
    %774 = vmatmul.mubr.f32.gmra.mxu0 %v574
    %v775 = vpop.f32.mrf.mxu0
    %v776 = vadd.f32 %v511, %v775
    %v777 = vpop.f32.mrf.mxu0
    %778 = vmatprep.mubr.f32.mxu0 0.0
    %779 = vmatmul.mubr.f32.gmra.mxu0 %v577
    %v780 = vpop.f32.mrf.mxu0
    %v781 = vadd.f32 %v511, %v780
    %v782 = vpop.f32.mrf.mxu0
    %783 = vmatprep.mubr.f32.mxu0 0.0
    %784 = vmatmul.mubr.f32.gmra.mxu0 %v580
    %v785 = vpop.f32.mrf.mxu0
    %v786 = vadd.f32 %v511, %v785
    %v787 = vpop.f32.mrf.mxu0
    %788 = vmatprep.mubr.f32.mxu0 0.0
    %789 = vmatmul.mubr.f32.gmra.mxu0 %v583
    %v790 = vpop.f32.mrf.mxu0
    %v791 = vadd.f32 %v511, %v790
    %v792 = vpop.f32.mrf.mxu0
    %793 = vmatprep.mubr.f32.mxu0 0.0
    %794 = vmatmul.mubr.f32.gmra.mxu0 %v586
    %v795 = vpop.f32.mrf.mxu0
    %v796 = vadd.f32 %v511, %v795
    %v797 = vpop.f32.mrf.mxu0
    %798 = vmatprep.mubr.f32.mxu0 0.0
    %799 = vmatmul.mubr.f32.gmra.mxu0 %v589
    %v800 = vpop.f32.mrf.mxu0
    %v801 = vadd.f32 %v511, %v800
    %v802 = vpop.f32.mrf.mxu0
    %803 = vmatprep.mubr.f32.mxu0 0.0
    %804 = vmatmul.mubr.f32.gmra.mxu0 %v592
    %v805 = vpop.f32.mrf.mxu0
    %v806 = vadd.f32 %v511, %v805
    %v807 = vpop.f32.mrf.mxu0
    %808 = vmatprep.mubr.f32.mxu0 0.0
    %809 = vmatmul.mubr.f32.gmra.mxu0 %v595
    %v810 = vpop.f32.mrf.mxu0
    %v811 = vadd.f32 %v511, %v810
    %v812 = vpop.f32.mrf.mxu0
    %813 = vmatprep.mubr.f32.mxu0 0.0
    %814 = vmatmul.mubr.f32.gmra.mxu0 %v598
    %v815 = vpop.f32.mrf.mxu0
    %v816 = vadd.f32 %v511, %v815
    %v817 = vpop.f32.mrf.mxu0
    %818 = vmatprep.mubr.f32.mxu0 0.0
    %819 = vmatmul.mubr.f32.gmra.mxu0 %v601
    %v820 = vpop.f32.mrf.mxu0
    %v821 = vadd.f32 %v511, %v820
    %v822 = vpop.f32.mrf.mxu0
    %823 = vmatprep.mubr.f32.mxu0 0.0
    %824 = vmatmul.mubr.f32.gmra.mxu0 %v604
    %v825 = vpop.f32.mrf.mxu0
    %v826 = vadd.f32 %v511, %v825
    %v827 = vpop.f32.mrf.mxu0
    %828 = vmatprep.mubr.f32.mxu0 0.0
    %829 = vmatmul.mubr.f32.gmra.mxu0 %v607
    %v830 = vpop.f32.mrf.mxu0
    %v831 = vadd.f32 %v511, %v830
    %v832 = vpop.f32.mrf.mxu0
    %833 = vdwg.mxu0
    %v834 = vmax.f32 %v676, 0.0
    %v835 = vmax.f32 %v681, 0.0
    %v836 = vmax.f32 %v686, 0.0
    %v837 = vmax.f32 %v691, 0.0
    %v838 = vmax.f32 %v696, 0.0
    %v839 = vmax.f32 %v701, 0.0
    %v840 = vmax.f32 %v706, 0.0
    %v841 = vmax.f32 %v711, 0.0
    %v842 = vmax.f32 %v716, 0.0
    %v843 = vmax.f32 %v721, 0.0
    %v844 = vmax.f32 %v726, 0.0
    %v845 = vmax.f32 %v731, 0.0
    %v846 = vmax.f32 %v736, 0.0
    %v847 = vmax.f32 %v741, 0.0
    %v848 = vmax.f32 %v746, 0.0
    %v849 = vmax.f32 %v751, 0.0
    %v850 = vmax.f32 %v756, 0.0
    %v851 = vmax.f32 %v761, 0.0
    %v852 = vmax.f32 %v766, 0.0
    %v853 = vmax.f32 %v771, 0.0
    %v854 = vmax.f32 %v776, 0.0
    %v855 = vmax.f32 %v781, 0.0
    %v856 = vmax.f32 %v786, 0.0
    %v857 = vmax.f32 %v791, 0.0
    %v858 = vmax.f32 %v796, 0.0
    %v859 = vmax.f32 %v801, 0.0
    %v860 = vmax.f32 %v806, 0.0
    %v861 = vmax.f32 %v811, 0.0
    %v862 = vmax.f32 %v816, 0.0
    %v863 = vmax.f32 %v821, 0.0
    %v864 = vmax.f32 %v826, 0.0
    %v865 = vmax.f32 %v831, 0.0
    %866 = vst [vmem:[#allocation2 + $0x100] sm:$0xff] %v834
    %867 = vst [vmem:[#allocation2 + $0x108] sm:$0xff] %v835
    %868 = vst [vmem:[#allocation2 + $0x110] sm:$0xff] %v836
    %869 = vst [vmem:[#allocation2 + $0x118] sm:$0xff] %v837
    %870 = vst [vmem:[#allocation2 + $0x120] sm:$0xff] %v838
    %871 = vst [vmem:[#allocation2 + $0x128] sm:$0xff] %v839
    %872 = vst [vmem:[#allocation2 + $0x130] sm:$0xff] %v840
    %873 = vst [vmem:[#allocation2 + $0x138] sm:$0xff] %v841
    %874 = vst [vmem:[#allocation2 + $0x140] sm:$0xff] %v842
    %875 = vst [vmem:[#allocation2 + $0x148] sm:$0xff] %v843
    %876 = vst [vmem:[#allocation2 + $0x150] sm:$0xff] %v844
    %877 = vst [vmem:[#allocation2 + $0x158] sm:$0xff] %v845
    %878 = vst [vmem:[#allocation2 + $0x160] sm:$0xff] %v846
    %879 = vst [vmem:[#allocation2 + $0x168] sm:$0xff] %v847
    %880 = vst [vmem:[#allocation2 + $0x170] sm:$0xff] %v848
    %881 = vst [vmem:[#allocation2 + $0x178] sm:$0xff] %v849
    %882 = vst [vmem:[#allocation2 + $0x180] sm:$0xff] %v850
    %883 = vst [vmem:[#allocation2 + $0x188] sm:$0xff] %v851
    %884 = vst [vmem:[#allocation2 + $0x190] sm:$0xff] %v852
    %885 = vst [vmem:[#allocation2 + $0x198] sm:$0xff] %v853
    %886 = vst [vmem:[#allocation2 + $0x1a0] sm:$0xff] %v854
    %887 = vst [vmem:[#allocation2 + $0x1a8] sm:$0xff] %v855
    %888 = vst [vmem:[#allocation2 + $0x1b0] sm:$0xff] %v856
    %889 = vst [vmem:[#allocation2 + $0x1b8] sm:$0xff] %v857
    %890 = vst [vmem:[#allocation2 + $0x1c0] sm:$0xff] %v858
    %891 = vst [vmem:[#allocation2 + $0x1c8] sm:$0xff] %v859
    %892 = vst [vmem:[#allocation2 + $0x1d0] sm:$0xff] %v860
    %893 = vst [vmem:[#allocation2 + $0x1d8] sm:$0xff] %v861
    %894 = vst [vmem:[#allocation2 + $0x1e0] sm:$0xff] %v862
    %895 = vst [vmem:[#allocation2 + $0x1e8] sm:$0xff] %v863
    %896 = vst [vmem:[#allocation2 + $0x1f0] sm:$0xff] %v864
    %897 = vst [vmem:[#allocation2 + $0x1f8] sm:$0xff] %v865
    %v898 = vld [vmem:[%s0 + $0x200] sm:$0xff]
    %v899 = vld [vmem:[%s0 + $0x208] sm:$0xff]
    %v900 = vld [vmem:[%s0 + $0x210] sm:$0xff]
    %v901 = vld [vmem:[%s0 + $0x218] sm:$0xff]
    %v902 = vld [vmem:[%s0 + $0x220] sm:$0xff]
    %v903 = vld [vmem:[%s0 + $0x228] sm:$0xff]
    %v904 = vld [vmem:[%s0 + $0x230] sm:$0xff]
    %v905 = vld [vmem:[%s0 + $0x238] sm:$0xff]
    %v906 = vld [vmem:[%s0 + $0x240] sm:$0xff]
    %v907 = vld [vmem:[%s0 + $0x248] sm:$0xff]
    %v908 = vld [vmem:[%s0 + $0x250] sm:$0xff]
    %v909 = vld [vmem:[%s0 + $0x258] sm:$0xff]
    %v910 = vld [vmem:[%s0 + $0x260] sm:$0xff]
    %v911 = vld [vmem:[%s0 + $0x268] sm:$0xff]
    %v912 = vld [vmem:[%s0 + $0x270] sm:$0xff]
    %v913 = vld [vmem:[%s0 + $0x278] sm:$0xff]
    %v914 = vld [vmem:[%s0 + $0x280] sm:$0xff]
    %v915 = vld [vmem:[%s0 + $0x288] sm:$0xff]
    %v916 = vld [vmem:[%s0 + $0x290] sm:$0xff]
    %v917 = vld [vmem:[%s0 + $0x298] sm:$0xff]
    %v918 = vld [vmem:[%s0 + $0x2a0] sm:$0xff]
    %v919 = vld [vmem:[%s0 + $0x2a8] sm:$0xff]
    %v920 = vld [vmem:[%s0 + $0x2b0] sm:$0xff]
    %v921 = vld [vmem:[%s0 + $0x2b8] sm:$0xff]
    %v922 = vld [vmem:[%s0 + $0x2c0] sm:$0xff]
    %v923 = vld [vmem:[%s0 + $0x2c8] sm:$0xff]
    %v924 = vld [vmem:[%s0 + $0x2d0] sm:$0xff]
    %v925 = vld [vmem:[%s0 + $0x2d8] sm:$0xff]
    %v926 = vld [vmem:[%s0 + $0x2e0] sm:$0xff]
    %v927 = vld [vmem:[%s0 + $0x2e8] sm:$0xff]
    %v928 = vld [vmem:[%s0 + $0x2f0] sm:$0xff]
    %v929 = vld [vmem:[%s0 + $0x2f8] sm:$0xff]
    %v930 = vld [vmem:[%s1] sm:$0xff]
    %v931 = vld [vmem:[%s1 + $0x8] sm:$0xff]
    %v932 = vld [vmem:[%s1 + $0x10] sm:$0xff]
    %v933 = vld [vmem:[%s2] sm:$0x1]
    %v935 = vlaneseq
    %v936 = vshrl.u32 %v935, 7
    %v937 = vsub.s32 0, %v936
    %v938 = vrot.slane %v933, %v937
    %v941 = vsel %vm85, %v898, 0
    %v944 = vsel %vm85, %v899, 0
    %v947 = vsel %vm85, %v900, 0
    %v950 = vsel %vm85, %v901, 0
    %v953 = vsel %vm85, %v902, 0
    %v956 = vsel %vm85, %v903, 0
    %v959 = vsel %vm85, %v904, 0
    %v962 = vsel %vm85, %v905, 0
    %v965 = vsel %vm85, %v906, 0
    %v968 = vsel %vm85, %v907, 0
    %v971 = vsel %vm85, %v908, 0
    %v974 = vsel %vm85, %v909, 0
    %v977 = vsel %vm85, %v910, 0
    %v980 = vsel %vm85, %v911, 0
    %v983 = vsel %vm85, %v912, 0
    %v986 = vsel %vm85, %v913, 0
    %v989 = vsel %vm85, %v914, 0
    %v992 = vsel %vm85, %v915, 0
    %v995 = vsel %vm85, %v916, 0
    %v998 = vsel %vm85, %v917, 0
    %v1001 = vsel %vm85, %v918, 0
    %v1004 = vsel %vm85, %v919, 0
    %v1007 = vsel %vm85, %v920, 0
    %v1010 = vsel %vm85, %v921, 0
    %v1013 = vsel %vm85, %v922, 0
    %v1016 = vsel %vm85, %v923, 0
    %v1019 = vsel %vm85, %v924, 0
    %v1022 = vsel %vm85, %v925, 0
    %v1025 = vsel %vm85, %v926, 0
    %v1028 = vsel %vm85, %v927, 0
    %v1031 = vsel %vm85, %v928, 0
    %v1034 = vsel %vm85, %v929, 0
    %1036 = vmatprep.subr.mxu0 0.0
    %1037 = vmatpush1.msra.mxu0 0.0
    %1038 = vmatprep.subr.mxu0 0.0
    %1039 = vmatpush1.msra.mxu0 0.0
    %1040 = vmatprep.subr.mxu0 0.0
    %1041 = vmatpush1.msra.mxu0 0.0
    %1042 = vmatprep.subr.mxu0 0.0
    %1043 = vmatpush1.msra.mxu0 0.0
    %1044 = vmatprep.subr.mxu0 0.0
    %1045 = vmatpush1.msra.mxu0 0.0
    %1046 = vmatprep.subr.mxu0 0.0
    %1047 = vmatpush1.msra.mxu0 0.0
    %1048 = vmatprep.subr.mxu0 0.0
    %1049 = vmatpush1.msra.mxu0 0.0
    %1050 = vmatprep.subr.mxu0 0.0
    %1051 = vmatpush1.msra.mxu0 0.0
    %1052 = vmatprep.subr.mxu0 0.0
    %1053 = vmatpush1.msra.mxu0 0.0
    %1054 = vmatprep.subr.mxu0 0.0
    %1055 = vmatpush1.msra.mxu0 0.0
    %1056 = vmatprep.subr.mxu0 0.0
    %1057 = vmatpush1.msra.mxu0 0.0
    %1058 = vmatprep.subr.mxu0 0.0
    %1059 = vmatpush1.msra.mxu0 0.0
    %1060 = vmatprep.subr.mxu0 0.0
    %1061 = vmatpush1.msra.mxu0 0.0
    %1062 = vmatprep.subr.mxu0 0.0
    %1063 = vmatpush1.msra.mxu0 %v932
    %1064 = vmatprep.subr.mxu0 0.0
    %1065 = vmatpush1.msra.mxu0 %v931
    %1066 = vmatprep.subr.mxu0 0.0
    %1067 = vmatpush1.msra.mxu0 %v930
    %1068 = vmatprep.subr.mxu0 0.0
    %1069 = vmatpush2.msra.mxu0 0.0
    %1070 = vmatprep.subr.mxu0 0.0
    %1071 = vmatpush2.msra.mxu0 0.0
    %1072 = vmatprep.subr.mxu0 0.0
    %1073 = vmatpush2.msra.mxu0 0.0
    %1074 = vmatprep.subr.mxu0 0.0
    %1075 = vmatpush2.msra.mxu0 0.0
    %1076 = vmatprep.subr.mxu0 0.0
    %1077 = vmatpush2.msra.mxu0 0.0
    %1078 = vmatprep.subr.mxu0 0.0
    %1079 = vmatpush2.msra.mxu0 0.0
    %1080 = vmatprep.subr.mxu0 0.0
    %1081 = vmatpush2.msra.mxu0 0.0
    %1082 = vmatprep.subr.mxu0 0.0
    %1083 = vmatpush2.msra.mxu0 0.0
    %1084 = vmatprep.subr.mxu0 0.0
    %1085 = vmatpush2.msra.mxu0 0.0
    %1086 = vmatprep.subr.mxu0 0.0
    %1087 = vmatpush2.msra.mxu0 0.0
    %1088 = vmatprep.subr.mxu0 0.0
    %1089 = vmatpush2.msra.mxu0 0.0
    %1090 = vmatprep.subr.mxu0 0.0
    %1091 = vmatpush2.msra.mxu0 0.0
    %1092 = vmatprep.subr.mxu0 0.0
    %1093 = vmatpush2.msra.mxu0 0.0
    %1094 = vmatprep.subr.mxu0 0.0
    %1095 = vmatpush2.msra.mxu0 0.0
    %1096 = vmatprep.subr.mxu0 0.0
    %1097 = vmatpush2.msra.mxu0 0.0
    %1098 = vmatprep.subr.mxu0 0.0
    %1099 = vmatpush2.msra.mxu0 0.0
    %1100 = vmatprep.mubr.f32.mxu0 0.0
    %1101 = vmatmul.mubr.f32.gmra.mxu0 %v941
    %v1102 = vpop.f32.mrf.mxu0
    %v1103 = vadd.f32 %v938, %v1102
    %v1104 = vpop.f32.mrf.mxu0
    %1105 = vmatprep.mubr.f32.mxu0 0.0
    %1106 = vmatmul.mubr.f32.gmra.mxu0 %v944
    %v1107 = vpop.f32.mrf.mxu0
    %v1108 = vadd.f32 %v938, %v1107
    %v1109 = vpop.f32.mrf.mxu0
    %1110 = vmatprep.mubr.f32.mxu0 0.0
    %1111 = vmatmul.mubr.f32.gmra.mxu0 %v947
    %v1112 = vpop.f32.mrf.mxu0
    %v1113 = vadd.f32 %v938, %v1112
    %v1114 = vpop.f32.mrf.mxu0
    %1115 = vmatprep.mubr.f32.mxu0 0.0
    %1116 = vmatmul.mubr.f32.gmra.mxu0 %v950
    %v1117 = vpop.f32.mrf.mxu0
    %v1118 = vadd.f32 %v938, %v1117
    %v1119 = vpop.f32.mrf.mxu0
    %1120 = vmatprep.mubr.f32.mxu0 0.0
    %1121 = vmatmul.mubr.f32.gmra.mxu0 %v953
    %v1122 = vpop.f32.mrf.mxu0
    %v1123 = vadd.f32 %v938, %v1122
    %v1124 = vpop.f32.mrf.mxu0
    %1125 = vmatprep.mubr.f32.mxu0 0.0
    %1126 = vmatmul.mubr.f32.gmra.mxu0 %v956
    %v1127 = vpop.f32.mrf.mxu0
    %v1128 = vadd.f32 %v938, %v1127
    %v1129 = vpop.f32.mrf.mxu0
    %1130 = vmatprep.mubr.f32.mxu0 0.0
    %1131 = vmatmul.mubr.f32.gmra.mxu0 %v959
    %v1132 = vpop.f32.mrf.mxu0
    %v1133 = vadd.f32 %v938, %v1132
    %v1134 = vpop.f32.mrf.mxu0
    %1135 = vmatprep.mubr.f32.mxu0 0.0
    %1136 = vmatmul.mubr.f32.gmra.mxu0 %v962
    %v1137 = vpop.f32.mrf.mxu0
    %v1138 = vadd.f32 %v938, %v1137
    %v1139 = vpop.f32.mrf.mxu0
    %1140 = vmatprep.mubr.f32.mxu0 0.0
    %1141 = vmatmul.mubr.f32.gmra.mxu0 %v965
    %v1142 = vpop.f32.mrf.mxu0
    %v1143 = vadd.f32 %v938, %v1142
    %v1144 = vpop.f32.mrf.mxu0
    %1145 = vmatprep.mubr.f32.mxu0 0.0
    %1146 = vmatmul.mubr.f32.gmra.mxu0 %v968
    %v1147 = vpop.f32.mrf.mxu0
    %v1148 = vadd.f32 %v938, %v1147
    %v1149 = vpop.f32.mrf.mxu0
    %1150 = vmatprep.mubr.f32.mxu0 0.0
    %1151 = vmatmul.mubr.f32.gmra.mxu0 %v971
    %v1152 = vpop.f32.mrf.mxu0
    %v1153 = vadd.f32 %v938, %v1152
    %v1154 = vpop.f32.mrf.mxu0
    %1155 = vmatprep.mubr.f32.mxu0 0.0
    %1156 = vmatmul.mubr.f32.gmra.mxu0 %v974
    %v1157 = vpop.f32.mrf.mxu0
    %v1158 = vadd.f32 %v938, %v1157
    %v1159 = vpop.f32.mrf.mxu0
    %1160 = vmatprep.mubr.f32.mxu0 0.0
    %1161 = vmatmul.mubr.f32.gmra.mxu0 %v977
    %v1162 = vpop.f32.mrf.mxu0
    %v1163 = vadd.f32 %v938, %v1162
    %v1164 = vpop.f32.mrf.mxu0
    %1165 = vmatprep.mubr.f32.mxu0 0.0
    %1166 = vmatmul.mubr.f32.gmra.mxu0 %v980
    %v1167 = vpop.f32.mrf.mxu0
    %v1168 = vadd.f32 %v938, %v1167
    %v1169 = vpop.f32.mrf.mxu0
    %1170 = vmatprep.mubr.f32.mxu0 0.0
    %1171 = vmatmul.mubr.f32.gmra.mxu0 %v983
    %v1172 = vpop.f32.mrf.mxu0
    %v1173 = vadd.f32 %v938, %v1172
    %v1174 = vpop.f32.mrf.mxu0
    %1175 = vmatprep.mubr.f32.mxu0 0.0
    %1176 = vmatmul.mubr.f32.gmra.mxu0 %v986
    %v1177 = vpop.f32.mrf.mxu0
    %v1178 = vadd.f32 %v938, %v1177
    %v1179 = vpop.f32.mrf.mxu0
    %1180 = vmatprep.mubr.f32.mxu0 0.0
    %1181 = vmatmul.mubr.f32.gmra.mxu0 %v989
    %v1182 = vpop.f32.mrf.mxu0
    %v1183 = vadd.f32 %v938, %v1182
    %v1184 = vpop.f32.mrf.mxu0
    %1185 = vmatprep.mubr.f32.mxu0 0.0
    %1186 = vmatmul.mubr.f32.gmra.mxu0 %v992
    %v1187 = vpop.f32.mrf.mxu0
    %v1188 = vadd.f32 %v938, %v1187
    %v1189 = vpop.f32.mrf.mxu0
    %1190 = vmatprep.mubr.f32.mxu0 0.0
    %1191 = vmatmul.mubr.f32.gmra.mxu0 %v995
    %v1192 = vpop.f32.mrf.mxu0
    %v1193 = vadd.f32 %v938, %v1192
    %v1194 = vpop.f32.mrf.mxu0
    %1195 = vmatprep.mubr.f32.mxu0 0.0
    %1196 = vmatmul.mubr.f32.gmra.mxu0 %v998
    %v1197 = vpop.f32.mrf.mxu0
    %v1198 = vadd.f32 %v938, %v1197
    %v1199 = vpop.f32.mrf.mxu0
    %1200 = vmatprep.mubr.f32.mxu0 0.0
    %1201 = vmatmul.mubr.f32.gmra.mxu0 %v1001
    %v1202 = vpop.f32.mrf.mxu0
    %v1203 = vadd.f32 %v938, %v1202
    %v1204 = vpop.f32.mrf.mxu0
    %1205 = vmatprep.mubr.f32.mxu0 0.0
    %1206 = vmatmul.mubr.f32.gmra.mxu0 %v1004
    %v1207 = vpop.f32.mrf.mxu0
    %v1208 = vadd.f32 %v938, %v1207
    %v1209 = vpop.f32.mrf.mxu0
    %1210 = vmatprep.mubr.f32.mxu0 0.0
    %1211 = vmatmul.mubr.f32.gmra.mxu0 %v1007
    %v1212 = vpop.f32.mrf.mxu0
    %v1213 = vadd.f32 %v938, %v1212
    %v1214 = vpop.f32.mrf.mxu0
    %1215 = vmatprep.mubr.f32.mxu0 0.0
    %1216 = vmatmul.mubr.f32.gmra.mxu0 %v1010
    %v1217 = vpop.f32.mrf.mxu0
    %v1218 = vadd.f32 %v938, %v1217
    %v1219 = vpop.f32.mrf.mxu0
    %1220 = vmatprep.mubr.f32.mxu0 0.0
    %1221 = vmatmul.mubr.f32.gmra.mxu0 %v1013
    %v1222 = vpop.f32.mrf.mxu0
    %v1223 = vadd.f32 %v938, %v1222
    %v1224 = vpop.f32.mrf.mxu0
    %1225 = vmatprep.mubr.f32.mxu0 0.0
    %1226 = vmatmul.mubr.f32.gmra.mxu0 %v1016
    %v1227 = vpop.f32.mrf.mxu0
    %v1228 = vadd.f32 %v938, %v1227
    %v1229 = vpop.f32.mrf.mxu0
    %1230 = vmatprep.mubr.f32.mxu0 0.0
    %1231 = vmatmul.mubr.f32.gmra.mxu0 %v1019
    %v1232 = vpop.f32.mrf.mxu0
    %v1233 = vadd.f32 %v938, %v1232
    %v1234 = vpop.f32.mrf.mxu0
    %1235 = vmatprep.mubr.f32.mxu0 0.0
    %1236 = vmatmul.mubr.f32.gmra.mxu0 %v1022
    %v1237 = vpop.f32.mrf.mxu0
    %v1238 = vadd.f32 %v938, %v1237
    %v1239 = vpop.f32.mrf.mxu0
    %1240 = vmatprep.mubr.f32.mxu0 0.0
    %1241 = vmatmul.mubr.f32.gmra.mxu0 %v1025
    %v1242 = vpop.f32.mrf.mxu0
    %v1243 = vadd.f32 %v938, %v1242
    %v1244 = vpop.f32.mrf.mxu0
    %1245 = vmatprep.mubr.f32.mxu0 0.0
    %1246 = vmatmul.mubr.f32.gmra.mxu0 %v1028
    %v1247 = vpop.f32.mrf.mxu0
    %v1248 = vadd.f32 %v938, %v1247
    %v1249 = vpop.f32.mrf.mxu0
    %1250 = vmatprep.mubr.f32.mxu0 0.0
    %1251 = vmatmul.mubr.f32.gmra.mxu0 %v1031
    %v1252 = vpop.f32.mrf.mxu0
    %v1253 = vadd.f32 %v938, %v1252
    %v1254 = vpop.f32.mrf.mxu0
    %1255 = vmatprep.mubr.f32.mxu0 0.0
    %1256 = vmatmul.mubr.f32.gmra.mxu0 %v1034
    %v1257 = vpop.f32.mrf.mxu0
    %v1258 = vadd.f32 %v938, %v1257
    %v1259 = vpop.f32.mrf.mxu0
    %1260 = vdwg.mxu0
    %v1261 = vmax.f32 %v1103, 0.0
    %v1262 = vmax.f32 %v1108, 0.0
    %v1263 = vmax.f32 %v1113, 0.0
    %v1264 = vmax.f32 %v1118, 0.0
    %v1265 = vmax.f32 %v1123, 0.0
    %v1266 = vmax.f32 %v1128, 0.0
    %v1267 = vmax.f32 %v1133, 0.0
    %v1268 = vmax.f32 %v1138, 0.0
    %v1269 = vmax.f32 %v1143, 0.0
    %v1270 = vmax.f32 %v1148, 0.0
    %v1271 = vmax.f32 %v1153, 0.0
    %v1272 = vmax.f32 %v1158, 0.0
    %v1273 = vmax.f32 %v1163, 0.0
    %v1274 = vmax.f32 %v1168, 0.0
    %v1275 = vmax.f32 %v1173, 0.0
    %v1276 = vmax.f32 %v1178, 0.0
    %v1277 = vmax.f32 %v1183, 0.0
    %v1278 = vmax.f32 %v1188, 0.0
    %v1279 = vmax.f32 %v1193, 0.0
    %v1280 = vmax.f32 %v1198, 0.0
    %v1281 = vmax.f32 %v1203, 0.0
    %v1282 = vmax.f32 %v1208, 0.0
    %v1283 = vmax.f32 %v1213, 0.0
    %v1284 = vmax.f32 %v1218, 0.0
    %v1285 = vmax.f32 %v1223, 0.0
    %v1286 = vmax.f32 %v1228, 0.0
    %v1287 = vmax.f32 %v1233, 0.0
    %v1288 = vmax.f32 %v1238, 0.0
    %v1289 = vmax.f32 %v1243, 0.0
    %v1290 = vmax.f32 %v1248, 0.0
    %v1291 = vmax.f32 %v1253, 0.0
    %v1292 = vmax.f32 %v1258, 0.0
    %1293 = vst [vmem:[#allocation2 + $0x200] sm:$0xff] %v1261
    %1294 = vst [vmem:[#allocation2 + $0x208] sm:$0xff] %v1262
    %1295 = vst [vmem:[#allocation2 + $0x210] sm:$0xff] %v1263
    %1296 = vst [vmem:[#allocation2 + $0x218] sm:$0xff] %v1264
    %1297 = vst [vmem:[#allocation2 + $0x220] sm:$0xff] %v1265
    %1298 = vst [vmem:[#allocation2 + $0x228] sm:$0xff] %v1266
    %1299 = vst [vmem:[#allocation2 + $0x230] sm:$0xff] %v1267
    %1300 = vst [vmem:[#allocation2 + $0x238] sm:$0xff] %v1268
    %1301 = vst [vmem:[#allocation2 + $0x240] sm:$0xff] %v1269
    %1302 = vst [vmem:[#allocation2 + $0x248] sm:$0xff] %v1270
    %1303 = vst [vmem:[#allocation2 + $0x250] sm:$0xff] %v1271
    %1304 = vst [vmem:[#allocation2 + $0x258] sm:$0xff] %v1272
    %1305 = vst [vmem:[#allocation2 + $0x260] sm:$0xff] %v1273
    %1306 = vst [vmem:[#allocation2 + $0x268] sm:$0xff] %v1274
    %1307 = vst [vmem:[#allocation2 + $0x270] sm:$0xff] %v1275
    %1308 = vst [vmem:[#allocation2 + $0x278] sm:$0xff] %v1276
    %1309 = vst [vmem:[#allocation2 + $0x280] sm:$0xff] %v1277
    %1310 = vst [vmem:[#allocation2 + $0x288] sm:$0xff] %v1278
    %1311 = vst [vmem:[#allocation2 + $0x290] sm:$0xff] %v1279
    %1312 = vst [vmem:[#allocation2 + $0x298] sm:$0xff] %v1280
    %1313 = vst [vmem:[#allocation2 + $0x2a0] sm:$0xff] %v1281
    %1314 = vst [vmem:[#allocation2 + $0x2a8] sm:$0xff] %v1282
    %1315 = vst [vmem:[#allocation2 + $0x2b0] sm:$0xff] %v1283
    %1316 = vst [vmem:[#allocation2 + $0x2b8] sm:$0xff] %v1284
    %1317 = vst [vmem:[#allocation2 + $0x2c0] sm:$0xff] %v1285
    %1318 = vst [vmem:[#allocation2 + $0x2c8] sm:$0xff] %v1286
    %1319 = vst [vmem:[#allocation2 + $0x2d0] sm:$0xff] %v1287
    %1320 = vst [vmem:[#allocation2 + $0x2d8] sm:$0xff] %v1288
    %1321 = vst [vmem:[#allocation2 + $0x2e0] sm:$0xff] %v1289
    %1322 = vst [vmem:[#allocation2 + $0x2e8] sm:$0xff] %v1290
    %1323 = vst [vmem:[#allocation2 + $0x2f0] sm:$0xff] %v1291
    %1324 = vst [vmem:[#allocation2 + $0x2f8] sm:$0xff] %v1292
    %v1325 = vld [vmem:[%s0 + $0x300] sm:$0xff]
    %v1326 = vld [vmem:[%s0 + $0x308] sm:$0xff]
    %v1327 = vld [vmem:[%s0 + $0x310] sm:$0xff]
    %v1328 = vld [vmem:[%s0 + $0x318] sm:$0xff]
    %v1329 = vld [vmem:[%s0 + $0x320] sm:$0xff]
    %v1330 = vld [vmem:[%s0 + $0x328] sm:$0xff]
    %v1331 = vld [vmem:[%s1] sm:$0xff]
    %v1332 = vld [vmem:[%s1 + $0x8] sm:$0xff]
    %v1333 = vld [vmem:[%s1 + $0x10] sm:$0xff]
    %v1334 = vld [vmem:[%s2] sm:$0x1]
    %v1336 = vlaneseq
    %v1337 = vshrl.u32 %v1336, 7
    %v1338 = vsub.s32 0, %v1337
    %v1339 = vrot.slane %v1334, %v1338
    %v1342 = vsel %vm85, %v1325, 0
    %v1345 = vsel %vm85, %v1326, 0
    %v1348 = vsel %vm85, %v1327, 0
    %v1351 = vsel %vm85, %v1328, 0
    %v1354 = vsel %vm85, %v1329, 0
    %v1357 = vsel %vm85, %v1330, 0
    %1359 = vmatprep.subr.mxu0 0.0
    %1360 = vmatpush1.msra.mxu0 0.0
    %1361 = vmatprep.subr.mxu0 0.0
    %1362 = vmatpush1.msra.mxu0 0.0
    %1363 = vmatprep.subr.mxu0 0.0
    %1364 = vmatpush1.msra.mxu0 0.0
    %1365 = vmatprep.subr.mxu0 0.0
    %1366 = vmatpush1.msra.mxu0 0.0
    %1367 = vmatprep.subr.mxu0 0.0
    %1368 = vmatpush1.msra.mxu0 0.0
    %1369 = vmatprep.subr.mxu0 0.0
    %1370 = vmatpush1.msra.mxu0 0.0
    %1371 = vmatprep.subr.mxu0 0.0
    %1372 = vmatpush1.msra.mxu0 0.0
    %1373 = vmatprep.subr.mxu0 0.0
    %1374 = vmatpush1.msra.mxu0 0.0
    %1375 = vmatprep.subr.mxu0 0.0
    %1376 = vmatpush1.msra.mxu0 0.0
    %1377 = vmatprep.subr.mxu0 0.0
    %1378 = vmatpush1.msra.mxu0 0.0
    %1379 = vmatprep.subr.mxu0 0.0
    %1380 = vmatpush1.msra.mxu0 0.0
    %1381 = vmatprep.subr.mxu0 0.0
    %1382 = vmatpush1.msra.mxu0 0.0
    %1383 = vmatprep.subr.mxu0 0.0
    %1384 = vmatpush1.msra.mxu0 0.0
    %1385 = vmatprep.subr.mxu0 0.0
    %1386 = vmatpush1.msra.mxu0 %v1333
    %1387 = vmatprep.subr.mxu0 0.0
    %1388 = vmatpush1.msra.mxu0 %v1332
    %1389 = vmatprep.subr.mxu0 0.0
    %1390 = vmatpush1.msra.mxu0 %v1331
    %1391 = vmatprep.subr.mxu0 0.0
    %1392 = vmatpush2.msra.mxu0 0.0
    %1393 = vmatprep.subr.mxu0 0.0
    %1394 = vmatpush2.msra.mxu0 0.0
    %1395 = vmatprep.subr.mxu0 0.0
    %1396 = vmatpush2.msra.mxu0 0.0
    %1397 = vmatprep.subr.mxu0 0.0
    %1398 = vmatpush2.msra.mxu0 0.0
    %1399 = vmatprep.subr.mxu0 0.0
    %1400 = vmatpush2.msra.mxu0 0.0
    %1401 = vmatprep.subr.mxu0 0.0
    %1402 = vmatpush2.msra.mxu0 0.0
    %1403 = vmatprep.subr.mxu0 0.0
    %1404 = vmatpush2.msra.mxu0 0.0
    %1405 = vmatprep.subr.mxu0 0.0
    %1406 = vmatpush2.msra.mxu0 0.0
    %1407 = vmatprep.subr.mxu0 0.0
    %1408 = vmatpush2.msra.mxu0 0.0
    %1409 = vmatprep.subr.mxu0 0.0
    %1410 = vmatpush2.msra.mxu0 0.0
    %1411 = vmatprep.subr.mxu0 0.0
    %1412 = vmatpush2.msra.mxu0 0.0
    %1413 = vmatprep.subr.mxu0 0.0
    %1414 = vmatpush2.msra.mxu0 0.0
    %1415 = vmatprep.subr.mxu0 0.0
    %1416 = vmatpush2.msra.mxu0 0.0
    %1417 = vmatprep.subr.mxu0 0.0
    %1418 = vmatpush2.msra.mxu0 0.0
    %1419 = vmatprep.subr.mxu0 0.0
    %1420 = vmatpush2.msra.mxu0 0.0
    %1421 = vmatprep.subr.mxu0 0.0
    %1422 = vmatpush2.msra.mxu0 0.0
    %1423 = vmatprep.mubr.f32.mxu0 0.0
    %1424 = vmatmul.mubr.f32.gmra.mxu0 %v1342
    %v1425 = vpop.f32.mrf.mxu0
    %v1426 = vadd.f32 %v1339, %v1425
    %v1427 = vpop.f32.mrf.mxu0
    %1428 = vmatprep.mubr.f32.mxu0 0.0
    %1429 = vmatmul.mubr.f32.gmra.mxu0 %v1345
    %v1430 = vpop.f32.mrf.mxu0
    %v1431 = vadd.f32 %v1339, %v1430
    %v1432 = vpop.f32.mrf.mxu0
    %1433 = vmatprep.mubr.f32.mxu0 0.0
    %1434 = vmatmul.mubr.f32.gmra.mxu0 %v1348
    %v1435 = vpop.f32.mrf.mxu0
    %v1436 = vadd.f32 %v1339, %v1435
    %v1437 = vpop.f32.mrf.mxu0
    %1438 = vmatprep.mubr.f32.mxu0 0.0
    %1439 = vmatmul.mubr.f32.gmra.mxu0 %v1351
    %v1440 = vpop.f32.mrf.mxu0
    %v1441 = vadd.f32 %v1339, %v1440
    %v1442 = vpop.f32.mrf.mxu0
    %1443 = vmatprep.mubr.f32.mxu0 0.0
    %1444 = vmatmul.mubr.f32.gmra.mxu0 %v1354
    %v1445 = vpop.f32.mrf.mxu0
    %v1446 = vadd.f32 %v1339, %v1445
    %v1447 = vpop.f32.mrf.mxu0
    %1448 = vmatprep.mubr.f32.mxu0 0.0
    %1449 = vmatmul.mubr.f32.gmra.mxu0 %v1357
    %v1450 = vpop.f32.mrf.mxu0
    %v1451 = vadd.f32 %v1339, %v1450
    %v1452 = vpop.f32.mrf.mxu0
    %1453 = vdwg.mxu0
    %v1454 = vmax.f32 %v1426, 0.0
    %v1455 = vmax.f32 %v1431, 0.0
    %v1456 = vmax.f32 %v1436, 0.0
    %v1457 = vmax.f32 %v1441, 0.0
    %v1458 = vmax.f32 %v1446, 0.0
    %v1459 = vmax.f32 %v1451, 0.0
    %1460 = vst [vmem:[#allocation2 + $0x300] sm:$0xff] %v1454
    %1461 = vst [vmem:[#allocation2 + $0x308] sm:$0xff] %v1455
    %1462 = vst [vmem:[#allocation2 + $0x310] sm:$0xff] %v1456
    %1463 = vst [vmem:[#allocation2 + $0x318] sm:$0xff] %v1457
    %1464 = vst [vmem:[#allocation2 + $0x320] sm:$0xff] %v1458
    %1465 = vst [vmem:[#allocation2 + $0x328] sm:$0xff] %v1459
    %v1466 = vlaneseq
    %v1467 = vand.u32 %v1466, 127
    %v1468 = vld [vmem:[#allocation2] sm:$0xff]
    %v1469 = vld [vmem:[#allocation2 + $0x8] sm:$0xff]
    %v1470 = vld [vmem:[#allocation2 + $0x10] sm:$0xff]
    %v1471 = vld [vmem:[#allocation2 + $0x18] sm:$0xff]
    %v1472 = vld [vmem:[#allocation2 + $0x20] sm:$0xff]
    %v1473 = vld [vmem:[#allocation2 + $0x28] sm:$0xff]
    %v1474 = vld [vmem:[#allocation2 + $0x30] sm:$0xff]
    %v1475 = vld [vmem:[#allocation2 + $0x38] sm:$0xff]
    %v1476 = vld [vmem:[#allocation2 + $0x40] sm:$0xff]
    %v1477 = vld [vmem:[#allocation2 + $0x48] sm:$0xff]
    %v1478 = vld [vmem:[#allocation2 + $0x50] sm:$0xff]
    %v1479 = vld [vmem:[#allocation2 + $0x58] sm:$0xff]
    %v1480 = vld [vmem:[#allocation2 + $0x60] sm:$0xff]
    %v1481 = vld [vmem:[#allocation2 + $0x68] sm:$0xff]
    %v1482 = vld [vmem:[#allocation2 + $0x70] sm:$0xff]
    %v1483 = vld [vmem:[#allocation2 + $0x78] sm:$0xff]
    %v1484 = vld [vmem:[#allocation2 + $0x1] sm:$0xff]
    %v1485 = vld [vmem:[#allocation2 + $0x9] sm:$0xff]
    %v1486 = vld [vmem:[#allocation2 + $0x11] sm:$0xff]
    %v1487 = vld [vmem:[#allocation2 + $0x19] sm:$0xff]
    %v1488 = vld [vmem:[#allocation2 + $0x21] sm:$0xff]
    %v1489 = vld [vmem:[#allocation2 + $0x29] sm:$0xff]
    %v1490 = vld [vmem:[#allocation2 + $0x31] sm:$0xff]
    %v1491 = vld [vmem:[#allocation2 + $0x39] sm:$0xff]
    %v1492 = vld [vmem:[#allocation2 + $0x41] sm:$0xff]
    %v1493 = vld [vmem:[#allocation2 + $0x49] sm:$0xff]
    %v1494 = vld [vmem:[#allocation2 + $0x51] sm:$0xff]
    %v1495 = vld [vmem:[#allocation2 + $0x59] sm:$0xff]
    %v1496 = vld [vmem:[#allocation2 + $0x61] sm:$0xff]
    %v1497 = vld [vmem:[#allocation2 + $0x69] sm:$0xff]
    %v1498 = vld [vmem:[#allocation2 + $0x71] sm:$0xff]
    %v1499 = vld [vmem:[#allocation2 + $0x79] sm:$0xff]
    %v1500 = vmax.f32 %v1468, %v1484
    %v1501 = vmax.f32 %v1469, %v1485
    %v1502 = vmax.f32 %v1470, %v1486
    %v1503 = vmax.f32 %v1471, %v1487
    %v1504 = vmax.f32 %v1472, %v1488
    %v1505 = vmax.f32 %v1473, %v1489
    %v1506 = vmax.f32 %v1474, %v1490
    %v1507 = vmax.f32 %v1475, %v1491
    %v1508 = vmax.f32 %v1476, %v1492
    %v1509 = vmax.f32 %v1477, %v1493
    %v1510 = vmax.f32 %v1478, %v1494
    %v1511 = vmax.f32 %v1479, %v1495
    %v1512 = vmax.f32 %v1480, %v1496
    %v1513 = vmax.f32 %v1481, %v1497
    %v1514 = vmax.f32 %v1482, %v1498
    %v1515 = vmax.f32 %v1483, %v1499
    %v1516 = vld [vmem:[#allocation2 + $0x2] sm:$0xff]
    %v1517 = vld [vmem:[#allocation2 + $0xa] sm:$0xff]
    %v1518 = vld [vmem:[#allocation2 + $0x12] sm:$0xff]
    %v1519 = vld [vmem:[#allocation2 + $0x1a] sm:$0xff]
    %v1520 = vld [vmem:[#allocation2 + $0x22] sm:$0xff]
    %v1521 = vld [vmem:[#allocation2 + $0x2a] sm:$0xff]
    %v1522 = vld [vmem:[#allocation2 + $0x32] sm:$0xff]
    %v1523 = vld [vmem:[#allocation2 + $0x3a] sm:$0xff]
    %v1524 = vld [vmem:[#allocation2 + $0x42] sm:$0xff]
    %v1525 = vld [vmem:[#allocation2 + $0x4a] sm:$0xff]
    %v1526 = vld [vmem:[#allocation2 + $0x52] sm:$0xff]
    %v1527 = vld [vmem:[#allocation2 + $0x5a] sm:$0xff]
    %v1528 = vld [vmem:[#allocation2 + $0x62] sm:$0xff]
    %v1529 = vld [vmem:[#allocation2 + $0x6a] sm:$0xff]
    %v1530 = vld [vmem:[#allocation2 + $0x72] sm:$0xff]
    %v1531 = vld [vmem:[#allocation2 + $0x7a] sm:$0xff]
    %v1532 = vmax.f32 %v1500, %v1516
    %v1533 = vmax.f32 %v1501, %v1517
    %v1534 = vmax.f32 %v1502, %v1518
    %v1535 = vmax.f32 %v1503, %v1519
    %v1536 = vmax.f32 %v1504, %v1520
    %v1537 = vmax.f32 %v1505, %v1521
    %v1538 = vmax.f32 %v1506, %v1522
    %v1539 = vmax.f32 %v1507, %v1523
    %v1540 = vmax.f32 %v1508, %v1524
    %v1541 = vmax.f32 %v1509, %v1525
    %v1542 = vmax.f32 %v1510, %v1526
    %v1543 = vmax.f32 %v1511, %v1527
    %v1544 = vmax.f32 %v1512, %v1528
    %v1545 = vmax.f32 %v1513, %v1529
    %v1546 = vmax.f32 %v1514, %v1530
    %v1547 = vmax.f32 %v1515, %v1531
    %1548 = vst [vmem:[#allocation3] sm:$0xff] %v1532
    %1549 = vst [vmem:[#allocation3 + $0x8] sm:$0xff] %v1533
    %1550 = vst [vmem:[#allocation3 + $0x10] sm:$0xff] %v1534
    %1551 = vst [vmem:[#allocation3 + $0x18] sm:$0xff] %v1535
    %1552 = vst [vmem:[#allocation3 + $0x20] sm:$0xff] %v1536
    %1553 = vst [vmem:[#allocation3 + $0x28] sm:$0xff] %v1537
    %1554 = vst [vmem:[#allocation3 + $0x30] sm:$0xff] %v1538
    %1555 = vst [vmem:[#allocation3 + $0x38] sm:$0xff] %v1539
    %1556 = vst [vmem:[#allocation3 + $0x40] sm:$0xff] %v1540
    %1557 = vst [vmem:[#allocation3 + $0x48] sm:$0xff] %v1541
    %1558 = vst [vmem:[#allocation3 + $0x50] sm:$0xff] %v1542
    %1559 = vst [vmem:[#allocation3 + $0x58] sm:$0xff] %v1543
    %1560 = vst [vmem:[#allocation3 + $0x60] sm:$0xff] %v1544
    %1561 = vst [vmem:[#allocation3 + $0x68] sm:$0xff] %v1545
    %1562 = vst [vmem:[#allocation3 + $0x70] sm:$0xff] %v1546
    %1563 = vst [vmem:[#allocation3 + $0x78] sm:$0xff] %v1547
    %v1564 = vld [vmem:[#allocation2 + $0x80] sm:$0xff]
    %v1565 = vld [vmem:[#allocation2 + $0x88] sm:$0xff]
    %v1566 = vld [vmem:[#allocation2 + $0x90] sm:$0xff]
    %v1567 = vld [vmem:[#allocation2 + $0x98] sm:$0xff]
    %v1568 = vld [vmem:[#allocation2 + $0xa0] sm:$0xff]
    %v1569 = vld [vmem:[#allocation2 + $0xa8] sm:$0xff]
    %v1570 = vld [vmem:[#allocation2 + $0xb0] sm:$0xff]
    %v1571 = vld [vmem:[#allocation2 + $0xb8] sm:$0xff]
    %v1572 = vld [vmem:[#allocation2 + $0xc0] sm:$0xff]
    %v1573 = vld [vmem:[#allocation2 + $0xc8] sm:$0xff]
    %v1574 = vld [vmem:[#allocation2 + $0xd0] sm:$0xff]
    %v1575 = vld [vmem:[#allocation2 + $0xd8] sm:$0xff]
    %v1576 = vld [vmem:[#allocation2 + $0xe0] sm:$0xff]
    %v1577 = vld [vmem:[#allocation2 + $0xe8] sm:$0xff]
    %v1578 = vld [vmem:[#allocation2 + $0xf0] sm:$0xff]
    %v1579 = vld [vmem:[#allocation2 + $0xf8] sm:$0xff]
    %v1580 = vld [vmem:[#allocation2 + $0x81] sm:$0xff]
    %v1581 = vld [vmem:[#allocation2 + $0x89] sm:$0xff]
    %v1582 = vld [vmem:[#allocation2 + $0x91] sm:$0xff]
    %v1583 = vld [vmem:[#allocation2 + $0x99] sm:$0xff]
    %v1584 = vld [vmem:[#allocation2 + $0xa1] sm:$0xff]
    %v1585 = vld [vmem:[#allocation2 + $0xa9] sm:$0xff]
    %v1586 = vld [vmem:[#allocation2 + $0xb1] sm:$0xff]
    %v1587 = vld [vmem:[#allocation2 + $0xb9] sm:$0xff]
    %v1588 = vld [vmem:[#allocation2 + $0xc1] sm:$0xff]
    %v1589 = vld [vmem:[#allocation2 + $0xc9] sm:$0xff]
    %v1590 = vld [vmem:[#allocation2 + $0xd1] sm:$0xff]
    %v1591 = vld [vmem:[#allocation2 + $0xd9] sm:$0xff]
    %v1592 = vld [vmem:[#allocation2 + $0xe1] sm:$0xff]
    %v1593 = vld [vmem:[#allocation2 + $0xe9] sm:$0xff]
    %v1594 = vld [vmem:[#allocation2 + $0xf1] sm:$0xff]
    %v1595 = vld [vmem:[#allocation2 + $0xf9] sm:$0xff]
    %v1596 = vmax.f32 %v1564, %v1580
    %v1597 = vmax.f32 %v1565, %v1581
    %v1598 = vmax.f32 %v1566, %v1582
    %v1599 = vmax.f32 %v1567, %v1583
    %v1600 = vmax.f32 %v1568, %v1584
    %v1601 = vmax.f32 %v1569, %v1585
    %v1602 = vmax.f32 %v1570, %v1586
    %v1603 = vmax.f32 %v1571, %v1587
    %v1604 = vmax.f32 %v1572, %v1588
    %v1605 = vmax.f32 %v1573, %v1589
    %v1606 = vmax.f32 %v1574, %v1590
    %v1607 = vmax.f32 %v1575, %v1591
    %v1608 = vmax.f32 %v1576, %v1592
    %v1609 = vmax.f32 %v1577, %v1593
    %v1610 = vmax.f32 %v1578, %v1594
    %v1611 = vmax.f32 %v1579, %v1595
    %v1612 = vld [vmem:[#allocation2 + $0x82] sm:$0xff]
    %v1613 = vld [vmem:[#allocation2 + $0x8a] sm:$0xff]
    %v1614 = vld [vmem:[#allocation2 + $0x92] sm:$0xff]
    %v1615 = vld [vmem:[#allocation2 + $0x9a] sm:$0xff]
    %v1616 = vld [vmem:[#allocation2 + $0xa2] sm:$0xff]
    %v1617 = vld [vmem:[#allocation2 + $0xaa] sm:$0xff]
    %v1618 = vld [vmem:[#allocation2 + $0xb2] sm:$0xff]
    %v1619 = vld [vmem:[#allocation2 + $0xba] sm:$0xff]
    %v1620 = vld [vmem:[#allocation2 + $0xc2] sm:$0xff]
    %v1621 = vld [vmem:[#allocation2 + $0xca] sm:$0xff]
    %v1622 = vld [vmem:[#allocation2 + $0xd2] sm:$0xff]
    %v1623 = vld [vmem:[#allocation2 + $0xda] sm:$0xff]
    %v1624 = vld [vmem:[#allocation2 + $0xe2] sm:$0xff]
    %v1625 = vld [vmem:[#allocation2 + $0xea] sm:$0xff]
    %v1626 = vld [vmem:[#allocation2 + $0xf2] sm:$0xff]
    %v1627 = vld [vmem:[#allocation2 + $0xfa] sm:$0xff]
    %v1628 = vmax.f32 %v1596, %v1612
    %v1629 = vmax.f32 %v1597, %v1613
    %v1630 = vmax.f32 %v1598, %v1614
    %v1631 = vmax.f32 %v1599, %v1615
    %v1632 = vmax.f32 %v1600, %v1616
    %v1633 = vmax.f32 %v1601, %v1617
    %v1634 = vmax.f32 %v1602, %v1618
    %v1635 = vmax.f32 %v1603, %v1619
    %v1636 = vmax.f32 %v1604, %v1620
    %v1637 = vmax.f32 %v1605, %v1621
    %v1638 = vmax.f32 %v1606, %v1622
    %v1639 = vmax.f32 %v1607, %v1623
    %v1640 = vmax.f32 %v1608, %v1624
    %v1641 = vmax.f32 %v1609, %v1625
    %v1642 = vmax.f32 %v1610, %v1626
    %v1643 = vmax.f32 %v1611, %v1627
    %1644 = vst [vmem:[#allocation3 + $0x80] sm:$0xff] %v1628
    %1645 = vst [vmem:[#allocation3 + $0x88] sm:$0xff] %v1629
    %1646 = vst [vmem:[#allocation3 + $0x90] sm:$0xff] %v1630
    %1647 = vst [vmem:[#allocation3 + $0x98] sm:$0xff] %v1631
    %1648 = vst [vmem:[#allocation3 + $0xa0] sm:$0xff] %v1632
    %1649 = vst [vmem:[#allocation3 + $0xa8] sm:$0xff] %v1633
    %1650 = vst [vmem:[#allocation3 + $0xb0] sm:$0xff] %v1634
    %1651 = vst [vmem:[#allocation3 + $0xb8] sm:$0xff] %v1635
    %1652 = vst [vmem:[#allocation3 + $0xc0] sm:$0xff] %v1636
    %1653 = vst [vmem:[#allocation3 + $0xc8] sm:$0xff] %v1637
    %1654 = vst [vmem:[#allocation3 + $0xd0] sm:$0xff] %v1638
    %1655 = vst [vmem:[#allocation3 + $0xd8] sm:$0xff] %v1639
    %1656 = vst [vmem:[#allocation3 + $0xe0] sm:$0xff] %v1640
    %1657 = vst [vmem:[#allocation3 + $0xe8] sm:$0xff] %v1641
    %1658 = vst [vmem:[#allocation3 + $0xf0] sm:$0xff] %v1642
    %1659 = vst [vmem:[#allocation3 + $0xf8] sm:$0xff] %v1643
    %v1660 = vld [vmem:[#allocation2 + $0x100] sm:$0xff]
    %v1661 = vld [vmem:[#allocation2 + $0x108] sm:$0xff]
    %v1662 = vld [vmem:[#allocation2 + $0x110] sm:$0xff]
    %v1663 = vld [vmem:[#allocation2 + $0x118] sm:$0xff]
    %v1664 = vld [vmem:[#allocation2 + $0x120] sm:$0xff]
    %v1665 = vld [vmem:[#allocation2 + $0x128] sm:$0x3]
    %v1666 = vld [vmem:[#allocation2 + $0x101] sm:$0xff]
    %v1667 = vld [vmem:[#allocation2 + $0x109] sm:$0xff]
    %v1668 = vld [vmem:[#allocation2 + $0x111] sm:$0xff]
    %v1669 = vld [vmem:[#allocation2 + $0x119] sm:$0xff]
    %v1670 = vld [vmem:[#allocation2 + $0x121] sm:$0xff]
    %v1671 = vld [vmem:[#allocation2 + $0x129] sm:$0x3]
    %v1672 = vmax.f32 %v1660, %v1666
    %v1673 = vmax.f32 %v1661, %v1667
    %v1674 = vmax.f32 %v1662, %v1668
    %v1675 = vmax.f32 %v1663, %v1669
    %v1676 = vmax.f32 %v1664, %v1670
    %v1677 = vmax.f32 %v1665, %v1671
    %v1678 = vld [vmem:[#allocation2 + $0x102] sm:$0xff]
    %v1679 = vld [vmem:[#allocation2 + $0x10a] sm:$0xff]
    %v1680 = vld [vmem:[#allocation2 + $0x112] sm:$0xff]
    %v1681 = vld [vmem:[#allocation2 + $0x11a] sm:$0xff]
    %v1682 = vld [vmem:[#allocation2 + $0x122] sm:$0xff]
    %v1683 = vld [vmem:[#allocation2 + $0x12a] sm:$0x3]
    %v1684 = vmax.f32 %v1672, %v1678
    %v1685 = vmax.f32 %v1673, %v1679
    %v1686 = vmax.f32 %v1674, %v1680
    %v1687 = vmax.f32 %v1675, %v1681
    %v1688 = vmax.f32 %v1676, %v1682
    %v1689 = vmax.f32 %v1677, %v1683
    %1690 = vst [vmem:[#allocation3 + $0x100] sm:$0xff] %v1684
    %1691 = vst [vmem:[#allocation3 + $0x108] sm:$0xff] %v1685
    %1692 = vst [vmem:[#allocation3 + $0x110] sm:$0xff] %v1686
    %1693 = vst [vmem:[#allocation3 + $0x118] sm:$0xff] %v1687
    %1694 = vst [vmem:[#allocation3 + $0x120] sm:$0xff] %v1688
    %1695 = vst [vmem:[#allocation3 + $0x128] sm:$0x3] %v1689
    %1696 = vst [vmem:[#allocation4] sm:$0x1] 0.0
    %v1697 = vld [vmem:[#allocation3] ss:$2 sm:$0xff]
    %s1698 = scalar_lea.vmem [#allocation3], 16
    %v1699 = vld [vmem:[%s1698] ss:$2 sm:$0xff]
    %s1700 = scalar_lea.vmem [#allocation3], 32
    %v1701 = vld [vmem:[%s1700] ss:$2 sm:$0xff]
    %s1702 = scalar_lea.vmem [#allocation3], 48
    %v1703 = vld [vmem:[%s1702] ss:$2 sm:$0xff]
    %s1704 = scalar_lea.vmem [#allocation3], 64
    %v1705 = vld [vmem:[%s1704] ss:$2 sm:$0xff]
    %s1706 = scalar_lea.vmem [#allocation3], 80
    %v1707 = vld [vmem:[%s1706] ss:$2 sm:$0xff]
    %s1708 = scalar_lea.vmem [#allocation3], 96
    %v1709 = vld [vmem:[%s1708] ss:$2 sm:$0xff]
    %s1710 = scalar_lea.vmem [#allocation3], 112
    %v1711 = vld [vmem:[%s1710] ss:$2 sm:$0xff]
    %s1712 = scalar_lea.vmem [#allocation3], 128
    %v1713 = vld [vmem:[%s1712] ss:$2 sm:$0xff]
    %s1714 = scalar_lea.vmem [#allocation3], 144
    %v1715 = vld [vmem:[%s1714] ss:$2 sm:$0xff]
    %s1716 = scalar_lea.vmem [#allocation3], 160
    %v1717 = vld [vmem:[%s1716] ss:$2 sm:$0xff]
    %s1718 = scalar_lea.vmem [#allocation3], 176
    %v1719 = vld [vmem:[%s1718] ss:$2 sm:$0xff]
    %s1720 = scalar_lea.vmem [#allocation3], 192
    %v1721 = vld [vmem:[%s1720] ss:$2 sm:$0xff]
    %s1722 = scalar_lea.vmem [#allocation3], 208
    %v1723 = vld [vmem:[%s1722] ss:$2 sm:$0xff]
    %s1724 = scalar_lea.vmem [#allocation3], 224
    %v1725 = vld [vmem:[%s1724] ss:$2 sm:$0xff]
    %s1726 = scalar_lea.vmem [#allocation3], 240
    %v1727 = vld [vmem:[%s1726] ss:$2 sm:$0xff]
    %s1728 = scalar_lea.vmem [#allocation3], 256
    %v1729 = vld [vmem:[%s1728] ss:$2 sm:$0xff]
    %s1730 = scalar_lea.vmem [#allocation3], 272
    %v1731 = vld [vmem:[%s1730] ss:$2 sm:$0xff]
    %s1732 = scalar_lea.vmem [#allocation3], 288
    %v1733 = vld [vmem:[%s1732] ss:$2 sm:$0x1f]
    %1734 = vst [vmem:[#allocation4 + $0x1] sm:$0xff] %v1697
    %1735 = vst [vmem:[#allocation4 + $0x9] sm:$0xff] %v1699
    %1736 = vst [vmem:[#allocation4 + $0x11] sm:$0xff] %v1701
    %1737 = vst [vmem:[#allocation4 + $0x19] sm:$0xff] %v1703
    %1738 = vst [vmem:[#allocation4 + $0x21] sm:$0xff] %v1705
    %1739 = vst [vmem:[#allocation4 + $0x29] sm:$0xff] %v1707
    %1740 = vst [vmem:[#allocation4 + $0x31] sm:$0xff] %v1709
    %1741 = vst [vmem:[#allocation4 + $0x39] sm:$0xff] %v1711
    %1742 = vst [vmem:[#allocation4 + $0x41] sm:$0xff] %v1713
    %1743 = vst [vmem:[#allocation4 + $0x49] sm:$0xff] %v1715
    %1744 = vst [vmem:[#allocation4 + $0x51] sm:$0xff] %v1717
    %1745 = vst [vmem:[#allocation4 + $0x59] sm:$0xff] %v1719
    %1746 = vst [vmem:[#allocation4 + $0x61] sm:$0xff] %v1721
    %1747 = vst [vmem:[#allocation4 + $0x69] sm:$0xff] %v1723
    %1748 = vst [vmem:[#allocation4 + $0x71] sm:$0xff] %v1725
    %1749 = vst [vmem:[#allocation4 + $0x79] sm:$0xff] %v1727
    %1750 = vst [vmem:[#allocation4 + $0x81] sm:$0xff] %v1729
    %1751 = vst [vmem:[#allocation4 + $0x89] sm:$0xff] %v1731
    %1752 = vst [vmem:[#allocation4 + $0x91] sm:$0x1f] %v1733
    %1753 = vst [vmem:[#allocation4 + $0x96] sm:$0x1] 0.0
    %v1754 = vld [vmem:[#allocation4] sm:$0xff]
    %v1755 = vld [vmem:[#allocation4 + $0x8] sm:$0xff]
    %v1756 = vld [vmem:[#allocation4 + $0x10] sm:$0xff]
    %v1757 = vld [vmem:[#allocation4 + $0x18] sm:$0xff]
    %v1758 = vld [vmem:[#allocation4 + $0x20] sm:$0xff]
    %v1759 = vld [vmem:[#allocation4 + $0x28] sm:$0xff]
    %v1760 = vld [vmem:[#allocation4 + $0x30] sm:$0xff]
    %v1761 = vld [vmem:[#allocation4 + $0x38] sm:$0xff]
    %v1762 = vld [vmem:[#allocation4 + $0x40] sm:$0xff]
    %v1763 = vld [vmem:[#allocation4 + $0x48] sm:$0xff]
    %v1764 = vld [vmem:[#allocation4 + $0x50] sm:$0xff]
    %v1765 = vld [vmem:[#allocation4 + $0x58] sm:$0xff]
    %v1766 = vld [vmem:[#allocation4 + $0x60] sm:$0xff]
    %v1767 = vld [vmem:[#allocation4 + $0x68] sm:$0xff]
    %v1768 = vld [vmem:[#allocation4 + $0x70] sm:$0xff]
    %v1769 = vld [vmem:[#allocation4 + $0x78] sm:$0xff]
    %v1770 = vld [vmem:[#allocation4 + $0x80] sm:$0xff]
    %v1771 = vld [vmem:[#allocation4 + $0x88] sm:$0xff]
    %v1772 = vld [vmem:[#allocation4 + $0x90] sm:$0x3f]
    %v1773 = vld [vmem:[%s3] sm:$0xff]
    %v1774 = vld [vmem:[%s3 + $0x8] sm:$0xff]
    %v1775 = vld [vmem:[%s3 + $0x10] sm:$0xff]
    %v1776 = vld [vmem:[%s3 + $0x18] sm:$0xff]
    %v1777 = vld [vmem:[%s3 + $0x20] sm:$0xff]
    %v1778 = vld [vmem:[%s3 + $0x28] sm:$0xff]
    %v1779 = vld [vmem:[%s3 + $0x30] sm:$0xff]
    %v1780 = vld [vmem:[%s3 + $0x38] sm:$0xff]
    %v1781 = vld [vmem:[%s3 + $0x40] sm:$0xff]
    %v1782 = vld [vmem:[%s3 + $0x48] sm:$0xff]
    %v1783 = vld [vmem:[%s3 + $0x50] sm:$0xff]
    %v1784 = vld [vmem:[%s3 + $0x58] sm:$0xff]
    %v1785 = vld [vmem:[%s3 + $0x60] sm:$0xff]
    %v1786 = vld [vmem:[%s3 + $0x68] sm:$0xff]
    %v1787 = vld [vmem:[%s3 + $0x70] sm:$0xff]
    %v1788 = vld [vmem:[%s3 + $0x78] sm:$0xff]
    %v1789 = vld [vmem:[#allocation4 + $0x1] sm:$0xff]
    %v1790 = vld [vmem:[#allocation4 + $0x9] sm:$0xff]
    %v1791 = vld [vmem:[#allocation4 + $0x11] sm:$0xff]
    %v1792 = vld [vmem:[#allocation4 + $0x19] sm:$0xff]
    %v1793 = vld [vmem:[#allocation4 + $0x21] sm:$0xff]
    %v1794 = vld [vmem:[#allocation4 + $0x29] sm:$0xff]
    %v1795 = vld [vmem:[#allocation4 + $0x31] sm:$0xff]
    %v1796 = vld [vmem:[#allocation4 + $0x39] sm:$0xff]
    %v1797 = vld [vmem:[#allocation4 + $0x41] sm:$0xff]
    %v1798 = vld [vmem:[#allocation4 + $0x49] sm:$0xff]
    %v1799 = vld [vmem:[#allocation4 + $0x51] sm:$0xff]
    %v1800 = vld [vmem:[#allocation4 + $0x59] sm:$0xff]
    %v1801 = vld [vmem:[#allocation4 + $0x61] sm:$0xff]
    %v1802 = vld [vmem:[#allocation4 + $0x69] sm:$0xff]
    %v1803 = vld [vmem:[#allocation4 + $0x71] sm:$0xff]
    %v1804 = vld [vmem:[#allocation4 + $0x79] sm:$0xff]
    %v1805 = vld [vmem:[#allocation4 + $0x81] sm:$0xff]
    %v1806 = vld [vmem:[#allocation4 + $0x89] sm:$0xff]
    %v1807 = vld [vmem:[#allocation4 + $0x91] sm:$0x3f]
    %s1808 = scalar_lea.vmem %s3, 128
    %v1809 = vld [vmem:[%s1808] sm:$0xff]
    %v1810 = vld [vmem:[%s1808 + $0x8] sm:$0xff]
    %v1811 = vld [vmem:[%s1808 + $0x10] sm:$0xff]
    %v1812 = vld [vmem:[%s1808 + $0x18] sm:$0xff]
    %v1813 = vld [vmem:[%s1808 + $0x20] sm:$0xff]
    %v1814 = vld [vmem:[%s1808 + $0x28] sm:$0xff]
    %v1815 = vld [vmem:[%s1808 + $0x30] sm:$0xff]
    %v1816 = vld [vmem:[%s1808 + $0x38] sm:$0xff]
    %v1817 = vld [vmem:[%s1808 + $0x40] sm:$0xff]
    %v1818 = vld [vmem:[%s1808 + $0x48] sm:$0xff]
    %v1819 = vld [vmem:[%s1808 + $0x50] sm:$0xff]
    %v1820 = vld [vmem:[%s1808 + $0x58] sm:$0xff]
    %v1821 = vld [vmem:[%s1808 + $0x60] sm:$0xff]
    %v1822 = vld [vmem:[%s1808 + $0x68] sm:$0xff]
    %v1823 = vld [vmem:[%s1808 + $0x70] sm:$0xff]
    %v1824 = vld [vmem:[%s1808 + $0x78] sm:$0xff]
    %1825 = vmatprep.subr.mxu0 0.0
    %1826 = vmatpush1.msra.mxu0 %v1824
    %1827 = vmatprep.subr.mxu0 0.0
    %1828 = vmatpush1.msra.mxu0 %v1823
    %1829 = vmatprep.subr.mxu0 0.0
    %1830 = vmatpush1.msra.mxu0 %v1822
    %1831 = vmatprep.subr.mxu0 0.0
    %1832 = vmatpush1.msra.mxu0 %v1821
    %1833 = vmatprep.subr.mxu0 0.0
    %1834 = vmatpush1.msra.mxu0 %v1820
    %1835 = vmatprep.subr.mxu0 0.0
    %1836 = vmatpush1.msra.mxu0 %v1819
    %1837 = vmatprep.subr.mxu0 0.0
    %1838 = vmatpush1.msra.mxu0 %v1818
    %1839 = vmatprep.subr.mxu0 0.0
    %1840 = vmatpush1.msra.mxu0 %v1817
    %1841 = vmatprep.subr.mxu0 0.0
    %1842 = vmatpush1.msra.mxu0 %v1816
    %1843 = vmatprep.subr.mxu0 0.0
    %1844 = vmatpush1.msra.mxu0 %v1815
    %1845 = vmatprep.subr.mxu0 0.0
    %1846 = vmatpush1.msra.mxu0 %v1814
    %1847 = vmatprep.subr.mxu0 0.0
    %1848 = vmatpush1.msra.mxu0 %v1813
    %1849 = vmatprep.subr.mxu0 0.0
    %1850 = vmatpush1.msra.mxu0 %v1812
    %1851 = vmatprep.subr.mxu0 0.0
    %1852 = vmatpush1.msra.mxu0 %v1811
    %1853 = vmatprep.subr.mxu0 0.0
    %1854 = vmatpush1.msra.mxu0 %v1810
    %1855 = vmatprep.subr.mxu0 0.0
    %1856 = vmatpush1.msra.mxu0 %v1809
    %1857 = vmatprep.subr.mxu0 0.0
    %1858 = vmatpush2.msra.mxu0 0.0
    %1859 = vmatprep.subr.mxu0 0.0
    %1860 = vmatpush2.msra.mxu0 0.0
    %1861 = vmatprep.subr.mxu0 0.0
    %1862 = vmatpush2.msra.mxu0 0.0
    %1863 = vmatprep.subr.mxu0 0.0
    %1864 = vmatpush2.msra.mxu0 0.0
    %1865 = vmatprep.subr.mxu0 0.0
    %1866 = vmatpush2.msra.mxu0 0.0
    %1867 = vmatprep.subr.mxu0 0.0
    %1868 = vmatpush2.msra.mxu0 0.0
    %1869 = vmatprep.subr.mxu0 0.0
    %1870 = vmatpush2.msra.mxu0 0.0
    %1871 = vmatprep.subr.mxu0 0.0
    %1872 = vmatpush2.msra.mxu0 0.0
    %1873 = vmatprep.subr.mxu0 0.0
    %1874 = vmatpush2.msra.mxu0 0.0
    %1875 = vmatprep.subr.mxu0 0.0
    %1876 = vmatpush2.msra.mxu0 0.0
    %1877 = vmatprep.subr.mxu0 0.0
    %1878 = vmatpush2.msra.mxu0 0.0
    %1879 = vmatprep.subr.mxu0 0.0
    %1880 = vmatpush2.msra.mxu0 0.0
    %1881 = vmatprep.subr.mxu0 0.0
    %1882 = vmatpush2.msra.mxu0 0.0
    %1883 = vmatprep.subr.mxu0 0.0
    %1884 = vmatpush2.msra.mxu0 0.0
    %1885 = vmatprep.subr.mxu0 0.0
    %1886 = vmatpush2.msra.mxu0 0.0
    %1887 = vmatprep.subr.mxu0 0.0
    %1888 = vmatpush2.msra.mxu0 0.0
    %1889 = vmatprep.mubr.f32.mxu0 0.0
    %1890 = vmatmul.mubr.f32.gmra.mxu0 %v1789
    %v1891 = vpop.f32.mrf.mxu0
    %v1892 = vadd.f32 0.0, %v1891
    %v1893 = vpop.f32.mrf.mxu0
    %1894 = vmatprep.mubr.f32.mxu0 0.0
    %1895 = vmatmul.mubr.f32.gmra.mxu0 %v1790
    %v1896 = vpop.f32.mrf.mxu0
    %v1897 = vadd.f32 0.0, %v1896
    %v1898 = vpop.f32.mrf.mxu0
    %1899 = vmatprep.mubr.f32.mxu0 0.0
    %1900 = vmatmul.mubr.f32.gmra.mxu0 %v1791
    %v1901 = vpop.f32.mrf.mxu0
    %v1902 = vadd.f32 0.0, %v1901
    %v1903 = vpop.f32.mrf.mxu0
    %1904 = vmatprep.mubr.f32.mxu0 0.0
    %1905 = vmatmul.mubr.f32.gmra.mxu0 %v1792
    %v1906 = vpop.f32.mrf.mxu0
    %v1907 = vadd.f32 0.0, %v1906
    %v1908 = vpop.f32.mrf.mxu0
    %1909 = vmatprep.mubr.f32.mxu0 0.0
    %1910 = vmatmul.mubr.f32.gmra.mxu0 %v1793
    %v1911 = vpop.f32.mrf.mxu0
    %v1912 = vadd.f32 0.0, %v1911
    %v1913 = vpop.f32.mrf.mxu0
    %1914 = vmatprep.mubr.f32.mxu0 0.0
    %1915 = vmatmul.mubr.f32.gmra.mxu0 %v1794
    %v1916 = vpop.f32.mrf.mxu0
    %v1917 = vadd.f32 0.0, %v1916
    %v1918 = vpop.f32.mrf.mxu0
    %1919 = vmatprep.mubr.f32.mxu0 0.0
    %1920 = vmatmul.mubr.f32.gmra.mxu0 %v1795
    %v1921 = vpop.f32.mrf.mxu0
    %v1922 = vadd.f32 0.0, %v1921
    %v1923 = vpop.f32.mrf.mxu0
    %1924 = vmatprep.mubr.f32.mxu0 0.0
    %1925 = vmatmul.mubr.f32.gmra.mxu0 %v1796
    %v1926 = vpop.f32.mrf.mxu0
    %v1927 = vadd.f32 0.0, %v1926
    %v1928 = vpop.f32.mrf.mxu0
    %1929 = vmatprep.mubr.f32.mxu0 0.0
    %1930 = vmatmul.mubr.f32.gmra.mxu0 %v1797
    %v1931 = vpop.f32.mrf.mxu0
    %v1932 = vadd.f32 0.0, %v1931
    %v1933 = vpop.f32.mrf.mxu0
    %1934 = vmatprep.mubr.f32.mxu0 0.0
    %1935 = vmatmul.mubr.f32.gmra.mxu0 %v1798
    %v1936 = vpop.f32.mrf.mxu0
    %v1937 = vadd.f32 0.0, %v1936
    %v1938 = vpop.f32.mrf.mxu0
    %1939 = vmatprep.mubr.f32.mxu0 0.0
    %1940 = vmatmul.mubr.f32.gmra.mxu0 %v1799
    %v1941 = vpop.f32.mrf.mxu0
    %v1942 = vadd.f32 0.0, %v1941
    %v1943 = vpop.f32.mrf.mxu0
    %1944 = vmatprep.mubr.f32.mxu0 0.0
    %1945 = vmatmul.mubr.f32.gmra.mxu0 %v1800
    %v1946 = vpop.f32.mrf.mxu0
    %v1947 = vadd.f32 0.0, %v1946
    %v1948 = vpop.f32.mrf.mxu0
    %1949 = vmatprep.mubr.f32.mxu0 0.0
    %1950 = vmatmul.mubr.f32.gmra.mxu0 %v1801
    %v1951 = vpop.f32.mrf.mxu0
    %v1952 = vadd.f32 0.0, %v1951
    %v1953 = vpop.f32.mrf.mxu0
    %1954 = vmatprep.mubr.f32.mxu0 0.0
    %1955 = vmatmul.mubr.f32.gmra.mxu0 %v1802
    %v1956 = vpop.f32.mrf.mxu0
    %v1957 = vadd.f32 0.0, %v1956
    %v1958 = vpop.f32.mrf.mxu0
    %1959 = vmatprep.mubr.f32.mxu0 0.0
    %1960 = vmatmul.mubr.f32.gmra.mxu0 %v1803
    %v1961 = vpop.f32.mrf.mxu0
    %v1962 = vadd.f32 0.0, %v1961
    %v1963 = vpop.f32.mrf.mxu0
    %1964 = vmatprep.mubr.f32.mxu0 0.0
    %1965 = vmatmul.mubr.f32.gmra.mxu0 %v1804
    %v1966 = vpop.f32.mrf.mxu0
    %v1967 = vadd.f32 0.0, %v1966
    %v1968 = vpop.f32.mrf.mxu0
    %1969 = vmatprep.mubr.f32.mxu0 0.0
    %1970 = vmatmul.mubr.f32.gmra.mxu0 %v1805
    %v1971 = vpop.f32.mrf.mxu0
    %v1972 = vadd.f32 0.0, %v1971
    %v1973 = vpop.f32.mrf.mxu0
    %1974 = vmatprep.mubr.f32.mxu0 0.0
    %1975 = vmatmul.mubr.f32.gmra.mxu0 %v1806
    %v1976 = vpop.f32.mrf.mxu0
    %v1977 = vadd.f32 0.0, %v1976
    %v1978 = vpop.f32.mrf.mxu0
    %1979 = vmatprep.mubr.f32.mxu0 0.0
    %1980 = vmatmul.mubr.f32.gmra.mxu0 %v1807
    %v1981 = vpop.f32.mrf.mxu0
    %v1982 = vadd.f32 0.0, %v1981
    %v1983 = vpop.f32.mrf.mxu0
    %1984 = vdwg.mxu0
    %1985 = vmatprep.subr.mxu0 0.0
    %1986 = vmatpush1.msra.mxu0 %v1788
    %1987 = vmatprep.subr.mxu0 0.0
    %1988 = vmatpush1.msra.mxu0 %v1787
    %1989 = vmatprep.subr.mxu0 0.0
    %1990 = vmatpush1.msra.mxu0 %v1786
    %1991 = vmatprep.subr.mxu0 0.0
    %1992 = vmatpush1.msra.mxu0 %v1785
    %1993 = vmatprep.subr.mxu0 0.0
    %1994 = vmatpush1.msra.mxu0 %v1784
    %1995 = vmatprep.subr.mxu0 0.0
    %1996 = vmatpush1.msra.mxu0 %v1783
    %1997 = vmatprep.subr.mxu0 0.0
    %1998 = vmatpush1.msra.mxu0 %v1782
    %1999 = vmatprep.subr.mxu0 0.0
    %2000 = vmatpush1.msra.mxu0 %v1781
    %2001 = vmatprep.subr.mxu0 0.0
    %2002 = vmatpush1.msra.mxu0 %v1780
    %2003 = vmatprep.subr.mxu0 0.0
    %2004 = vmatpush1.msra.mxu0 %v1779
    %2005 = vmatprep.subr.mxu0 0.0
    %2006 = vmatpush1.msra.mxu0 %v1778
    %2007 = vmatprep.subr.mxu0 0.0
    %2008 = vmatpush1.msra.mxu0 %v1777
    %2009 = vmatprep.subr.mxu0 0.0
    %2010 = vmatpush1.msra.mxu0 %v1776
    %2011 = vmatprep.subr.mxu0 0.0
    %2012 = vmatpush1.msra.mxu0 %v1775
    %2013 = vmatprep.subr.mxu0 0.0
    %2014 = vmatpush1.msra.mxu0 %v1774
    %2015 = vmatprep.subr.mxu0 0.0
    %2016 = vmatpush1.msra.mxu0 %v1773
    %2017 = vmatprep.subr.mxu0 0.0
    %2018 = vmatpush2.msra.mxu0 0.0
    %2019 = vmatprep.subr.mxu0 0.0
    %2020 = vmatpush2.msra.mxu0 0.0
    %2021 = vmatprep.subr.mxu0 0.0
    %2022 = vmatpush2.msra.mxu0 0.0
    %2023 = vmatprep.subr.mxu0 0.0
    %2024 = vmatpush2.msra.mxu0 0.0
    %2025 = vmatprep.subr.mxu0 0.0
    %2026 = vmatpush2.msra.mxu0 0.0
    %2027 = vmatprep.subr.mxu0 0.0
    %2028 = vmatpush2.msra.mxu0 0.0
    %2029 = vmatprep.subr.mxu0 0.0
    %2030 = vmatpush2.msra.mxu0 0.0
    %2031 = vmatprep.subr.mxu0 0.0
    %2032 = vmatpush2.msra.mxu0 0.0
    %2033 = vmatprep.subr.mxu0 0.0
    %2034 = vmatpush2.msra.mxu0 0.0
    %2035 = vmatprep.subr.mxu0 0.0
    %2036 = vmatpush2.msra.mxu0 0.0
    %2037 = vmatprep.subr.mxu0 0.0
    %2038 = vmatpush2.msra.mxu0 0.0
    %2039 = vmatprep.subr.mxu0 0.0
    %2040 = vmatpush2.msra.mxu0 0.0
    %2041 = vmatprep.subr.mxu0 0.0
    %2042 = vmatpush2.msra.mxu0 0.0
    %2043 = vmatprep.subr.mxu0 0.0
    %2044 = vmatpush2.msra.mxu0 0.0
    %2045 = vmatprep.subr.mxu0 0.0
    %2046 = vmatpush2.msra.mxu0 0.0
    %2047 = vmatprep.subr.mxu0 0.0
    %2048 = vmatpush2.msra.mxu0 0.0
    %2049 = vmatprep.mubr.f32.mxu0 0.0
    %2050 = vmatmul.mubr.f32.gmra.mxu0 %v1754
    %v2051 = vpop.f32.mrf.mxu0
    %v2052 = vadd.f32 %v1892, %v2051
    %v2053 = vpop.f32.mrf.mxu0
    %2054 = vmatprep.mubr.f32.mxu0 0.0
    %2055 = vmatmul.mubr.f32.gmra.mxu0 %v1755
    %v2056 = vpop.f32.mrf.mxu0
    %v2057 = vadd.f32 %v1897, %v2056
    %v2058 = vpop.f32.mrf.mxu0
    %2059 = vmatprep.mubr.f32.mxu0 0.0
    %2060 = vmatmul.mubr.f32.gmra.mxu0 %v1756
    %v2061 = vpop.f32.mrf.mxu0
    %v2062 = vadd.f32 %v1902, %v2061
    %v2063 = vpop.f32.mrf.mxu0
    %2064 = vmatprep.mubr.f32.mxu0 0.0
    %2065 = vmatmul.mubr.f32.gmra.mxu0 %v1757
    %v2066 = vpop.f32.mrf.mxu0
    %v2067 = vadd.f32 %v1907, %v2066
    %v2068 = vpop.f32.mrf.mxu0
    %2069 = vmatprep.mubr.f32.mxu0 0.0
    %2070 = vmatmul.mubr.f32.gmra.mxu0 %v1758
    %v2071 = vpop.f32.mrf.mxu0
    %v2072 = vadd.f32 %v1912, %v2071
    %v2073 = vpop.f32.mrf.mxu0
    %2074 = vmatprep.mubr.f32.mxu0 0.0
    %2075 = vmatmul.mubr.f32.gmra.mxu0 %v1759
    %v2076 = vpop.f32.mrf.mxu0
    %v2077 = vadd.f32 %v1917, %v2076
    %v2078 = vpop.f32.mrf.mxu0
    %2079 = vmatprep.mubr.f32.mxu0 0.0
    %2080 = vmatmul.mubr.f32.gmra.mxu0 %v1760
    %v2081 = vpop.f32.mrf.mxu0
    %v2082 = vadd.f32 %v1922, %v2081
    %v2083 = vpop.f32.mrf.mxu0
    %2084 = vmatprep.mubr.f32.mxu0 0.0
    %2085 = vmatmul.mubr.f32.gmra.mxu0 %v1761
    %v2086 = vpop.f32.mrf.mxu0
    %v2087 = vadd.f32 %v1927, %v2086
    %v2088 = vpop.f32.mrf.mxu0
    %2089 = vmatprep.mubr.f32.mxu0 0.0
    %2090 = vmatmul.mubr.f32.gmra.mxu0 %v1762
    %v2091 = vpop.f32.mrf.mxu0
    %v2092 = vadd.f32 %v1932, %v2091
    %v2093 = vpop.f32.mrf.mxu0
    %2094 = vmatprep.mubr.f32.mxu0 0.0
    %2095 = vmatmul.mubr.f32.gmra.mxu0 %v1763
    %v2096 = vpop.f32.mrf.mxu0
    %v2097 = vadd.f32 %v1937, %v2096
    %v2098 = vpop.f32.mrf.mxu0
    %2099 = vmatprep.mubr.f32.mxu0 0.0
    %2100 = vmatmul.mubr.f32.gmra.mxu0 %v1764
    %v2101 = vpop.f32.mrf.mxu0
    %v2102 = vadd.f32 %v1942, %v2101
    %v2103 = vpop.f32.mrf.mxu0
    %2104 = vmatprep.mubr.f32.mxu0 0.0
    %2105 = vmatmul.mubr.f32.gmra.mxu0 %v1765
    %v2106 = vpop.f32.mrf.mxu0
    %v2107 = vadd.f32 %v1947, %v2106
    %v2108 = vpop.f32.mrf.mxu0
    %2109 = vmatprep.mubr.f32.mxu0 0.0
    %2110 = vmatmul.mubr.f32.gmra.mxu0 %v1766
    %v2111 = vpop.f32.mrf.mxu0
    %v2112 = vadd.f32 %v1952, %v2111
    %v2113 = vpop.f32.mrf.mxu0
    %2114 = vmatprep.mubr.f32.mxu0 0.0
    %2115 = vmatmul.mubr.f32.gmra.mxu0 %v1767
    %v2116 = vpop.f32.mrf.mxu0
    %v2117 = vadd.f32 %v1957, %v2116
    %v2118 = vpop.f32.mrf.mxu0
    %2119 = vmatprep.mubr.f32.mxu0 0.0
    %2120 = vmatmul.mubr.f32.gmra.mxu0 %v1768
    %v2121 = vpop.f32.mrf.mxu0
    %v2122 = vadd.f32 %v1962, %v2121
    %v2123 = vpop.f32.mrf.mxu0
    %2124 = vmatprep.mubr.f32.mxu0 0.0
    %2125 = vmatmul.mubr.f32.gmra.mxu0 %v1769
    %v2126 = vpop.f32.mrf.mxu0
    %v2127 = vadd.f32 %v1967, %v2126
    %v2128 = vpop.f32.mrf.mxu0
    %2129 = vmatprep.mubr.f32.mxu0 0.0
    %2130 = vmatmul.mubr.f32.gmra.mxu0 %v1770
    %v2131 = vpop.f32.mrf.mxu0
    %v2132 = vadd.f32 %v1972, %v2131
    %v2133 = vpop.f32.mrf.mxu0
    %2134 = vmatprep.mubr.f32.mxu0 0.0
    %2135 = vmatmul.mubr.f32.gmra.mxu0 %v1771
    %v2136 = vpop.f32.mrf.mxu0
    %v2137 = vadd.f32 %v1977, %v2136
    %v2138 = vpop.f32.mrf.mxu0
    %2139 = vmatprep.mubr.f32.mxu0 0.0
    %2140 = vmatmul.mubr.f32.gmra.mxu0 %v1772
    %v2141 = vpop.f32.mrf.mxu0
    %v2142 = vadd.f32 %v1982, %v2141
    %v2143 = vpop.f32.mrf.mxu0
    %2144 = vdwg.mxu0
    %v2145 = vld [vmem:[%s4] sm:$0x1]
    %v2147 = vlaneseq
    %v2148 = vshrl.u32 %v2147, 7
    %v2149 = vsub.s32 0, %v2148
    %v2150 = vrot.slane %v2145, %v2149
    %v2152 = vadd.f32 %v2052, %v2150
    %v2153 = vadd.f32 %v2057, %v2150
    %v2154 = vadd.f32 %v2062, %v2150
    %v2155 = vadd.f32 %v2067, %v2150
    %v2156 = vadd.f32 %v2072, %v2150
    %v2157 = vadd.f32 %v2077, %v2150
    %v2158 = vadd.f32 %v2082, %v2150
    %v2159 = vadd.f32 %v2087, %v2150
    %v2160 = vadd.f32 %v2092, %v2150
    %v2161 = vadd.f32 %v2097, %v2150
    %v2162 = vadd.f32 %v2102, %v2150
    %v2163 = vadd.f32 %v2107, %v2150
    %v2164 = vadd.f32 %v2112, %v2150
    %v2165 = vadd.f32 %v2117, %v2150
    %v2166 = vadd.f32 %v2122, %v2150
    %v2167 = vadd.f32 %v2127, %v2150
    %v2168 = vadd.f32 %v2132, %v2150
    %v2169 = vadd.f32 %v2137, %v2150
    %v2170 = vadd.f32 %v2142, %v2150
    %v2171 = vmax.f32 %v2152, 0.0
    %v2172 = vmax.f32 %v2153, 0.0
    %v2173 = vmax.f32 %v2154, 0.0
    %v2174 = vmax.f32 %v2155, 0.0
    %v2175 = vmax.f32 %v2156, 0.0
    %v2176 = vmax.f32 %v2157, 0.0
    %v2177 = vmax.f32 %v2158, 0.0
    %v2178 = vmax.f32 %v2159, 0.0
    %v2179 = vmax.f32 %v2160, 0.0
    %v2180 = vmax.f32 %v2161, 0.0
    %v2181 = vmax.f32 %v2162, 0.0
    %v2182 = vmax.f32 %v2163, 0.0
    %v2183 = vmax.f32 %v2164, 0.0
    %v2184 = vmax.f32 %v2165, 0.0
    %v2185 = vmax.f32 %v2166, 0.0
    %v2186 = vmax.f32 %v2167, 0.0
    %v2187 = vmax.f32 %v2168, 0.0
    %v2188 = vmax.f32 %v2169, 0.0
    %v2189 = vmax.f32 %v2170, 0.0
    %vm2190 = vcmask 130048
    %2191 = vst.msk [vmem:[#allocation5] sm:$0xff] %vm2190, %v2171
    %2192 = vst.msk [vmem:[#allocation5 + $0x8] sm:$0xff] %vm2190, %v2172
    %2193 = vst.msk [vmem:[#allocation5 + $0x10] sm:$0xff] %vm2190, %v2173
    %2194 = vst.msk [vmem:[#allocation5 + $0x18] sm:$0xff] %vm2190, %v2174
    %2195 = vst.msk [vmem:[#allocation5 + $0x20] sm:$0xff] %vm2190, %v2175
    %2196 = vst.msk [vmem:[#allocation5 + $0x28] sm:$0xff] %vm2190, %v2176
    %2197 = vst.msk [vmem:[#allocation5 + $0x30] sm:$0xff] %vm2190, %v2177
    %2198 = vst.msk [vmem:[#allocation5 + $0x38] sm:$0xff] %vm2190, %v2178
    %2199 = vst.msk [vmem:[#allocation5 + $0x40] sm:$0xff] %vm2190, %v2179
    %2200 = vst.msk [vmem:[#allocation5 + $0x48] sm:$0xff] %vm2190, %v2180
    %2201 = vst.msk [vmem:[#allocation5 + $0x50] sm:$0xff] %vm2190, %v2181
    %2202 = vst.msk [vmem:[#allocation5 + $0x58] sm:$0xff] %vm2190, %v2182
    %2203 = vst.msk [vmem:[#allocation5 + $0x60] sm:$0xff] %vm2190, %v2183
    %2204 = vst.msk [vmem:[#allocation5 + $0x68] sm:$0xff] %vm2190, %v2184
    %2205 = vst.msk [vmem:[#allocation5 + $0x70] sm:$0xff] %vm2190, %v2185
    %2206 = vst.msk [vmem:[#allocation5 + $0x78] sm:$0xff] %vm2190, %v2186
    %2207 = vst.msk [vmem:[#allocation5 + $0x80] sm:$0xff] %vm2190, %v2187
    %2208 = vst.msk [vmem:[#allocation5 + $0x88] sm:$0xff] %vm2190, %v2188
    %vm2209 = vcmask 128000
    %2210 = vst.msk [vmem:[#allocation5 + $0x90] sm:$0x3f] %vm2209, %v2189
    %v2211 = vld [vmem:[#allocation5] ss:$2 sm:$0xff]
    %s2212 = scalar_lea.vmem [#allocation5], 16
    %v2213 = vld [vmem:[%s2212] ss:$2 sm:$0xff]
    %s2214 = scalar_lea.vmem [#allocation5], 32
    %v2215 = vld [vmem:[%s2214] ss:$2 sm:$0xff]
    %s2216 = scalar_lea.vmem [#allocation5], 48
    %v2217 = vld [vmem:[%s2216] ss:$2 sm:$0xff]
    %s2218 = scalar_lea.vmem [#allocation5], 64
    %v2219 = vld [vmem:[%s2218] ss:$2 sm:$0xff]
    %s2220 = scalar_lea.vmem [#allocation5], 80
    %v2221 = vld [vmem:[%s2220] ss:$2 sm:$0xff]
    %s2222 = scalar_lea.vmem [#allocation5], 96
    %v2223 = vld [vmem:[%s2222] ss:$2 sm:$0xff]
    %s2224 = scalar_lea.vmem [#allocation5], 112
    %v2225 = vld [vmem:[%s2224] ss:$2 sm:$0xff]
    %s2226 = scalar_lea.vmem [#allocation5], 128
    %v2227 = vld [vmem:[%s2226] ss:$2 sm:$0xff]
    %s2228 = scalar_lea.vmem [#allocation5], 144
    %v2229 = vld [vmem:[%s2228] ss:$2 sm:$0x7]
    %s2230 = scalar_lea.vmem [#allocation5], 1
    %v2231 = vld [vmem:[%s2230] ss:$2 sm:$0xff]
    %s2232 = scalar_lea.vmem [#allocation5], 17
    %v2233 = vld [vmem:[%s2232] ss:$2 sm:$0xff]
    %s2234 = scalar_lea.vmem [#allocation5], 33
    %v2235 = vld [vmem:[%s2234] ss:$2 sm:$0xff]
    %s2236 = scalar_lea.vmem [#allocation5], 49
    %v2237 = vld [vmem:[%s2236] ss:$2 sm:$0xff]
    %s2238 = scalar_lea.vmem [#allocation5], 65
    %v2239 = vld [vmem:[%s2238] ss:$2 sm:$0xff]
    %s2240 = scalar_lea.vmem [#allocation5], 81
    %v2241 = vld [vmem:[%s2240] ss:$2 sm:$0xff]
    %s2242 = scalar_lea.vmem [#allocation5], 97
    %v2243 = vld [vmem:[%s2242] ss:$2 sm:$0xff]
    %s2244 = scalar_lea.vmem [#allocation5], 113
    %v2245 = vld [vmem:[%s2244] ss:$2 sm:$0xff]
    %s2246 = scalar_lea.vmem [#allocation5], 129
    %v2247 = vld [vmem:[%s2246] ss:$2 sm:$0xff]
    %s2248 = scalar_lea.vmem [#allocation5], 145
    %v2249 = vld [vmem:[%s2248] ss:$2 sm:$0x7]
    %v2250 = vmax.f32 %v2211, %v2231
    %v2251 = vmax.f32 %v2213, %v2233
    %v2252 = vmax.f32 %v2215, %v2235
    %v2253 = vmax.f32 %v2217, %v2237
    %v2254 = vmax.f32 %v2219, %v2239
    %v2255 = vmax.f32 %v2221, %v2241
    %v2256 = vmax.f32 %v2223, %v2243
    %v2257 = vmax.f32 %v2225, %v2245
    %v2258 = vmax.f32 %v2227, %v2247
    %v2259 = vmax.f32 %v2229, %v2249
    %v2260 = vld [vmem:[#allocation2 + $0x12c] sm:$0xff]
    %v2261 = vld [vmem:[#allocation2 + $0x134] sm:$0xff]
    %v2262 = vld [vmem:[#allocation2 + $0x13c] sm:$0xff]
    %v2263 = vld [vmem:[#allocation2 + $0x144] sm:$0xff]
    %v2264 = vld [vmem:[#allocation2 + $0x14c] sm:$0xff]
    %v2265 = vld [vmem:[#allocation2 + $0x154] sm:$0xff]
    %v2266 = vld [vmem:[#allocation2 + $0x15c] sm:$0xff]
    %v2267 = vld [vmem:[#allocation2 + $0x164] sm:$0xff]
    %v2268 = vld [vmem:[#allocation2 + $0x16c] sm:$0xff]
    %v2269 = vld [vmem:[#allocation2 + $0x174] sm:$0xff]
    %v2270 = vld [vmem:[#allocation2 + $0x17c] sm:$0xff]
    %v2271 = vld [vmem:[#allocation2 + $0x184] sm:$0xff]
    %v2272 = vld [vmem:[#allocation2 + $0x18c] sm:$0x3f]
    %v2273 = vld [vmem:[#allocation2 + $0x12d] sm:$0xff]
    %v2274 = vld [vmem:[#allocation2 + $0x135] sm:$0xff]
    %v2275 = vld [vmem:[#allocation2 + $0x13d] sm:$0xff]
    %v2276 = vld [vmem:[#allocation2 + $0x145] sm:$0xff]
    %v2277 = vld [vmem:[#allocation2 + $0x14d] sm:$0xff]
    %v2278 = vld [vmem:[#allocation2 + $0x155] sm:$0xff]
    %v2279 = vld [vmem:[#allocation2 + $0x15d] sm:$0xff]
    %v2280 = vld [vmem:[#allocation2 + $0x165] sm:$0xff]
    %v2281 = vld [vmem:[#allocation2 + $0x16d] sm:$0xff]
    %v2282 = vld [vmem:[#allocation2 + $0x175] sm:$0xff]
    %v2283 = vld [vmem:[#allocation2 + $0x17d] sm:$0xff]
    %v2284 = vld [vmem:[#allocation2 + $0x185] sm:$0xff]
    %v2285 = vld [vmem:[#allocation2 + $0x18d] sm:$0x3f]
    %v2286 = vmax.f32 %v2260, %v2273
    %v2287 = vmax.f32 %v2261, %v2274
    %v2288 = vmax.f32 %v2262, %v2275
    %v2289 = vmax.f32 %v2263, %v2276
    %v2290 = vmax.f32 %v2264, %v2277
    %v2291 = vmax.f32 %v2265, %v2278
    %v2292 = vmax.f32 %v2266, %v2279
    %v2293 = vmax.f32 %v2267, %v2280
    %v2294 = vmax.f32 %v2268, %v2281
    %v2295 = vmax.f32 %v2269, %v2282
    %v2296 = vmax.f32 %v2270, %v2283
    %v2297 = vmax.f32 %v2271, %v2284
    %v2298 = vmax.f32 %v2272, %v2285
    %v2299 = vld [vmem:[#allocation2 + $0x12e] sm:$0xff]
    %v2300 = vld [vmem:[#allocation2 + $0x136] sm:$0xff]
    %v2301 = vld [vmem:[#allocation2 + $0x13e] sm:$0xff]
    %v2302 = vld [vmem:[#allocation2 + $0x146] sm:$0xff]
    %v2303 = vld [vmem:[#allocation2 + $0x14e] sm:$0xff]
    %v2304 = vld [vmem:[#allocation2 + $0x156] sm:$0xff]
    %v2305 = vld [vmem:[#allocation2 + $0x15e] sm:$0xff]
    %v2306 = vld [vmem:[#allocation2 + $0x166] sm:$0xff]
    %v2307 = vld [vmem:[#allocation2 + $0x16e] sm:$0xff]
    %v2308 = vld [vmem:[#allocation2 + $0x176] sm:$0xff]
    %v2309 = vld [vmem:[#allocation2 + $0x17e] sm:$0xff]
    %v2310 = vld [vmem:[#allocation2 + $0x186] sm:$0xff]
    %v2311 = vld [vmem:[#allocation2 + $0x18e] sm:$0x3f]
    %v2312 = vmax.f32 %v2286, %v2299
    %v2313 = vmax.f32 %v2287, %v2300
    %v2314 = vmax.f32 %v2288, %v2301
    %v2315 = vmax.f32 %v2289, %v2302
    %v2316 = vmax.f32 %v2290, %v2303
    %v2317 = vmax.f32 %v2291, %v2304
    %v2318 = vmax.f32 %v2292, %v2305
    %v2319 = vmax.f32 %v2293, %v2306
    %v2320 = vmax.f32 %v2294, %v2307
    %v2321 = vmax.f32 %v2295, %v2308
    %v2322 = vmax.f32 %v2296, %v2309
    %v2323 = vmax.f32 %v2297, %v2310
    %v2324 = vmax.f32 %v2298, %v2311
    %2325 = vst [vmem:[#allocation3] sm:$0xff] %v2312
    %2326 = vst [vmem:[#allocation3 + $0x8] sm:$0xff] %v2313
    %2327 = vst [vmem:[#allocation3 + $0x10] sm:$0xff] %v2314
    %2328 = vst [vmem:[#allocation3 + $0x18] sm:$0xff] %v2315
    %2329 = vst [vmem:[#allocation3 + $0x20] sm:$0xff] %v2316
    %2330 = vst [vmem:[#allocation3 + $0x28] sm:$0xff] %v2317
    %2331 = vst [vmem:[#allocation3 + $0x30] sm:$0xff] %v2318
    %2332 = vst [vmem:[#allocation3 + $0x38] sm:$0xff] %v2319
    %2333 = vst [vmem:[#allocation3 + $0x40] sm:$0xff] %v2320
    %2334 = vst [vmem:[#allocation3 + $0x48] sm:$0xff] %v2321
    %2335 = vst [vmem:[#allocation3 + $0x50] sm:$0xff] %v2322
    %2336 = vst [vmem:[#allocation3 + $0x58] sm:$0xff] %v2323
    %2337 = vst [vmem:[#allocation3 + $0x60] sm:$0x3f] %v2324
    %2338 = vst [vmem:[#allocation4] sm:$0x1] 0.0
    %v2339 = vld [vmem:[#allocation3] ss:$2 sm:$0xff]
    %v2340 = vld [vmem:[%s1698] ss:$2 sm:$0xff]
    %v2341 = vld [vmem:[%s1700] ss:$2 sm:$0xff]
    %v2342 = vld [vmem:[%s1702] ss:$2 sm:$0xff]
    %v2343 = vld [vmem:[%s1704] ss:$2 sm:$0xff]
    %v2344 = vld [vmem:[%s1706] ss:$2 sm:$0xff]
    %v2345 = vld [vmem:[%s1708] ss:$2 sm:$0x7]
    %2346 = vst [vmem:[#allocation4 + $0x1] sm:$0xff] %v2339
    %2347 = vst [vmem:[#allocation4 + $0x9] sm:$0xff] %v2340
    %2348 = vst [vmem:[#allocation4 + $0x11] sm:$0xff] %v2341
    %2349 = vst [vmem:[#allocation4 + $0x19] sm:$0xff] %v2342
    %2350 = vst [vmem:[#allocation4 + $0x21] sm:$0xff] %v2343
    %2351 = vst [vmem:[#allocation4 + $0x29] sm:$0xff] %v2344
    %2352 = vst [vmem:[#allocation4 + $0x31] sm:$0x7] %v2345
    %2353 = vst [vmem:[#allocation4 + $0x34] sm:$0x1] 0.0
    %v2354 = vld [vmem:[#allocation4] sm:$0xff]
    %v2355 = vld [vmem:[#allocation4 + $0x8] sm:$0xff]
    %v2356 = vld [vmem:[#allocation4 + $0x10] sm:$0xff]
    %v2357 = vld [vmem:[#allocation4 + $0x18] sm:$0xff]
    %v2358 = vld [vmem:[#allocation4 + $0x20] sm:$0xff]
    %v2359 = vld [vmem:[#allocation4 + $0x28] sm:$0xff]
    %v2360 = vld [vmem:[#allocation4 + $0x30] sm:$0xf]
    %v2361 = vld [vmem:[%s3] sm:$0xff]
    %v2362 = vld [vmem:[%s3 + $0x8] sm:$0xff]
    %v2363 = vld [vmem:[%s3 + $0x10] sm:$0xff]
    %v2364 = vld [vmem:[%s3 + $0x18] sm:$0xff]
    %v2365 = vld [vmem:[%s3 + $0x20] sm:$0xff]
    %v2366 = vld [vmem:[%s3 + $0x28] sm:$0xff]
    %v2367 = vld [vmem:[%s3 + $0x30] sm:$0xff]
    %v2368 = vld [vmem:[%s3 + $0x38] sm:$0xff]
    %v2369 = vld [vmem:[%s3 + $0x40] sm:$0xff]
    %v2370 = vld [vmem:[%s3 + $0x48] sm:$0xff]
    %v2371 = vld [vmem:[%s3 + $0x50] sm:$0xff]
    %v2372 = vld [vmem:[%s3 + $0x58] sm:$0xff]
    %v2373 = vld [vmem:[%s3 + $0x60] sm:$0xff]
    %v2374 = vld [vmem:[%s3 + $0x68] sm:$0xff]
    %v2375 = vld [vmem:[%s3 + $0x70] sm:$0xff]
    %v2376 = vld [vmem:[%s3 + $0x78] sm:$0xff]
    %v2377 = vld [vmem:[#allocation4 + $0x1] sm:$0xff]
    %v2378 = vld [vmem:[#allocation4 + $0x9] sm:$0xff]
    %v2379 = vld [vmem:[#allocation4 + $0x11] sm:$0xff]
    %v2380 = vld [vmem:[#allocation4 + $0x19] sm:$0xff]
    %v2381 = vld [vmem:[#allocation4 + $0x21] sm:$0xff]
    %v2382 = vld [vmem:[#allocation4 + $0x29] sm:$0xff]
    %v2383 = vld [vmem:[#allocation4 + $0x31] sm:$0xf]
    %v2384 = vld [vmem:[%s1808] sm:$0xff]
    %v2385 = vld [vmem:[%s1808 + $0x8] sm:$0xff]
    %v2386 = vld [vmem:[%s1808 + $0x10] sm:$0xff]
    %v2387 = vld [vmem:[%s1808 + $0x18] sm:$0xff]
    %v2388 = vld [vmem:[%s1808 + $0x20] sm:$0xff]
    %v2389 = vld [vmem:[%s1808 + $0x28] sm:$0xff]
    %v2390 = vld [vmem:[%s1808 + $0x30] sm:$0xff]
    %v2391 = vld [vmem:[%s1808 + $0x38] sm:$0xff]
    %v2392 = vld [vmem:[%s1808 + $0x40] sm:$0xff]
    %v2393 = vld [vmem:[%s1808 + $0x48] sm:$0xff]
    %v2394 = vld [vmem:[%s1808 + $0x50] sm:$0xff]
    %v2395 = vld [vmem:[%s1808 + $0x58] sm:$0xff]
    %v2396 = vld [vmem:[%s1808 + $0x60] sm:$0xff]
    %v2397 = vld [vmem:[%s1808 + $0x68] sm:$0xff]
    %v2398 = vld [vmem:[%s1808 + $0x70] sm:$0xff]
    %v2399 = vld [vmem:[%s1808 + $0x78] sm:$0xff]
    %2400 = vmatprep.subr.mxu0 0.0
    %2401 = vmatpush1.msra.mxu0 %v2399
    %2402 = vmatprep.subr.mxu0 0.0
    %2403 = vmatpush1.msra.mxu0 %v2398
    %2404 = vmatprep.subr.mxu0 0.0
    %2405 = vmatpush1.msra.mxu0 %v2397
    %2406 = vmatprep.subr.mxu0 0.0
    %2407 = vmatpush1.msra.mxu0 %v2396
    %2408 = vmatprep.subr.mxu0 0.0
    %2409 = vmatpush1.msra.mxu0 %v2395
    %2410 = vmatprep.subr.mxu0 0.0
    %2411 = vmatpush1.msra.mxu0 %v2394
    %2412 = vmatprep.subr.mxu0 0.0
    %2413 = vmatpush1.msra.mxu0 %v2393
    %2414 = vmatprep.subr.mxu0 0.0
    %2415 = vmatpush1.msra.mxu0 %v2392
    %2416 = vmatprep.subr.mxu0 0.0
    %2417 = vmatpush1.msra.mxu0 %v2391
    %2418 = vmatprep.subr.mxu0 0.0
    %2419 = vmatpush1.msra.mxu0 %v2390
    %2420 = vmatprep.subr.mxu0 0.0
    %2421 = vmatpush1.msra.mxu0 %v2389
    %2422 = vmatprep.subr.mxu0 0.0
    %2423 = vmatpush1.msra.mxu0 %v2388
    %2424 = vmatprep.subr.mxu0 0.0
    %2425 = vmatpush1.msra.mxu0 %v2387
    %2426 = vmatprep.subr.mxu0 0.0
    %2427 = vmatpush1.msra.mxu0 %v2386
    %2428 = vmatprep.subr.mxu0 0.0
    %2429 = vmatpush1.msra.mxu0 %v2385
    %2430 = vmatprep.subr.mxu0 0.0
    %2431 = vmatpush1.msra.mxu0 %v2384
    %2432 = vmatprep.subr.mxu0 0.0
    %2433 = vmatpush2.msra.mxu0 0.0
    %2434 = vmatprep.subr.mxu0 0.0
    %2435 = vmatpush2.msra.mxu0 0.0
    %2436 = vmatprep.subr.mxu0 0.0
    %2437 = vmatpush2.msra.mxu0 0.0
    %2438 = vmatprep.subr.mxu0 0.0
    %2439 = vmatpush2.msra.mxu0 0.0
    %2440 = vmatprep.subr.mxu0 0.0
    %2441 = vmatpush2.msra.mxu0 0.0
    %2442 = vmatprep.subr.mxu0 0.0
    %2443 = vmatpush2.msra.mxu0 0.0
    %2444 = vmatprep.subr.mxu0 0.0
    %2445 = vmatpush2.msra.mxu0 0.0
    %2446 = vmatprep.subr.mxu0 0.0
    %2447 = vmatpush2.msra.mxu0 0.0
    %2448 = vmatprep.subr.mxu0 0.0
    %2449 = vmatpush2.msra.mxu0 0.0
    %2450 = vmatprep.subr.mxu0 0.0
    %2451 = vmatpush2.msra.mxu0 0.0
    %2452 = vmatprep.subr.mxu0 0.0
    %2453 = vmatpush2.msra.mxu0 0.0
    %2454 = vmatprep.subr.mxu0 0.0
    %2455 = vmatpush2.msra.mxu0 0.0
    %2456 = vmatprep.subr.mxu0 0.0
    %2457 = vmatpush2.msra.mxu0 0.0
    %2458 = vmatprep.subr.mxu0 0.0
    %2459 = vmatpush2.msra.mxu0 0.0
    %2460 = vmatprep.subr.mxu0 0.0
    %2461 = vmatpush2.msra.mxu0 0.0
    %2462 = vmatprep.subr.mxu0 0.0
    %2463 = vmatpush2.msra.mxu0 0.0
    %2464 = vmatprep.mubr.f32.mxu0 0.0
    %2465 = vmatmul.mubr.f32.gmra.mxu0 %v2377
    %v2466 = vpop.f32.mrf.mxu0
    %v2467 = vadd.f32 0.0, %v2466
    %v2468 = vpop.f32.mrf.mxu0
    %2469 = vmatprep.mubr.f32.mxu0 0.0
    %2470 = vmatmul.mubr.f32.gmra.mxu0 %v2378
    %v2471 = vpop.f32.mrf.mxu0
    %v2472 = vadd.f32 0.0, %v2471
    %v2473 = vpop.f32.mrf.mxu0
    %2474 = vmatprep.mubr.f32.mxu0 0.0
    %2475 = vmatmul.mubr.f32.gmra.mxu0 %v2379
    %v2476 = vpop.f32.mrf.mxu0
    %v2477 = vadd.f32 0.0, %v2476
    %v2478 = vpop.f32.mrf.mxu0
    %2479 = vmatprep.mubr.f32.mxu0 0.0
    %2480 = vmatmul.mubr.f32.gmra.mxu0 %v2380
    %v2481 = vpop.f32.mrf.mxu0
    %v2482 = vadd.f32 0.0, %v2481
    %v2483 = vpop.f32.mrf.mxu0
    %2484 = vmatprep.mubr.f32.mxu0 0.0
    %2485 = vmatmul.mubr.f32.gmra.mxu0 %v2381
    %v2486 = vpop.f32.mrf.mxu0
    %v2487 = vadd.f32 0.0, %v2486
    %v2488 = vpop.f32.mrf.mxu0
    %2489 = vmatprep.mubr.f32.mxu0 0.0
    %2490 = vmatmul.mubr.f32.gmra.mxu0 %v2382
    %v2491 = vpop.f32.mrf.mxu0
    %v2492 = vadd.f32 0.0, %v2491
    %v2493 = vpop.f32.mrf.mxu0
    %2494 = vmatprep.mubr.f32.mxu0 0.0
    %2495 = vmatmul.mubr.f32.gmra.mxu0 %v2383
    %v2496 = vpop.f32.mrf.mxu0
    %v2497 = vadd.f32 0.0, %v2496
    %v2498 = vpop.f32.mrf.mxu0
    %2499 = vdwg.mxu0
    %2500 = vmatprep.subr.mxu0 0.0
    %2501 = vmatpush1.msra.mxu0 %v2376
    %2502 = vmatprep.subr.mxu0 0.0
    %2503 = vmatpush1.msra.mxu0 %v2375
    %2504 = vmatprep.subr.mxu0 0.0
    %2505 = vmatpush1.msra.mxu0 %v2374
    %2506 = vmatprep.subr.mxu0 0.0
    %2507 = vmatpush1.msra.mxu0 %v2373
    %2508 = vmatprep.subr.mxu0 0.0
    %2509 = vmatpush1.msra.mxu0 %v2372
    %2510 = vmatprep.subr.mxu0 0.0
    %2511 = vmatpush1.msra.mxu0 %v2371
    %2512 = vmatprep.subr.mxu0 0.0
    %2513 = vmatpush1.msra.mxu0 %v2370
    %2514 = vmatprep.subr.mxu0 0.0
    %2515 = vmatpush1.msra.mxu0 %v2369
    %2516 = vmatprep.subr.mxu0 0.0
    %2517 = vmatpush1.msra.mxu0 %v2368
    %2518 = vmatprep.subr.mxu0 0.0
    %2519 = vmatpush1.msra.mxu0 %v2367
    %2520 = vmatprep.subr.mxu0 0.0
    %2521 = vmatpush1.msra.mxu0 %v2366
    %2522 = vmatprep.subr.mxu0 0.0
    %2523 = vmatpush1.msra.mxu0 %v2365
    %2524 = vmatprep.subr.mxu0 0.0
    %2525 = vmatpush1.msra.mxu0 %v2364
    %2526 = vmatprep.subr.mxu0 0.0
    %2527 = vmatpush1.msra.mxu0 %v2363
    %2528 = vmatprep.subr.mxu0 0.0
    %2529 = vmatpush1.msra.mxu0 %v2362
    %2530 = vmatprep.subr.mxu0 0.0
    %2531 = vmatpush1.msra.mxu0 %v2361
    %2532 = vmatprep.subr.mxu0 0.0
    %2533 = vmatpush2.msra.mxu0 0.0
    %2534 = vmatprep.subr.mxu0 0.0
    %2535 = vmatpush2.msra.mxu0 0.0
    %2536 = vmatprep.subr.mxu0 0.0
    %2537 = vmatpush2.msra.mxu0 0.0
    %2538 = vmatprep.subr.mxu0 0.0
    %2539 = vmatpush2.msra.mxu0 0.0
    %2540 = vmatprep.subr.mxu0 0.0
    %2541 = vmatpush2.msra.mxu0 0.0
    %2542 = vmatprep.subr.mxu0 0.0
    %2543 = vmatpush2.msra.mxu0 0.0
    %2544 = vmatprep.subr.mxu0 0.0
    %2545 = vmatpush2.msra.mxu0 0.0
    %2546 = vmatprep.subr.mxu0 0.0
    %2547 = vmatpush2.msra.mxu0 0.0
    %2548 = vmatprep.subr.mxu0 0.0
    %2549 = vmatpush2.msra.mxu0 0.0
    %2550 = vmatprep.subr.mxu0 0.0
    %2551 = vmatpush2.msra.mxu0 0.0
    %2552 = vmatprep.subr.mxu0 0.0
    %2553 = vmatpush2.msra.mxu0 0.0
    %2554 = vmatprep.subr.mxu0 0.0
    %2555 = vmatpush2.msra.mxu0 0.0
    %2556 = vmatprep.subr.mxu0 0.0
    %2557 = vmatpush2.msra.mxu0 0.0
    %2558 = vmatprep.subr.mxu0 0.0
    %2559 = vmatpush2.msra.mxu0 0.0
    %2560 = vmatprep.subr.mxu0 0.0
    %2561 = vmatpush2.msra.mxu0 0.0
    %2562 = vmatprep.subr.mxu0 0.0
    %2563 = vmatpush2.msra.mxu0 0.0
    %2564 = vmatprep.mubr.f32.mxu0 0.0
    %2565 = vmatmul.mubr.f32.gmra.mxu0 %v2354
    %v2566 = vpop.f32.mrf.mxu0
    %v2567 = vadd.f32 %v2467, %v2566
    %v2568 = vpop.f32.mrf.mxu0
    %2569 = vmatprep.mubr.f32.mxu0 0.0
    %2570 = vmatmul.mubr.f32.gmra.mxu0 %v2355
    %v2571 = vpop.f32.mrf.mxu0
    %v2572 = vadd.f32 %v2472, %v2571
    %v2573 = vpop.f32.mrf.mxu0
    %2574 = vmatprep.mubr.f32.mxu0 0.0
    %2575 = vmatmul.mubr.f32.gmra.mxu0 %v2356
    %v2576 = vpop.f32.mrf.mxu0
    %v2577 = vadd.f32 %v2477, %v2576
    %v2578 = vpop.f32.mrf.mxu0
    %2579 = vmatprep.mubr.f32.mxu0 0.0
    %2580 = vmatmul.mubr.f32.gmra.mxu0 %v2357
    %v2581 = vpop.f32.mrf.mxu0
    %v2582 = vadd.f32 %v2482, %v2581
    %v2583 = vpop.f32.mrf.mxu0
    %2584 = vmatprep.mubr.f32.mxu0 0.0
    %2585 = vmatmul.mubr.f32.gmra.mxu0 %v2358
    %v2586 = vpop.f32.mrf.mxu0
    %v2587 = vadd.f32 %v2487, %v2586
    %v2588 = vpop.f32.mrf.mxu0
    %2589 = vmatprep.mubr.f32.mxu0 0.0
    %2590 = vmatmul.mubr.f32.gmra.mxu0 %v2359
    %v2591 = vpop.f32.mrf.mxu0
    %v2592 = vadd.f32 %v2492, %v2591
    %v2593 = vpop.f32.mrf.mxu0
    %2594 = vmatprep.mubr.f32.mxu0 0.0
    %2595 = vmatmul.mubr.f32.gmra.mxu0 %v2360
    %v2596 = vpop.f32.mrf.mxu0
    %v2597 = vadd.f32 %v2497, %v2596
    %v2598 = vpop.f32.mrf.mxu0
    %2599 = vdwg.mxu0
    %v2600 = vld [vmem:[%s4] sm:$0x1]
    %v2602 = vlaneseq
    %v2603 = vshrl.u32 %v2602, 7
    %v2604 = vsub.s32 0, %v2603
    %v2605 = vrot.slane %v2600, %v2604
    %v2607 = vadd.f32 %v2567, %v2605
    %v2608 = vadd.f32 %v2572, %v2605
    %v2609 = vadd.f32 %v2577, %v2605
    %v2610 = vadd.f32 %v2582, %v2605
    %v2611 = vadd.f32 %v2587, %v2605
    %v2612 = vadd.f32 %v2592, %v2605
    %v2613 = vadd.f32 %v2597, %v2605
    %v2614 = vmax.f32 %v2607, 0.0
    %v2615 = vmax.f32 %v2608, 0.0
    %v2616 = vmax.f32 %v2609, 0.0
    %v2617 = vmax.f32 %v2610, 0.0
    %v2618 = vmax.f32 %v2611, 0.0
    %v2619 = vmax.f32 %v2612, 0.0
    %v2620 = vmax.f32 %v2613, 0.0
    %2621 = vst.msk [vmem:[#allocation5] sm:$0xff] %vm2190, %v2614
    %2622 = vst.msk [vmem:[#allocation5 + $0x8] sm:$0xff] %vm2190, %v2615
    %2623 = vst.msk [vmem:[#allocation5 + $0x10] sm:$0xff] %vm2190, %v2616
    %2624 = vst.msk [vmem:[#allocation5 + $0x18] sm:$0xff] %vm2190, %v2617
    %2625 = vst.msk [vmem:[#allocation5 + $0x20] sm:$0xff] %vm2190, %v2618
    %2626 = vst.msk [vmem:[#allocation5 + $0x28] sm:$0xff] %vm2190, %v2619
    %vm2627 = vcmask 125952
    %2628 = vst.msk [vmem:[#allocation5 + $0x30] sm:$0xf] %vm2627, %v2620
    %v2629 = vld [vmem:[#allocation5] ss:$2 sm:$0xff]
    %v2630 = vld [vmem:[%s2212] ss:$2 sm:$0xff]
    %v2631 = vld [vmem:[%s2214] ss:$2 sm:$0xff]
    %v2632 = vld [vmem:[%s2216] ss:$2 sm:$0x3]
    %v2633 = vld [vmem:[%s2230] ss:$2 sm:$0xff]
    %v2634 = vld [vmem:[%s2232] ss:$2 sm:$0xff]
    %v2635 = vld [vmem:[%s2234] ss:$2 sm:$0xff]
    %v2636 = vld [vmem:[%s2236] ss:$2 sm:$0x3]
    %v2637 = vmax.f32 %v2629, %v2633
    %v2638 = vmax.f32 %v2630, %v2634
    %v2639 = vmax.f32 %v2631, %v2635
    %v2640 = vmax.f32 %v2632, %v2636
    %v2641 = vld [vmem:[%s5] sm:$0xff]
    %v2642 = vld [vmem:[%s5 + $0x8] sm:$0xff]
    %v2643 = vld [vmem:[%s5 + $0x10] sm:$0xff]
    %v2644 = vld [vmem:[%s5 + $0x18] sm:$0xff]
    %v2645 = vld [vmem:[%s5 + $0x20] sm:$0xff]
    %v2646 = vld [vmem:[%s5 + $0x28] sm:$0xff]
    %v2647 = vld [vmem:[%s5 + $0x30] sm:$0xff]
    %v2648 = vld [vmem:[%s5 + $0x38] sm:$0xff]
    %v2649 = vld [vmem:[%s5 + $0x40] sm:$0xff]
    %v2650 = vld [vmem:[%s5 + $0x48] sm:$0x7]
    %v2651 = vmul.f32 %v2641, %v2250
    %v2652 = vmul.f32 %v2642, %v2251
    %v2653 = vmul.f32 %v2643, %v2252
    %v2654 = vmul.f32 %v2644, %v2253
    %v2655 = vmul.f32 %v2645, %v2254
    %v2656 = vmul.f32 %v2646, %v2255
    %v2657 = vmul.f32 %v2647, %v2256
    %v2658 = vmul.f32 %v2648, %v2257
    %v2659 = vmul.f32 %v2649, %v2258
    %v2660 = vmul.f32 %v2650, %v2259
    %v2661 = vsel %vm2190, %v2651, 0.0
    %v2662 = vsel %vm2190, %v2652, 0.0
    %v2663 = vadd.f32 %v2661, %v2662
    %v2664 = vsel %vm2190, %v2653, 0.0
    %v2665 = vadd.f32 %v2663, %v2664
    %v2666 = vsel %vm2190, %v2654, 0.0
    %v2667 = vadd.f32 %v2665, %v2666
    %v2668 = vsel %vm2190, %v2655, 0.0
    %v2669 = vadd.f32 %v2667, %v2668
    %v2670 = vsel %vm2190, %v2656, 0.0
    %v2671 = vadd.f32 %v2669, %v2670
    %v2672 = vsel %vm2190, %v2657, 0.0
    %v2673 = vadd.f32 %v2671, %v2672
    %v2674 = vsel %vm2190, %v2658, 0.0
    %v2675 = vadd.f32 %v2673, %v2674
    %v2676 = vsel %vm2190, %v2659, 0.0
    %v2677 = vadd.f32 %v2675, %v2676
    %vm2678 = vcmask 124928
    %v2679 = vsel %vm2678, %v2660, 0.0
    %v2680 = vadd.f32 %v2677, %v2679
    %2681 = vadd.xlane.f32.xlu0 %v2680
    %v2682 = vpop.xlane.xlu0 %2681
    %v2683 = vrot.slane %v2682, 4
    %v2684 = vadd.f32 %v2682, %v2683
    %v2685 = vrot.slane %v2684, 2
    %v2686 = vadd.f32 %v2684, %v2685
    %v2687 = vrot.slane %v2686, 1
    %v2688 = vadd.f32 %v2686, %v2687
    %s2689 = vtos %v2688
    %s2690 = sld [smem:[#allocation6]]
    %s2691 = sadd.f32 %s2689, %s2690
    %v2692 = vld [vmem:[%s6] sm:$0xff]
    %v2693 = vld [vmem:[%s6 + $0x8] sm:$0xff]
    %v2694 = vld [vmem:[%s6 + $0x10] sm:$0xff]
    %v2695 = vld [vmem:[%s6 + $0x18] sm:$0x3]
    %v2696 = vmul.f32 %v2692, %v2637
    %v2697 = vmul.f32 %v2693, %v2638
    %v2698 = vmul.f32 %v2694, %v2639
    %v2699 = vmul.f32 %v2695, %v2640
    %v2700 = vsel %vm2190, %v2696, 0.0
    %v2701 = vsel %vm2190, %v2697, 0.0
    %v2702 = vadd.f32 %v2700, %v2701
    %v2703 = vsel %vm2190, %v2698, 0.0
    %v2704 = vadd.f32 %v2702, %v2703
    %vm2705 = vcmask 123904
    %v2706 = vsel %vm2705, %v2699, 0.0
    %v2707 = vadd.f32 %v2704, %v2706
    %2708 = vadd.xlane.f32.xlu0 %v2707
    %v2709 = vpop.xlane.xlu0 %2708
    %v2710 = vrot.slane %v2709, 4
    %v2711 = vadd.f32 %v2709, %v2710
    %v2712 = vrot.slane %v2711, 2
    %v2713 = vadd.f32 %v2711, %v2712
    %v2714 = vrot.slane %v2713, 1
    %v2715 = vadd.f32 %v2713, %v2714
    %s2716 = vtos %v2715
    %s2717 = sld [smem:[#allocation6 + $0x1]]
    %s2718 = sadd.f32 %s2716, %s2717
    %s2719 = scalar_lea.vmem %s6, 32
    %v2720 = vld [vmem:[%s2719] sm:$0xff]
    %v2721 = vld [vmem:[%s2719 + $0x8] sm:$0xff]
    %v2722 = vld [vmem:[%s2719 + $0x10] sm:$0xff]
    %v2723 = vld [vmem:[%s2719 + $0x18] sm:$0x3]
    %v2724 = vmul.f32 %v2720, %v2637
    %v2725 = vmul.f32 %v2721, %v2638
    %v2726 = vmul.f32 %v2722, %v2639
    %v2727 = vmul.f32 %v2723, %v2640
    %v2728 = vsel %vm2190, %v2724, 0.0
    %v2729 = vsel %vm2190, %v2725, 0.0
    %v2730 = vadd.f32 %v2728, %v2729
    %v2731 = vsel %vm2190, %v2726, 0.0
    %v2732 = vadd.f32 %v2730, %v2731
    %v2733 = vsel %vm2705, %v2727, 0.0
    %v2734 = vadd.f32 %v2732, %v2733
    %2735 = vadd.xlane.f32.xlu0 %v2734
    %v2736 = vpop.xlane.xlu0 %2735
    %v2737 = vrot.slane %v2736, 4
    %v2738 = vadd.f32 %v2736, %v2737
    %v2739 = vrot.slane %v2738, 2
    %v2740 = vadd.f32 %v2738, %v2739
    %v2741 = vrot.slane %v2740, 1
    %v2742 = vadd.f32 %v2740, %v2741
    %s2743 = vtos %v2742
    %s2744 = sld [smem:[#allocation6 + $0x2]]
    %s2745 = sadd.f32 %s2743, %s2744
    %vm2746 = vcmp.eq.s32.totalorder %v1467, 0
    %s2747 = smul.f32 %s2691, %s2718
    %s2748 = smul.f32 %s2691, %s2745
    %v2749 = vstv %s2747
    %v2750 = vstv %s2748
    %v2751 = vsel %vm2746, %v2749, %v2750
    %vm2752 = vcmask 8192
    %2753 = vst.msk [vmem:[#allocation9] sm:$0x1] %vm2752, %v2751
    %v2754 = vld [vmem:[#allocation2 + $0x198] sm:$0xff]
    %v2755 = vld [vmem:[#allocation2 + $0x1a0] sm:$0xff]
    %v2756 = vld [vmem:[#allocation2 + $0x1a8] sm:$0xff]
    %v2757 = vld [vmem:[#allocation2 + $0x1b0] sm:$0xff]
    %v2758 = vld [vmem:[#allocation2 + $0x1b8] sm:$0xff]
    %v2759 = vld [vmem:[#allocation2 + $0x1c0] sm:$0xff]
    %v2760 = vld [vmem:[#allocation2 + $0x1c8] sm:$0xff]
    %v2761 = vld [vmem:[#allocation2 + $0x1d0] sm:$0xff]
    %v2762 = vld [vmem:[#allocation2 + $0x1d8] sm:$0xff]
    %v2763 = vld [vmem:[#allocation2 + $0x1e0] sm:$0xff]
    %v2764 = vld [vmem:[#allocation2 + $0x1e8] sm:$0xff]
    %v2765 = vld [vmem:[#allocation2 + $0x1f0] sm:$0xff]
    %v2766 = vld [vmem:[#allocation2 + $0x1f8] sm:$0xff]
    %v2767 = vld [vmem:[#allocation2 + $0x200] sm:$0xff]
    %v2768 = vld [vmem:[#allocation2 + $0x208] sm:$0xff]
    %v2769 = vld [vmem:[#allocation2 + $0x210] sm:$0xff]
    %v2770 = vld [vmem:[#allocation2 + $0x199] sm:$0xff]
    %v2771 = vld [vmem:[#allocation2 + $0x1a1] sm:$0xff]
    %v2772 = vld [vmem:[#allocation2 + $0x1a9] sm:$0xff]
    %v2773 = vld [vmem:[#allocation2 + $0x1b1] sm:$0xff]
    %v2774 = vld [vmem:[#allocation2 + $0x1b9] sm:$0xff]
    %v2775 = vld [vmem:[#allocation2 + $0x1c1] sm:$0xff]
    %v2776 = vld [vmem:[#allocation2 + $0x1c9] sm:$0xff]
    %v2777 = vld [vmem:[#allocation2 + $0x1d1] sm:$0xff]
    %v2778 = vld [vmem:[#allocation2 + $0x1d9] sm:$0xff]
    %v2779 = vld [vmem:[#allocation2 + $0x1e1] sm:$0xff]
    %v2780 = vld [vmem:[#allocation2 + $0x1e9] sm:$0xff]
    %v2781 = vld [vmem:[#allocation2 + $0x1f1] sm:$0xff]
    %v2782 = vld [vmem:[#allocation2 + $0x1f9] sm:$0xff]
    %v2783 = vld [vmem:[#allocation2 + $0x201] sm:$0xff]
    %v2784 = vld [vmem:[#allocation2 + $0x209] sm:$0xff]
    %v2785 = vld [vmem:[#allocation2 + $0x211] sm:$0xff]
    %v2786 = vmax.f32 %v2754, %v2770
    %v2787 = vmax.f32 %v2755, %v2771
    %v2788 = vmax.f32 %v2756, %v2772
    %v2789 = vmax.f32 %v2757, %v2773
    %v2790 = vmax.f32 %v2758, %v2774
    %v2791 = vmax.f32 %v2759, %v2775
    %v2792 = vmax.f32 %v2760, %v2776
    %v2793 = vmax.f32 %v2761, %v2777
    %v2794 = vmax.f32 %v2762, %v2778
    %v2795 = vmax.f32 %v2763, %v2779
    %v2796 = vmax.f32 %v2764, %v2780
    %v2797 = vmax.f32 %v2765, %v2781
    %v2798 = vmax.f32 %v2766, %v2782
    %v2799 = vmax.f32 %v2767, %v2783
    %v2800 = vmax.f32 %v2768, %v2784
    %v2801 = vmax.f32 %v2769, %v2785
    %v2802 = vld [vmem:[#allocation2 + $0x19a] sm:$0xff]
    %v2803 = vld [vmem:[#allocation2 + $0x1a2] sm:$0xff]
    %v2804 = vld [vmem:[#allocation2 + $0x1aa] sm:$0xff]
    %v2805 = vld [vmem:[#allocation2 + $0x1b2] sm:$0xff]
    %v2806 = vld [vmem:[#allocation2 + $0x1ba] sm:$0xff]
    %v2807 = vld [vmem:[#allocation2 + $0x1c2] sm:$0xff]
    %v2808 = vld [vmem:[#allocation2 + $0x1ca] sm:$0xff]
    %v2809 = vld [vmem:[#allocation2 + $0x1d2] sm:$0xff]
    %v2810 = vld [vmem:[#allocation2 + $0x1da] sm:$0xff]
    %v2811 = vld [vmem:[#allocation2 + $0x1e2] sm:$0xff]
    %v2812 = vld [vmem:[#allocation2 + $0x1ea] sm:$0xff]
    %v2813 = vld [vmem:[#allocation2 + $0x1f2] sm:$0xff]
    %v2814 = vld [vmem:[#allocation2 + $0x1fa] sm:$0xff]
    %v2815 = vld [vmem:[#allocation2 + $0x202] sm:$0xff]
    %v2816 = vld [vmem:[#allocation2 + $0x20a] sm:$0xff]
    %v2817 = vld [vmem:[#allocation2 + $0x212] sm:$0xff]
    %v2818 = vmax.f32 %v2786, %v2802
    %v2819 = vmax.f32 %v2787, %v2803
    %v2820 = vmax.f32 %v2788, %v2804
    %v2821 = vmax.f32 %v2789, %v2805
    %v2822 = vmax.f32 %v2790, %v2806
    %v2823 = vmax.f32 %v2791, %v2807
    %v2824 = vmax.f32 %v2792, %v2808
    %v2825 = vmax.f32 %v2793, %v2809
    %v2826 = vmax.f32 %v2794, %v2810
    %v2827 = vmax.f32 %v2795, %v2811
    %v2828 = vmax.f32 %v2796, %v2812
    %v2829 = vmax.f32 %v2797, %v2813
    %v2830 = vmax.f32 %v2798, %v2814
    %v2831 = vmax.f32 %v2799, %v2815
    %v2832 = vmax.f32 %v2800, %v2816
    %v2833 = vmax.f32 %v2801, %v2817
    %2834 = vst [vmem:[#allocation3] sm:$0xff] %v2818
    %2835 = vst [vmem:[#allocation3 + $0x8] sm:$0xff] %v2819
    %2836 = vst [vmem:[#allocation3 + $0x10] sm:$0xff] %v2820
    %2837 = vst [vmem:[#allocation3 + $0x18] sm:$0xff] %v2821
    %2838 = vst [vmem:[#allocation3 + $0x20] sm:$0xff] %v2822
    %2839 = vst [vmem:[#allocation3 + $0x28] sm:$0xff] %v2823
    %2840 = vst [vmem:[#allocation3 + $0x30] sm:$0xff] %v2824
    %2841 = vst [vmem:[#allocation3 + $0x38] sm:$0xff] %v2825
    %2842 = vst [vmem:[#allocation3 + $0x40] sm:$0xff] %v2826
    %2843 = vst [vmem:[#allocation3 + $0x48] sm:$0xff] %v2827
    %2844 = vst [vmem:[#allocation3 + $0x50] sm:$0xff] %v2828
    %2845 = vst [vmem:[#allocation3 + $0x58] sm:$0xff] %v2829
    %2846 = vst [vmem:[#allocation3 + $0x60] sm:$0xff] %v2830
    %2847 = vst [vmem:[#allocation3 + $0x68] sm:$0xff] %v2831
    %2848 = vst [vmem:[#allocation3 + $0x70] sm:$0xff] %v2832
    %2849 = vst [vmem:[#allocation3 + $0x78] sm:$0xff] %v2833
    %v2850 = vld [vmem:[#allocation2 + $0x218] sm:$0xff]
    %v2851 = vld [vmem:[#allocation2 + $0x220] sm:$0xff]
    %v2852 = vld [vmem:[#allocation2 + $0x228] sm:$0xff]
    %v2853 = vld [vmem:[#allocation2 + $0x230] sm:$0xff]
    %v2854 = vld [vmem:[#allocation2 + $0x238] sm:$0xff]
    %v2855 = vld [vmem:[#allocation2 + $0x240] sm:$0xff]
    %v2856 = vld [vmem:[#allocation2 + $0x248] sm:$0xff]
    %v2857 = vld [vmem:[#allocation2 + $0x250] sm:$0xff]
    %v2858 = vld [vmem:[#allocation2 + $0x258] sm:$0xff]
    %v2859 = vld [vmem:[#allocation2 + $0x260] sm:$0xff]
    %v2860 = vld [vmem:[#allocation2 + $0x268] sm:$0xff]
    %v2861 = vld [vmem:[#allocation2 + $0x270] sm:$0xff]
    %v2862 = vld [vmem:[#allocation2 + $0x278] sm:$0xff]
    %v2863 = vld [vmem:[#allocation2 + $0x280] sm:$0xff]
    %v2864 = vld [vmem:[#allocation2 + $0x288] sm:$0xff]
    %v2865 = vld [vmem:[#allocation2 + $0x290] sm:$0xff]
    %v2866 = vld [vmem:[#allocation2 + $0x219] sm:$0xff]
    %v2867 = vld [vmem:[#allocation2 + $0x221] sm:$0xff]
    %v2868 = vld [vmem:[#allocation2 + $0x229] sm:$0xff]
    %v2869 = vld [vmem:[#allocation2 + $0x231] sm:$0xff]
    %v2870 = vld [vmem:[#allocation2 + $0x239] sm:$0xff]
    %v2871 = vld [vmem:[#allocation2 + $0x241] sm:$0xff]
    %v2872 = vld [vmem:[#allocation2 + $0x249] sm:$0xff]
    %v2873 = vld [vmem:[#allocation2 + $0x251] sm:$0xff]
    %v2874 = vld [vmem:[#allocation2 + $0x259] sm:$0xff]
    %v2875 = vld [vmem:[#allocation2 + $0x261] sm:$0xff]
    %v2876 = vld [vmem:[#allocation2 + $0x269] sm:$0xff]
    %v2877 = vld [vmem:[#allocation2 + $0x271] sm:$0xff]
    %v2878 = vld [vmem:[#allocation2 + $0x279] sm:$0xff]
    %v2879 = vld [vmem:[#allocation2 + $0x281] sm:$0xff]
    %v2880 = vld [vmem:[#allocation2 + $0x289] sm:$0xff]
    %v2881 = vld [vmem:[#allocation2 + $0x291] sm:$0xff]
    %v2882 = vmax.f32 %v2850, %v2866
    %v2883 = vmax.f32 %v2851, %v2867
    %v2884 = vmax.f32 %v2852, %v2868
    %v2885 = vmax.f32 %v2853, %v2869
    %v2886 = vmax.f32 %v2854, %v2870
    %v2887 = vmax.f32 %v2855, %v2871
    %v2888 = vmax.f32 %v2856, %v2872
    %v2889 = vmax.f32 %v2857, %v2873
    %v2890 = vmax.f32 %v2858, %v2874
    %v2891 = vmax.f32 %v2859, %v2875
    %v2892 = vmax.f32 %v2860, %v2876
    %v2893 = vmax.f32 %v2861, %v2877
    %v2894 = vmax.f32 %v2862, %v2878
    %v2895 = vmax.f32 %v2863, %v2879
    %v2896 = vmax.f32 %v2864, %v2880
    %v2897 = vmax.f32 %v2865, %v2881
    %v2898 = vld [vmem:[#allocation2 + $0x21a] sm:$0xff]
    %v2899 = vld [vmem:[#allocation2 + $0x222] sm:$0xff]
    %v2900 = vld [vmem:[#allocation2 + $0x22a] sm:$0xff]
    %v2901 = vld [vmem:[#allocation2 + $0x232] sm:$0xff]
    %v2902 = vld [vmem:[#allocation2 + $0x23a] sm:$0xff]
    %v2903 = vld [vmem:[#allocation2 + $0x242] sm:$0xff]
    %v2904 = vld [vmem:[#allocation2 + $0x24a] sm:$0xff]
    %v2905 = vld [vmem:[#allocation2 + $0x252] sm:$0xff]
    %v2906 = vld [vmem:[#allocation2 + $0x25a] sm:$0xff]
    %v2907 = vld [vmem:[#allocation2 + $0x262] sm:$0xff]
    %v2908 = vld [vmem:[#allocation2 + $0x26a] sm:$0xff]
    %v2909 = vld [vmem:[#allocation2 + $0x272] sm:$0xff]
    %v2910 = vld [vmem:[#allocation2 + $0x27a] sm:$0xff]
    %v2911 = vld [vmem:[#allocation2 + $0x282] sm:$0xff]
    %v2912 = vld [vmem:[#allocation2 + $0x28a] sm:$0xff]
    %v2913 = vld [vmem:[#allocation2 + $0x292] sm:$0xff]
    %v2914 = vmax.f32 %v2882, %v2898
    %v2915 = vmax.f32 %v2883, %v2899
    %v2916 = vmax.f32 %v2884, %v2900
    %v2917 = vmax.f32 %v2885, %v2901
    %v2918 = vmax.f32 %v2886, %v2902
    %v2919 = vmax.f32 %v2887, %v2903
    %v2920 = vmax.f32 %v2888, %v2904
    %v2921 = vmax.f32 %v2889, %v2905
    %v2922 = vmax.f32 %v2890, %v2906
    %v2923 = vmax.f32 %v2891, %v2907
    %v2924 = vmax.f32 %v2892, %v2908
    %v2925 = vmax.f32 %v2893, %v2909
    %v2926 = vmax.f32 %v2894, %v2910
    %v2927 = vmax.f32 %v2895, %v2911
    %v2928 = vmax.f32 %v2896, %v2912
    %v2929 = vmax.f32 %v2897, %v2913
    %2930 = vst [vmem:[#allocation3 + $0x80] sm:$0xff] %v2914
    %2931 = vst [vmem:[#allocation3 + $0x88] sm:$0xff] %v2915
    %2932 = vst [vmem:[#allocation3 + $0x90] sm:$0xff] %v2916
    %2933 = vst [vmem:[#allocation3 + $0x98] sm:$0xff] %v2917
    %2934 = vst [vmem:[#allocation3 + $0xa0] sm:$0xff] %v2918
    %2935 = vst [vmem:[#allocation3 + $0xa8] sm:$0xff] %v2919
    %2936 = vst [vmem:[#allocation3 + $0xb0] sm:$0xff] %v2920
    %2937 = vst [vmem:[#allocation3 + $0xb8] sm:$0xff] %v2921
    %2938 = vst [vmem:[#allocation3 + $0xc0] sm:$0xff] %v2922
    %2939 = vst [vmem:[#allocation3 + $0xc8] sm:$0xff] %v2923
    %2940 = vst [vmem:[#allocation3 + $0xd0] sm:$0xff] %v2924
    %2941 = vst [vmem:[#allocation3 + $0xd8] sm:$0xff] %v2925
    %2942 = vst [vmem:[#allocation3 + $0xe0] sm:$0xff] %v2926
    %2943 = vst [vmem:[#allocation3 + $0xe8] sm:$0xff] %v2927
    %2944 = vst [vmem:[#allocation3 + $0xf0] sm:$0xff] %v2928
    %2945 = vst [vmem:[#allocation3 + $0xf8] sm:$0xff] %v2929
    %v2946 = vld [vmem:[#allocation2 + $0x298] sm:$0xff]
    %v2947 = vld [vmem:[#allocation2 + $0x2a0] sm:$0xff]
    %v2948 = vld [vmem:[#allocation2 + $0x2a8] sm:$0xff]
    %v2949 = vld [vmem:[#allocation2 + $0x2b0] sm:$0xff]
    %v2950 = vld [vmem:[#allocation2 + $0x2b8] sm:$0xff]
    %v2951 = vld [vmem:[#allocation2 + $0x2c0] sm:$0x3]
    %v2952 = vld [vmem:[#allocation2 + $0x299] sm:$0xff]
    %v2953 = vld [vmem:[#allocation2 + $0x2a1] sm:$0xff]
    %v2954 = vld [vmem:[#allocation2 + $0x2a9] sm:$0xff]
    %v2955 = vld [vmem:[#allocation2 + $0x2b1] sm:$0xff]
    %v2956 = vld [vmem:[#allocation2 + $0x2b9] sm:$0xff]
    %v2957 = vld [vmem:[#allocation2 + $0x2c1] sm:$0x3]
    %v2958 = vmax.f32 %v2946, %v2952
    %v2959 = vmax.f32 %v2947, %v2953
    %v2960 = vmax.f32 %v2948, %v2954
    %v2961 = vmax.f32 %v2949, %v2955
    %v2962 = vmax.f32 %v2950, %v2956
    %v2963 = vmax.f32 %v2951, %v2957
    %v2964 = vld [vmem:[#allocation2 + $0x29a] sm:$0xff]
    %v2965 = vld [vmem:[#allocation2 + $0x2a2] sm:$0xff]
    %v2966 = vld [vmem:[#allocation2 + $0x2aa] sm:$0xff]
    %v2967 = vld [vmem:[#allocation2 + $0x2b2] sm:$0xff]
    %v2968 = vld [vmem:[#allocation2 + $0x2ba] sm:$0xff]
    %v2969 = vld [vmem:[#allocation2 + $0x2c2] sm:$0x3]
    %v2970 = vmax.f32 %v2958, %v2964
    %v2971 = vmax.f32 %v2959, %v2965
    %v2972 = vmax.f32 %v2960, %v2966
    %v2973 = vmax.f32 %v2961, %v2967
    %v2974 = vmax.f32 %v2962, %v2968
    %v2975 = vmax.f32 %v2963, %v2969
    %2976 = vst [vmem:[#allocation3 + $0x100] sm:$0xff] %v2970
    %2977 = vst [vmem:[#allocation3 + $0x108] sm:$0xff] %v2971
    %2978 = vst [vmem:[#allocation3 + $0x110] sm:$0xff] %v2972
    %2979 = vst [vmem:[#allocation3 + $0x118] sm:$0xff] %v2973
    %2980 = vst [vmem:[#allocation3 + $0x120] sm:$0xff] %v2974
    %2981 = vst [vmem:[#allocation3 + $0x128] sm:$0x3] %v2975
    %2982 = vst [vmem:[#allocation4] sm:$0x1] 0.0
    %v2983 = vld [vmem:[#allocation3] ss:$2 sm:$0xff]
    %v2984 = vld [vmem:[%s1698] ss:$2 sm:$0xff]
    %v2985 = vld [vmem:[%s1700] ss:$2 sm:$0xff]
    %v2986 = vld [vmem:[%s1702] ss:$2 sm:$0xff]
    %v2987 = vld [vmem:[%s1704] ss:$2 sm:$0xff]
    %v2988 = vld [vmem:[%s1706] ss:$2 sm:$0xff]
    %v2989 = vld [vmem:[%s1708] ss:$2 sm:$0xff]
    %v2990 = vld [vmem:[%s1710] ss:$2 sm:$0xff]
    %v2991 = vld [vmem:[%s1712] ss:$2 sm:$0xff]
    %v2992 = vld [vmem:[%s1714] ss:$2 sm:$0xff]
    %v2993 = vld [vmem:[%s1716] ss:$2 sm:$0xff]
    %v2994 = vld [vmem:[%s1718] ss:$2 sm:$0xff]
    %v2995 = vld [vmem:[%s1720] ss:$2 sm:$0xff]
    %v2996 = vld [vmem:[%s1722] ss:$2 sm:$0xff]
    %v2997 = vld [vmem:[%s1724] ss:$2 sm:$0xff]
    %v2998 = vld [vmem:[%s1726] ss:$2 sm:$0xff]
    %v2999 = vld [vmem:[%s1728] ss:$2 sm:$0xff]
    %v3000 = vld [vmem:[%s1730] ss:$2 sm:$0xff]
    %v3001 = vld [vmem:[%s1732] ss:$2 sm:$0x1f]
    %3002 = vst [vmem:[#allocation4 + $0x1] sm:$0xff] %v2983
    %3003 = vst [vmem:[#allocation4 + $0x9] sm:$0xff] %v2984
    %3004 = vst [vmem:[#allocation4 + $0x11] sm:$0xff] %v2985
    %3005 = vst [vmem:[#allocation4 + $0x19] sm:$0xff] %v2986
    %3006 = vst [vmem:[#allocation4 + $0x21] sm:$0xff] %v2987
    %3007 = vst [vmem:[#allocation4 + $0x29] sm:$0xff] %v2988
    %3008 = vst [vmem:[#allocation4 + $0x31] sm:$0xff] %v2989
    %3009 = vst [vmem:[#allocation4 + $0x39] sm:$0xff] %v2990
    %3010 = vst [vmem:[#allocation4 + $0x41] sm:$0xff] %v2991
    %3011 = vst [vmem:[#allocation4 + $0x49] sm:$0xff] %v2992
    %3012 = vst [vmem:[#allocation4 + $0x51] sm:$0xff] %v2993
    %3013 = vst [vmem:[#allocation4 + $0x59] sm:$0xff] %v2994
    %3014 = vst [vmem:[#allocation4 + $0x61] sm:$0xff] %v2995
    %3015 = vst [vmem:[#allocation4 + $0x69] sm:$0xff] %v2996
    %3016 = vst [vmem:[#allocation4 + $0x71] sm:$0xff] %v2997
    %3017 = vst [vmem:[#allocation4 + $0x79] sm:$0xff] %v2998
    %3018 = vst [vmem:[#allocation4 + $0x81] sm:$0xff] %v2999
    %3019 = vst [vmem:[#allocation4 + $0x89] sm:$0xff] %v3000
    %3020 = vst [vmem:[#allocation4 + $0x91] sm:$0x1f] %v3001
    %3021 = vst [vmem:[#allocation4 + $0x96] sm:$0x1] 0.0
    %v3022 = vld [vmem:[#allocation4] sm:$0xff]
    %v3023 = vld [vmem:[#allocation4 + $0x8] sm:$0xff]
    %v3024 = vld [vmem:[#allocation4 + $0x10] sm:$0xff]
    %v3025 = vld [vmem:[#allocation4 + $0x18] sm:$0xff]
    %v3026 = vld [vmem:[#allocation4 + $0x20] sm:$0xff]
    %v3027 = vld [vmem:[#allocation4 + $0x28] sm:$0xff]
    %v3028 = vld [vmem:[#allocation4 + $0x30] sm:$0xff]
    %v3029 = vld [vmem:[#allocation4 + $0x38] sm:$0xff]
    %v3030 = vld [vmem:[#allocation4 + $0x40] sm:$0xff]
    %v3031 = vld [vmem:[#allocation4 + $0x48] sm:$0xff]
    %v3032 = vld [vmem:[#allocation4 + $0x50] sm:$0xff]
    %v3033 = vld [vmem:[#allocation4 + $0x58] sm:$0xff]
    %v3034 = vld [vmem:[#allocation4 + $0x60] sm:$0xff]
    %v3035 = vld [vmem:[#allocation4 + $0x68] sm:$0xff]
    %v3036 = vld [vmem:[#allocation4 + $0x70] sm:$0xff]
    %v3037 = vld [vmem:[#allocation4 + $0x78] sm:$0xff]
    %v3038 = vld [vmem:[#allocation4 + $0x80] sm:$0xff]
    %v3039 = vld [vmem:[#allocation4 + $0x88] sm:$0xff]
    %v3040 = vld [vmem:[#allocation4 + $0x90] sm:$0x3f]
    %v3041 = vld [vmem:[%s3] sm:$0xff]
    %v3042 = vld [vmem:[%s3 + $0x8] sm:$0xff]
    %v3043 = vld [vmem:[%s3 + $0x10] sm:$0xff]
    %v3044 = vld [vmem:[%s3 + $0x18] sm:$0xff]
    %v3045 = vld [vmem:[%s3 + $0x20] sm:$0xff]
    %v3046 = vld [vmem:[%s3 + $0x28] sm:$0xff]
    %v3047 = vld [vmem:[%s3 + $0x30] sm:$0xff]
    %v3048 = vld [vmem:[%s3 + $0x38] sm:$0xff]
    %v3049 = vld [vmem:[%s3 + $0x40] sm:$0xff]
    %v3050 = vld [vmem:[%s3 + $0x48] sm:$0xff]
    %v3051 = vld [vmem:[%s3 + $0x50] sm:$0xff]
    %v3052 = vld [vmem:[%s3 + $0x58] sm:$0xff]
    %v3053 = vld [vmem:[%s3 + $0x60] sm:$0xff]
    %v3054 = vld [vmem:[%s3 + $0x68] sm:$0xff]
    %v3055 = vld [vmem:[%s3 + $0x70] sm:$0xff]
    %v3056 = vld [vmem:[%s3 + $0x78] sm:$0xff]
    %v3057 = vld [vmem:[#allocation4 + $0x1] sm:$0xff]
    %v3058 = vld [vmem:[#allocation4 + $0x9] sm:$0xff]
    %v3059 = vld [vmem:[#allocation4 + $0x11] sm:$0xff]
    %v3060 = vld [vmem:[#allocation4 + $0x19] sm:$0xff]
    %v3061 = vld [vmem:[#allocation4 + $0x21] sm:$0xff]
    %v3062 = vld [vmem:[#allocation4 + $0x29] sm:$0xff]
    %v3063 = vld [vmem:[#allocation4 + $0x31] sm:$0xff]
    %v3064 = vld [vmem:[#allocation4 + $0x39] sm:$0xff]
    %v3065 = vld [vmem:[#allocation4 + $0x41] sm:$0xff]
    %v3066 = vld [vmem:[#allocation4 + $0x49] sm:$0xff]
    %v3067 = vld [vmem:[#allocation4 + $0x51] sm:$0xff]
    %v3068 = vld [vmem:[#allocation4 + $0x59] sm:$0xff]
    %v3069 = vld [vmem:[#allocation4 + $0x61] sm:$0xff]
    %v3070 = vld [vmem:[#allocation4 + $0x69] sm:$0xff]
    %v3071 = vld [vmem:[#allocation4 + $0x71] sm:$0xff]
    %v3072 = vld [vmem:[#allocation4 + $0x79] sm:$0xff]
    %v3073 = vld [vmem:[#allocation4 + $0x81] sm:$0xff]
    %v3074 = vld [vmem:[#allocation4 + $0x89] sm:$0xff]
    %v3075 = vld [vmem:[#allocation4 + $0x91] sm:$0x3f]
    %v3076 = vld [vmem:[%s1808] sm:$0xff]
    %v3077 = vld [vmem:[%s1808 + $0x8] sm:$0xff]
    %v3078 = vld [vmem:[%s1808 + $0x10] sm:$0xff]
    %v3079 = vld [vmem:[%s1808 + $0x18] sm:$0xff]
    %v3080 = vld [vmem:[%s1808 + $0x20] sm:$0xff]
    %v3081 = vld [vmem:[%s1808 + $0x28] sm:$0xff]
    %v3082 = vld [vmem:[%s1808 + $0x30] sm:$0xff]
    %v3083 = vld [vmem:[%s1808 + $0x38] sm:$0xff]
    %v3084 = vld [vmem:[%s1808 + $0x40] sm:$0xff]
    %v3085 = vld [vmem:[%s1808 + $0x48] sm:$0xff]
    %v3086 = vld [vmem:[%s1808 + $0x50] sm:$0xff]
    %v3087 = vld [vmem:[%s1808 + $0x58] sm:$0xff]
    %v3088 = vld [vmem:[%s1808 + $0x60] sm:$0xff]
    %v3089 = vld [vmem:[%s1808 + $0x68] sm:$0xff]
    %v3090 = vld [vmem:[%s1808 + $0x70] sm:$0xff]
    %v3091 = vld [vmem:[%s1808 + $0x78] sm:$0xff]
    %3092 = vmatprep.subr.mxu0 0.0
    %3093 = vmatpush1.msra.mxu0 %v3091
    %3094 = vmatprep.subr.mxu0 0.0
    %3095 = vmatpush1.msra.mxu0 %v3090
    %3096 = vmatprep.subr.mxu0 0.0
    %3097 = vmatpush1.msra.mxu0 %v3089
    %3098 = vmatprep.subr.mxu0 0.0
    %3099 = vmatpush1.msra.mxu0 %v3088
    %3100 = vmatprep.subr.mxu0 0.0
    %3101 = vmatpush1.msra.mxu0 %v3087
    %3102 = vmatprep.subr.mxu0 0.0
    %3103 = vmatpush1.msra.mxu0 %v3086
    %3104 = vmatprep.subr.mxu0 0.0
    %3105 = vmatpush1.msra.mxu0 %v3085
    %3106 = vmatprep.subr.mxu0 0.0
    %3107 = vmatpush1.msra.mxu0 %v3084
    %3108 = vmatprep.subr.mxu0 0.0
    %3109 = vmatpush1.msra.mxu0 %v3083
    %3110 = vmatprep.subr.mxu0 0.0
    %3111 = vmatpush1.msra.mxu0 %v3082
    %3112 = vmatprep.subr.mxu0 0.0
    %3113 = vmatpush1.msra.mxu0 %v3081
    %3114 = vmatprep.subr.mxu0 0.0
    %3115 = vmatpush1.msra.mxu0 %v3080
    %3116 = vmatprep.subr.mxu0 0.0
    %3117 = vmatpush1.msra.mxu0 %v3079
    %3118 = vmatprep.subr.mxu0 0.0
    %3119 = vmatpush1.msra.mxu0 %v3078
    %3120 = vmatprep.subr.mxu0 0.0
    %3121 = vmatpush1.msra.mxu0 %v3077
    %3122 = vmatprep.subr.mxu0 0.0
    %3123 = vmatpush1.msra.mxu0 %v3076
    %3124 = vmatprep.subr.mxu0 0.0
    %3125 = vmatpush2.msra.mxu0 0.0
    %3126 = vmatprep.subr.mxu0 0.0
    %3127 = vmatpush2.msra.mxu0 0.0
    %3128 = vmatprep.subr.mxu0 0.0
    %3129 = vmatpush2.msra.mxu0 0.0
    %3130 = vmatprep.subr.mxu0 0.0
    %3131 = vmatpush2.msra.mxu0 0.0
    %3132 = vmatprep.subr.mxu0 0.0
    %3133 = vmatpush2.msra.mxu0 0.0
    %3134 = vmatprep.subr.mxu0 0.0
    %3135 = vmatpush2.msra.mxu0 0.0
    %3136 = vmatprep.subr.mxu0 0.0
    %3137 = vmatpush2.msra.mxu0 0.0
    %3138 = vmatprep.subr.mxu0 0.0
    %3139 = vmatpush2.msra.mxu0 0.0
    %3140 = vmatprep.subr.mxu0 0.0
    %3141 = vmatpush2.msra.mxu0 0.0
    %3142 = vmatprep.subr.mxu0 0.0
    %3143 = vmatpush2.msra.mxu0 0.0
    %3144 = vmatprep.subr.mxu0 0.0
    %3145 = vmatpush2.msra.mxu0 0.0
    %3146 = vmatprep.subr.mxu0 0.0
    %3147 = vmatpush2.msra.mxu0 0.0
    %3148 = vmatprep.subr.mxu0 0.0
    %3149 = vmatpush2.msra.mxu0 0.0
    %3150 = vmatprep.subr.mxu0 0.0
    %3151 = vmatpush2.msra.mxu0 0.0
    %3152 = vmatprep.subr.mxu0 0.0
    %3153 = vmatpush2.msra.mxu0 0.0
    %3154 = vmatprep.subr.mxu0 0.0
    %3155 = vmatpush2.msra.mxu0 0.0
    %3156 = vmatprep.mubr.f32.mxu0 0.0
    %3157 = vmatmul.mubr.f32.gmra.mxu0 %v3057
    %v3158 = vpop.f32.mrf.mxu0
    %v3159 = vadd.f32 0.0, %v3158
    %v3160 = vpop.f32.mrf.mxu0
    %3161 = vmatprep.mubr.f32.mxu0 0.0
    %3162 = vmatmul.mubr.f32.gmra.mxu0 %v3058
    %v3163 = vpop.f32.mrf.mxu0
    %v3164 = vadd.f32 0.0, %v3163
    %v3165 = vpop.f32.mrf.mxu0
    %3166 = vmatprep.mubr.f32.mxu0 0.0
    %3167 = vmatmul.mubr.f32.gmra.mxu0 %v3059
    %v3168 = vpop.f32.mrf.mxu0
    %v3169 = vadd.f32 0.0, %v3168
    %v3170 = vpop.f32.mrf.mxu0
    %3171 = vmatprep.mubr.f32.mxu0 0.0
    %3172 = vmatmul.mubr.f32.gmra.mxu0 %v3060
    %v3173 = vpop.f32.mrf.mxu0
    %v3174 = vadd.f32 0.0, %v3173
    %v3175 = vpop.f32.mrf.mxu0
    %3176 = vmatprep.mubr.f32.mxu0 0.0
    %3177 = vmatmul.mubr.f32.gmra.mxu0 %v3061
    %v3178 = vpop.f32.mrf.mxu0
    %v3179 = vadd.f32 0.0, %v3178
    %v3180 = vpop.f32.mrf.mxu0
    %3181 = vmatprep.mubr.f32.mxu0 0.0
    %3182 = vmatmul.mubr.f32.gmra.mxu0 %v3062
    %v3183 = vpop.f32.mrf.mxu0
    %v3184 = vadd.f32 0.0, %v3183
    %v3185 = vpop.f32.mrf.mxu0
    %3186 = vmatprep.mubr.f32.mxu0 0.0
    %3187 = vmatmul.mubr.f32.gmra.mxu0 %v3063
    %v3188 = vpop.f32.mrf.mxu0
    %v3189 = vadd.f32 0.0, %v3188
    %v3190 = vpop.f32.mrf.mxu0
    %3191 = vmatprep.mubr.f32.mxu0 0.0
    %3192 = vmatmul.mubr.f32.gmra.mxu0 %v3064
    %v3193 = vpop.f32.mrf.mxu0
    %v3194 = vadd.f32 0.0, %v3193
    %v3195 = vpop.f32.mrf.mxu0
    %3196 = vmatprep.mubr.f32.mxu0 0.0
    %3197 = vmatmul.mubr.f32.gmra.mxu0 %v3065
    %v3198 = vpop.f32.mrf.mxu0
    %v3199 = vadd.f32 0.0, %v3198
    %v3200 = vpop.f32.mrf.mxu0
    %3201 = vmatprep.mubr.f32.mxu0 0.0
    %3202 = vmatmul.mubr.f32.gmra.mxu0 %v3066
    %v3203 = vpop.f32.mrf.mxu0
    %v3204 = vadd.f32 0.0, %v3203
    %v3205 = vpop.f32.mrf.mxu0
    %3206 = vmatprep.mubr.f32.mxu0 0.0
    %3207 = vmatmul.mubr.f32.gmra.mxu0 %v3067
    %v3208 = vpop.f32.mrf.mxu0
    %v3209 = vadd.f32 0.0, %v3208
    %v3210 = vpop.f32.mrf.mxu0
    %3211 = vmatprep.mubr.f32.mxu0 0.0
    %3212 = vmatmul.mubr.f32.gmra.mxu0 %v3068
    %v3213 = vpop.f32.mrf.mxu0
    %v3214 = vadd.f32 0.0, %v3213
    %v3215 = vpop.f32.mrf.mxu0
    %3216 = vmatprep.mubr.f32.mxu0 0.0
    %3217 = vmatmul.mubr.f32.gmra.mxu0 %v3069
    %v3218 = vpop.f32.mrf.mxu0
    %v3219 = vadd.f32 0.0, %v3218
    %v3220 = vpop.f32.mrf.mxu0
    %3221 = vmatprep.mubr.f32.mxu0 0.0
    %3222 = vmatmul.mubr.f32.gmra.mxu0 %v3070
    %v3223 = vpop.f32.mrf.mxu0
    %v3224 = vadd.f32 0.0, %v3223
    %v3225 = vpop.f32.mrf.mxu0
    %3226 = vmatprep.mubr.f32.mxu0 0.0
    %3227 = vmatmul.mubr.f32.gmra.mxu0 %v3071
    %v3228 = vpop.f32.mrf.mxu0
    %v3229 = vadd.f32 0.0, %v3228
    %v3230 = vpop.f32.mrf.mxu0
    %3231 = vmatprep.mubr.f32.mxu0 0.0
    %3232 = vmatmul.mubr.f32.gmra.mxu0 %v3072
    %v3233 = vpop.f32.mrf.mxu0
    %v3234 = vadd.f32 0.0, %v3233
    %v3235 = vpop.f32.mrf.mxu0
    %3236 = vmatprep.mubr.f32.mxu0 0.0
    %3237 = vmatmul.mubr.f32.gmra.mxu0 %v3073
    %v3238 = vpop.f32.mrf.mxu0
    %v3239 = vadd.f32 0.0, %v3238
    %v3240 = vpop.f32.mrf.mxu0
    %3241 = vmatprep.mubr.f32.mxu0 0.0
    %3242 = vmatmul.mubr.f32.gmra.mxu0 %v3074
    %v3243 = vpop.f32.mrf.mxu0
    %v3244 = vadd.f32 0.0, %v3243
    %v3245 = vpop.f32.mrf.mxu0
    %3246 = vmatprep.mubr.f32.mxu0 0.0
    %3247 = vmatmul.mubr.f32.gmra.mxu0 %v3075
    %v3248 = vpop.f32.mrf.mxu0
    %v3249 = vadd.f32 0.0, %v3248
    %v3250 = vpop.f32.mrf.mxu0
    %3251 = vdwg.mxu0
    %3252 = vmatprep.subr.mxu0 0.0
    %3253 = vmatpush1.msra.mxu0 %v3056
    %3254 = vmatprep.subr.mxu0 0.0
    %3255 = vmatpush1.msra.mxu0 %v3055
    %3256 = vmatprep.subr.mxu0 0.0
    %3257 = vmatpush1.msra.mxu0 %v3054
    %3258 = vmatprep.subr.mxu0 0.0
    %3259 = vmatpush1.msra.mxu0 %v3053
    %3260 = vmatprep.subr.mxu0 0.0
    %3261 = vmatpush1.msra.mxu0 %v3052
    %3262 = vmatprep.subr.mxu0 0.0
    %3263 = vmatpush1.msra.mxu0 %v3051
    %3264 = vmatprep.subr.mxu0 0.0
    %3265 = vmatpush1.msra.mxu0 %v3050
    %3266 = vmatprep.subr.mxu0 0.0
    %3267 = vmatpush1.msra.mxu0 %v3049
    %3268 = vmatprep.subr.mxu0 0.0
    %3269 = vmatpush1.msra.mxu0 %v3048
    %3270 = vmatprep.subr.mxu0 0.0
    %3271 = vmatpush1.msra.mxu0 %v3047
    %3272 = vmatprep.subr.mxu0 0.0
    %3273 = vmatpush1.msra.mxu0 %v3046
    %3274 = vmatprep.subr.mxu0 0.0
    %3275 = vmatpush1.msra.mxu0 %v3045
    %3276 = vmatprep.subr.mxu0 0.0
    %3277 = vmatpush1.msra.mxu0 %v3044
    %3278 = vmatprep.subr.mxu0 0.0
    %3279 = vmatpush1.msra.mxu0 %v3043
    %3280 = vmatprep.subr.mxu0 0.0
    %3281 = vmatpush1.msra.mxu0 %v3042
    %3282 = vmatprep.subr.mxu0 0.0
    %3283 = vmatpush1.msra.mxu0 %v3041
    %3284 = vmatprep.subr.mxu0 0.0
    %3285 = vmatpush2.msra.mxu0 0.0
    %3286 = vmatprep.subr.mxu0 0.0
    %3287 = vmatpush2.msra.mxu0 0.0
    %3288 = vmatprep.subr.mxu0 0.0
    %3289 = vmatpush2.msra.mxu0 0.0
    %3290 = vmatprep.subr.mxu0 0.0
    %3291 = vmatpush2.msra.mxu0 0.0
    %3292 = vmatprep.subr.mxu0 0.0
    %3293 = vmatpush2.msra.mxu0 0.0
    %3294 = vmatprep.subr.mxu0 0.0
    %3295 = vmatpush2.msra.mxu0 0.0
    %3296 = vmatprep.subr.mxu0 0.0
    %3297 = vmatpush2.msra.mxu0 0.0
    %3298 = vmatprep.subr.mxu0 0.0
    %3299 = vmatpush2.msra.mxu0 0.0
    %3300 = vmatprep.subr.mxu0 0.0
    %3301 = vmatpush2.msra.mxu0 0.0
    %3302 = vmatprep.subr.mxu0 0.0
    %3303 = vmatpush2.msra.mxu0 0.0
    %3304 = vmatprep.subr.mxu0 0.0
    %3305 = vmatpush2.msra.mxu0 0.0
    %3306 = vmatprep.subr.mxu0 0.0
    %3307 = vmatpush2.msra.mxu0 0.0
    %3308 = vmatprep.subr.mxu0 0.0
    %3309 = vmatpush2.msra.mxu0 0.0
    %3310 = vmatprep.subr.mxu0 0.0
    %3311 = vmatpush2.msra.mxu0 0.0
    %3312 = vmatprep.subr.mxu0 0.0
    %3313 = vmatpush2.msra.mxu0 0.0
    %3314 = vmatprep.subr.mxu0 0.0
    %3315 = vmatpush2.msra.mxu0 0.0
    %3316 = vmatprep.mubr.f32.mxu0 0.0
    %3317 = vmatmul.mubr.f32.gmra.mxu0 %v3022
    %v3318 = vpop.f32.mrf.mxu0
    %v3319 = vadd.f32 %v3159, %v3318
    %v3320 = vpop.f32.mrf.mxu0
    %3321 = vmatprep.mubr.f32.mxu0 0.0
    %3322 = vmatmul.mubr.f32.gmra.mxu0 %v3023
    %v3323 = vpop.f32.mrf.mxu0
    %v3324 = vadd.f32 %v3164, %v3323
    %v3325 = vpop.f32.mrf.mxu0
    %3326 = vmatprep.mubr.f32.mxu0 0.0
    %3327 = vmatmul.mubr.f32.gmra.mxu0 %v3024
    %v3328 = vpop.f32.mrf.mxu0
    %v3329 = vadd.f32 %v3169, %v3328
    %v3330 = vpop.f32.mrf.mxu0
    %3331 = vmatprep.mubr.f32.mxu0 0.0
    %3332 = vmatmul.mubr.f32.gmra.mxu0 %v3025
    %v3333 = vpop.f32.mrf.mxu0
    %v3334 = vadd.f32 %v3174, %v3333
    %v3335 = vpop.f32.mrf.mxu0
    %3336 = vmatprep.mubr.f32.mxu0 0.0
    %3337 = vmatmul.mubr.f32.gmra.mxu0 %v3026
    %v3338 = vpop.f32.mrf.mxu0
    %v3339 = vadd.f32 %v3179, %v3338
    %v3340 = vpop.f32.mrf.mxu0
    %3341 = vmatprep.mubr.f32.mxu0 0.0
    %3342 = vmatmul.mubr.f32.gmra.mxu0 %v3027
    %v3343 = vpop.f32.mrf.mxu0
    %v3344 = vadd.f32 %v3184, %v3343
    %v3345 = vpop.f32.mrf.mxu0
    %3346 = vmatprep.mubr.f32.mxu0 0.0
    %3347 = vmatmul.mubr.f32.gmra.mxu0 %v3028
    %v3348 = vpop.f32.mrf.mxu0
    %v3349 = vadd.f32 %v3189, %v3348
    %v3350 = vpop.f32.mrf.mxu0
    %3351 = vmatprep.mubr.f32.mxu0 0.0
    %3352 = vmatmul.mubr.f32.gmra.mxu0 %v3029
    %v3353 = vpop.f32.mrf.mxu0
    %v3354 = vadd.f32 %v3194, %v3353
    %v3355 = vpop.f32.mrf.mxu0
    %3356 = vmatprep.mubr.f32.mxu0 0.0
    %3357 = vmatmul.mubr.f32.gmra.mxu0 %v3030
    %v3358 = vpop.f32.mrf.mxu0
    %v3359 = vadd.f32 %v3199, %v3358
    %v3360 = vpop.f32.mrf.mxu0
    %3361 = vmatprep.mubr.f32.mxu0 0.0
    %3362 = vmatmul.mubr.f32.gmra.mxu0 %v3031
    %v3363 = vpop.f32.mrf.mxu0
    %v3364 = vadd.f32 %v3204, %v3363
    %v3365 = vpop.f32.mrf.mxu0
    %3366 = vmatprep.mubr.f32.mxu0 0.0
    %3367 = vmatmul.mubr.f32.gmra.mxu0 %v3032
    %v3368 = vpop.f32.mrf.mxu0
    %v3369 = vadd.f32 %v3209, %v3368
    %v3370 = vpop.f32.mrf.mxu0
    %3371 = vmatprep.mubr.f32.mxu0 0.0
    %3372 = vmatmul.mubr.f32.gmra.mxu0 %v3033
    %v3373 = vpop.f32.mrf.mxu0
    %v3374 = vadd.f32 %v3214, %v3373
    %v3375 = vpop.f32.mrf.mxu0
    %3376 = vmatprep.mubr.f32.mxu0 0.0
    %3377 = vmatmul.mubr.f32.gmra.mxu0 %v3034
    %v3378 = vpop.f32.mrf.mxu0
    %v3379 = vadd.f32 %v3219, %v3378
    %v3380 = vpop.f32.mrf.mxu0
    %3381 = vmatprep.mubr.f32.mxu0 0.0
    %3382 = vmatmul.mubr.f32.gmra.mxu0 %v3035
    %v3383 = vpop.f32.mrf.mxu0
    %v3384 = vadd.f32 %v3224, %v3383
    %v3385 = vpop.f32.mrf.mxu0
    %3386 = vmatprep.mubr.f32.mxu0 0.0
    %3387 = vmatmul.mubr.f32.gmra.mxu0 %v3036
    %v3388 = vpop.f32.mrf.mxu0
    %v3389 = vadd.f32 %v3229, %v3388
    %v3390 = vpop.f32.mrf.mxu0
    %3391 = vmatprep.mubr.f32.mxu0 0.0
    %3392 = vmatmul.mubr.f32.gmra.mxu0 %v3037
    %v3393 = vpop.f32.mrf.mxu0
    %v3394 = vadd.f32 %v3234, %v3393
    %v3395 = vpop.f32.mrf.mxu0
    %3396 = vmatprep.mubr.f32.mxu0 0.0
    %3397 = vmatmul.mubr.f32.gmra.mxu0 %v3038
    %v3398 = vpop.f32.mrf.mxu0
    %v3399 = vadd.f32 %v3239, %v3398
    %v3400 = vpop.f32.mrf.mxu0
    %3401 = vmatprep.mubr.f32.mxu0 0.0
    %3402 = vmatmul.mubr.f32.gmra.mxu0 %v3039
    %v3403 = vpop.f32.mrf.mxu0
    %v3404 = vadd.f32 %v3244, %v3403
    %v3405 = vpop.f32.mrf.mxu0
    %3406 = vmatprep.mubr.f32.mxu0 0.0
    %3407 = vmatmul.mubr.f32.gmra.mxu0 %v3040
    %v3408 = vpop.f32.mrf.mxu0
    %v3409 = vadd.f32 %v3249, %v3408
    %v3410 = vpop.f32.mrf.mxu0
    %3411 = vdwg.mxu0
    %v3412 = vld [vmem:[%s4] sm:$0x1]
    %v3414 = vlaneseq
    %v3415 = vshrl.u32 %v3414, 7
    %v3416 = vsub.s32 0, %v3415
    %v3417 = vrot.slane %v3412, %v3416
    %v3419 = vadd.f32 %v3319, %v3417
    %v3420 = vadd.f32 %v3324, %v3417
    %v3421 = vadd.f32 %v3329, %v3417
    %v3422 = vadd.f32 %v3334, %v3417
    %v3423 = vadd.f32 %v3339, %v3417
    %v3424 = vadd.f32 %v3344, %v3417
    %v3425 = vadd.f32 %v3349, %v3417
    %v3426 = vadd.f32 %v3354, %v3417
    %v3427 = vadd.f32 %v3359, %v3417
    %v3428 = vadd.f32 %v3364, %v3417
    %v3429 = vadd.f32 %v3369, %v3417
    %v3430 = vadd.f32 %v3374, %v3417
    %v3431 = vadd.f32 %v3379, %v3417
    %v3432 = vadd.f32 %v3384, %v3417
    %v3433 = vadd.f32 %v3389, %v3417
    %v3434 = vadd.f32 %v3394, %v3417
    %v3435 = vadd.f32 %v3399, %v3417
    %v3436 = vadd.f32 %v3404, %v3417
    %v3437 = vadd.f32 %v3409, %v3417
    %v3438 = vmax.f32 %v3419, 0.0
    %v3439 = vmax.f32 %v3420, 0.0
    %v3440 = vmax.f32 %v3421, 0.0
    %v3441 = vmax.f32 %v3422, 0.0
    %v3442 = vmax.f32 %v3423, 0.0
    %v3443 = vmax.f32 %v3424, 0.0
    %v3444 = vmax.f32 %v3425, 0.0
    %v3445 = vmax.f32 %v3426, 0.0
    %v3446 = vmax.f32 %v3427, 0.0
    %v3447 = vmax.f32 %v3428, 0.0
    %v3448 = vmax.f32 %v3429, 0.0
    %v3449 = vmax.f32 %v3430, 0.0
    %v3450 = vmax.f32 %v3431, 0.0
    %v3451 = vmax.f32 %v3432, 0.0
    %v3452 = vmax.f32 %v3433, 0.0
    %v3453 = vmax.f32 %v3434, 0.0
    %v3454 = vmax.f32 %v3435, 0.0
    %v3455 = vmax.f32 %v3436, 0.0
    %v3456 = vmax.f32 %v3437, 0.0
    %3457 = vst.msk [vmem:[#allocation5] sm:$0xff] %vm2190, %v3438
    %3458 = vst.msk [vmem:[#allocation5 + $0x8] sm:$0xff] %vm2190, %v3439
    %3459 = vst.msk [vmem:[#allocation5 + $0x10] sm:$0xff] %vm2190, %v3440
    %3460 = vst.msk [vmem:[#allocation5 + $0x18] sm:$0xff] %vm2190, %v3441
    %3461 = vst.msk [vmem:[#allocation5 + $0x20] sm:$0xff] %vm2190, %v3442
    %3462 = vst.msk [vmem:[#allocation5 + $0x28] sm:$0xff] %vm2190, %v3443
    %3463 = vst.msk [vmem:[#allocation5 + $0x30] sm:$0xff] %vm2190, %v3444
    %3464 = vst.msk [vmem:[#allocation5 + $0x38] sm:$0xff] %vm2190, %v3445
    %3465 = vst.msk [vmem:[#allocation5 + $0x40] sm:$0xff] %vm2190, %v3446
    %3466 = vst.msk [vmem:[#allocation5 + $0x48] sm:$0xff] %vm2190, %v3447
    %3467 = vst.msk [vmem:[#allocation5 + $0x50] sm:$0xff] %vm2190, %v3448
    %3468 = vst.msk [vmem:[#allocation5 + $0x58] sm:$0xff] %vm2190, %v3449
    %3469 = vst.msk [vmem:[#allocation5 + $0x60] sm:$0xff] %vm2190, %v3450
    %3470 = vst.msk [vmem:[#allocation5 + $0x68] sm:$0xff] %vm2190, %v3451
    %3471 = vst.msk [vmem:[#allocation5 + $0x70] sm:$0xff] %vm2190, %v3452
    %3472 = vst.msk [vmem:[#allocation5 + $0x78] sm:$0xff] %vm2190, %v3453
    %3473 = vst.msk [vmem:[#allocation5 + $0x80] sm:$0xff] %vm2190, %v3454
    %3474 = vst.msk [vmem:[#allocation5 + $0x88] sm:$0xff] %vm2190, %v3455
    %3475 = vst.msk [vmem:[#allocation5 + $0x90] sm:$0x3f] %vm2209, %v3456
    %v3476 = vld [vmem:[#allocation5] ss:$2 sm:$0xff]
    %v3477 = vld [vmem:[%s2212] ss:$2 sm:$0xff]
    %v3478 = vld [vmem:[%s2214] ss:$2 sm:$0xff]
    %v3479 = vld [vmem:[%s2216] ss:$2 sm:$0xff]
    %v3480 = vld [vmem:[%s2218] ss:$2 sm:$0xff]
    %v3481 = vld [vmem:[%s2220] ss:$2 sm:$0xff]
    %v3482 = vld [vmem:[%s2222] ss:$2 sm:$0xff]
    %v3483 = vld [vmem:[%s2224] ss:$2 sm:$0xff]
    %v3484 = vld [vmem:[%s2226] ss:$2 sm:$0xff]
    %v3485 = vld [vmem:[%s2228] ss:$2 sm:$0x7]
    %v3486 = vld [vmem:[%s2230] ss:$2 sm:$0xff]
    %v3487 = vld [vmem:[%s2232] ss:$2 sm:$0xff]
    %v3488 = vld [vmem:[%s2234] ss:$2 sm:$0xff]
    %v3489 = vld [vmem:[%s2236] ss:$2 sm:$0xff]
    %v3490 = vld [vmem:[%s2238] ss:$2 sm:$0xff]
    %v3491 = vld [vmem:[%s2240] ss:$2 sm:$0xff]
    %v3492 = vld [vmem:[%s2242] ss:$2 sm:$0xff]
    %v3493 = vld [vmem:[%s2244] ss:$2 sm:$0xff]
    %v3494 = vld [vmem:[%s2246] ss:$2 sm:$0xff]
    %v3495 = vld [vmem:[%s2248] ss:$2 sm:$0x7]
    %v3496 = vmax.f32 %v3476, %v3486
    %v3497 = vmax.f32 %v3477, %v3487
    %v3498 = vmax.f32 %v3478, %v3488
    %v3499 = vmax.f32 %v3479, %v3489
    %v3500 = vmax.f32 %v3480, %v3490
    %v3501 = vmax.f32 %v3481, %v3491
    %v3502 = vmax.f32 %v3482, %v3492
    %v3503 = vmax.f32 %v3483, %v3493
    %v3504 = vmax.f32 %v3484, %v3494
    %v3505 = vmax.f32 %v3485, %v3495
    %v3506 = vld [vmem:[#allocation2 + $0x2c4] sm:$0xff]
    %v3507 = vld [vmem:[#allocation2 + $0x2cc] sm:$0xff]
    %v3508 = vld [vmem:[#allocation2 + $0x2d4] sm:$0xff]
    %v3509 = vld [vmem:[#allocation2 + $0x2dc] sm:$0xff]
    %v3510 = vld [vmem:[#allocation2 + $0x2e4] sm:$0xff]
    %v3511 = vld [vmem:[#allocation2 + $0x2ec] sm:$0xff]
    %v3512 = vld [vmem:[#allocation2 + $0x2f4] sm:$0xff]
    %v3513 = vld [vmem:[#allocation2 + $0x2fc] sm:$0xff]
    %v3514 = vld [vmem:[#allocation2 + $0x304] sm:$0xff]
    %v3515 = vld [vmem:[#allocation2 + $0x30c] sm:$0xff]
    %v3516 = vld [vmem:[#allocation2 + $0x314] sm:$0xff]
    %v3517 = vld [vmem:[#allocation2 + $0x31c] sm:$0xff]
    %v3518 = vld [vmem:[#allocation2 + $0x324] sm:$0x3f]
    %v3519 = vld [vmem:[#allocation2 + $0x2c5] sm:$0xff]
    %v3520 = vld [vmem:[#allocation2 + $0x2cd] sm:$0xff]
    %v3521 = vld [vmem:[#allocation2 + $0x2d5] sm:$0xff]
    %v3522 = vld [vmem:[#allocation2 + $0x2dd] sm:$0xff]
    %v3523 = vld [vmem:[#allocation2 + $0x2e5] sm:$0xff]
    %v3524 = vld [vmem:[#allocation2 + $0x2ed] sm:$0xff]
    %v3525 = vld [vmem:[#allocation2 + $0x2f5] sm:$0xff]
    %v3526 = vld [vmem:[#allocation2 + $0x2fd] sm:$0xff]
    %v3527 = vld [vmem:[#allocation2 + $0x305] sm:$0xff]
    %v3528 = vld [vmem:[#allocation2 + $0x30d] sm:$0xff]
    %v3529 = vld [vmem:[#allocation2 + $0x315] sm:$0xff]
    %v3530 = vld [vmem:[#allocation2 + $0x31d] sm:$0xff]
    %v3531 = vld [vmem:[#allocation2 + $0x325] sm:$0x3f]
    %v3532 = vmax.f32 %v3506, %v3519
    %v3533 = vmax.f32 %v3507, %v3520
    %v3534 = vmax.f32 %v3508, %v3521
    %v3535 = vmax.f32 %v3509, %v3522
    %v3536 = vmax.f32 %v3510, %v3523
    %v3537 = vmax.f32 %v3511, %v3524
    %v3538 = vmax.f32 %v3512, %v3525
    %v3539 = vmax.f32 %v3513, %v3526
    %v3540 = vmax.f32 %v3514, %v3527
    %v3541 = vmax.f32 %v3515, %v3528
    %v3542 = vmax.f32 %v3516, %v3529
    %v3543 = vmax.f32 %v3517, %v3530
    %v3544 = vmax.f32 %v3518, %v3531
    %v3545 = vld [vmem:[#allocation2 + $0x2c6] sm:$0xff]
    %v3546 = vld [vmem:[#allocation2 + $0x2ce] sm:$0xff]
    %v3547 = vld [vmem:[#allocation2 + $0x2d6] sm:$0xff]
    %v3548 = vld [vmem:[#allocation2 + $0x2de] sm:$0xff]
    %v3549 = vld [vmem:[#allocation2 + $0x2e6] sm:$0xff]
    %v3550 = vld [vmem:[#allocation2 + $0x2ee] sm:$0xff]
    %v3551 = vld [vmem:[#allocation2 + $0x2f6] sm:$0xff]
    %v3552 = vld [vmem:[#allocation2 + $0x2fe] sm:$0xff]
    %v3553 = vld [vmem:[#allocation2 + $0x306] sm:$0xff]
    %v3554 = vld [vmem:[#allocation2 + $0x30e] sm:$0xff]
    %v3555 = vld [vmem:[#allocation2 + $0x316] sm:$0xff]
    %v3556 = vld [vmem:[#allocation2 + $0x31e] sm:$0xff]
    %v3557 = vld [vmem:[#allocation2 + $0x326] sm:$0x3f]
    %v3558 = vmax.f32 %v3532, %v3545
    %v3559 = vmax.f32 %v3533, %v3546
    %v3560 = vmax.f32 %v3534, %v3547
    %v3561 = vmax.f32 %v3535, %v3548
    %v3562 = vmax.f32 %v3536, %v3549
    %v3563 = vmax.f32 %v3537, %v3550
    %v3564 = vmax.f32 %v3538, %v3551
    %v3565 = vmax.f32 %v3539, %v3552
    %v3566 = vmax.f32 %v3540, %v3553
    %v3567 = vmax.f32 %v3541, %v3554
    %v3568 = vmax.f32 %v3542, %v3555
    %v3569 = vmax.f32 %v3543, %v3556
    %v3570 = vmax.f32 %v3544, %v3557
    %3571 = vst [vmem:[#allocation3] sm:$0xff] %v3558
    %3572 = vst [vmem:[#allocation3 + $0x8] sm:$0xff] %v3559
    %3573 = vst [vmem:[#allocation3 + $0x10] sm:$0xff] %v3560
    %3574 = vst [vmem:[#allocation3 + $0x18] sm:$0xff] %v3561
    %3575 = vst [vmem:[#allocation3 + $0x20] sm:$0xff] %v3562
    %3576 = vst [vmem:[#allocation3 + $0x28] sm:$0xff] %v3563
    %3577 = vst [vmem:[#allocation3 + $0x30] sm:$0xff] %v3564
    %3578 = vst [vmem:[#allocation3 + $0x38] sm:$0xff] %v3565
    %3579 = vst [vmem:[#allocation3 + $0x40] sm:$0xff] %v3566
    %3580 = vst [vmem:[#allocation3 + $0x48] sm:$0xff] %v3567
    %3581 = vst [vmem:[#allocation3 + $0x50] sm:$0xff] %v3568
    %3582 = vst [vmem:[#allocation3 + $0x58] sm:$0xff] %v3569
    %3583 = vst [vmem:[#allocation3 + $0x60] sm:$0x3f] %v3570
    %3584 = vst [vmem:[#allocation4] sm:$0x1] 0.0
    %v3585 = vld [vmem:[#allocation3] ss:$2 sm:$0xff]
    %v3586 = vld [vmem:[%s1698] ss:$2 sm:$0xff]
    %v3587 = vld [vmem:[%s1700] ss:$2 sm:$0xff]
    %v3588 = vld [vmem:[%s1702] ss:$2 sm:$0xff]
    %v3589 = vld [vmem:[%s1704] ss:$2 sm:$0xff]
    %v3590 = vld [vmem:[%s1706] ss:$2 sm:$0xff]
    %v3591 = vld [vmem:[%s1708] ss:$2 sm:$0x7]
    %3592 = vst [vmem:[#allocation4 + $0x1] sm:$0xff] %v3585
    %3593 = vst [vmem:[#allocation4 + $0x9] sm:$0xff] %v3586
    %3594 = vst [vmem:[#allocation4 + $0x11] sm:$0xff] %v3587
    %3595 = vst [vmem:[#allocation4 + $0x19] sm:$0xff] %v3588
    %3596 = vst [vmem:[#allocation4 + $0x21] sm:$0xff] %v3589
    %3597 = vst [vmem:[#allocation4 + $0x29] sm:$0xff] %v3590
    %3598 = vst [vmem:[#allocation4 + $0x31] sm:$0x7] %v3591
    %3599 = vst [vmem:[#allocation4 + $0x34] sm:$0x1] 0.0
    %v3600 = vld [vmem:[#allocation4] sm:$0xff]
    %v3601 = vld [vmem:[#allocation4 + $0x8] sm:$0xff]
    %v3602 = vld [vmem:[#allocation4 + $0x10] sm:$0xff]
    %v3603 = vld [vmem:[#allocation4 + $0x18] sm:$0xff]
    %v3604 = vld [vmem:[#allocation4 + $0x20] sm:$0xff]
    %v3605 = vld [vmem:[#allocation4 + $0x28] sm:$0xff]
    %v3606 = vld [vmem:[#allocation4 + $0x30] sm:$0xf]
    %v3607 = vld [vmem:[%s3] sm:$0xff]
    %v3608 = vld [vmem:[%s3 + $0x8] sm:$0xff]
    %v3609 = vld [vmem:[%s3 + $0x10] sm:$0xff]
    %v3610 = vld [vmem:[%s3 + $0x18] sm:$0xff]
    %v3611 = vld [vmem:[%s3 + $0x20] sm:$0xff]
    %v3612 = vld [vmem:[%s3 + $0x28] sm:$0xff]
    %v3613 = vld [vmem:[%s3 + $0x30] sm:$0xff]
    %v3614 = vld [vmem:[%s3 + $0x38] sm:$0xff]
    %v3615 = vld [vmem:[%s3 + $0x40] sm:$0xff]
    %v3616 = vld [vmem:[%s3 + $0x48] sm:$0xff]
    %v3617 = vld [vmem:[%s3 + $0x50] sm:$0xff]
    %v3618 = vld [vmem:[%s3 + $0x58] sm:$0xff]
    %v3619 = vld [vmem:[%s3 + $0x60] sm:$0xff]
    %v3620 = vld [vmem:[%s3 + $0x68] sm:$0xff]
    %v3621 = vld [vmem:[%s3 + $0x70] sm:$0xff]
    %v3622 = vld [vmem:[%s3 + $0x78] sm:$0xff]
    %v3623 = vld [vmem:[#allocation4 + $0x1] sm:$0xff]
    %v3624 = vld [vmem:[#allocation4 + $0x9] sm:$0xff]
    %v3625 = vld [vmem:[#allocation4 + $0x11] sm:$0xff]
    %v3626 = vld [vmem:[#allocation4 + $0x19] sm:$0xff]
    %v3627 = vld [vmem:[#allocation4 + $0x21] sm:$0xff]
    %v3628 = vld [vmem:[#allocation4 + $0x29] sm:$0xff]
    %v3629 = vld [vmem:[#allocation4 + $0x31] sm:$0xf]
    %v3630 = vld [vmem:[%s1808] sm:$0xff]
    %v3631 = vld [vmem:[%s1808 + $0x8] sm:$0xff]
    %v3632 = vld [vmem:[%s1808 + $0x10] sm:$0xff]
    %v3633 = vld [vmem:[%s1808 + $0x18] sm:$0xff]
    %v3634 = vld [vmem:[%s1808 + $0x20] sm:$0xff]
    %v3635 = vld [vmem:[%s1808 + $0x28] sm:$0xff]
    %v3636 = vld [vmem:[%s1808 + $0x30] sm:$0xff]
    %v3637 = vld [vmem:[%s1808 + $0x38] sm:$0xff]
    %v3638 = vld [vmem:[%s1808 + $0x40] sm:$0xff]
    %v3639 = vld [vmem:[%s1808 + $0x48] sm:$0xff]
    %v3640 = vld [vmem:[%s1808 + $0x50] sm:$0xff]
    %v3641 = vld [vmem:[%s1808 + $0x58] sm:$0xff]
    %v3642 = vld [vmem:[%s1808 + $0x60] sm:$0xff]
    %v3643 = vld [vmem:[%s1808 + $0x68] sm:$0xff]
    %v3644 = vld [vmem:[%s1808 + $0x70] sm:$0xff]
    %v3645 = vld [vmem:[%s1808 + $0x78] sm:$0xff]
    %3646 = vmatprep.subr.mxu0 0.0
    %3647 = vmatpush1.msra.mxu0 %v3645
    %3648 = vmatprep.subr.mxu0 0.0
    %3649 = vmatpush1.msra.mxu0 %v3644
    %3650 = vmatprep.subr.mxu0 0.0
    %3651 = vmatpush1.msra.mxu0 %v3643
    %3652 = vmatprep.subr.mxu0 0.0
    %3653 = vmatpush1.msra.mxu0 %v3642
    %3654 = vmatprep.subr.mxu0 0.0
    %3655 = vmatpush1.msra.mxu0 %v3641
    %3656 = vmatprep.subr.mxu0 0.0
    %3657 = vmatpush1.msra.mxu0 %v3640
    %3658 = vmatprep.subr.mxu0 0.0
    %3659 = vmatpush1.msra.mxu0 %v3639
    %3660 = vmatprep.subr.mxu0 0.0
    %3661 = vmatpush1.msra.mxu0 %v3638
    %3662 = vmatprep.subr.mxu0 0.0
    %3663 = vmatpush1.msra.mxu0 %v3637
    %3664 = vmatprep.subr.mxu0 0.0
    %3665 = vmatpush1.msra.mxu0 %v3636
    %3666 = vmatprep.subr.mxu0 0.0
    %3667 = vmatpush1.msra.mxu0 %v3635
    %3668 = vmatprep.subr.mxu0 0.0
    %3669 = vmatpush1.msra.mxu0 %v3634
    %3670 = vmatprep.subr.mxu0 0.0
    %3671 = vmatpush1.msra.mxu0 %v3633
    %3672 = vmatprep.subr.mxu0 0.0
    %3673 = vmatpush1.msra.mxu0 %v3632
    %3674 = vmatprep.subr.mxu0 0.0
    %3675 = vmatpush1.msra.mxu0 %v3631
    %3676 = vmatprep.subr.mxu0 0.0
    %3677 = vmatpush1.msra.mxu0 %v3630
    %3678 = vmatprep.subr.mxu0 0.0
    %3679 = vmatpush2.msra.mxu0 0.0
    %3680 = vmatprep.subr.mxu0 0.0
    %3681 = vmatpush2.msra.mxu0 0.0
    %3682 = vmatprep.subr.mxu0 0.0
    %3683 = vmatpush2.msra.mxu0 0.0
    %3684 = vmatprep.subr.mxu0 0.0
    %3685 = vmatpush2.msra.mxu0 0.0
    %3686 = vmatprep.subr.mxu0 0.0
    %3687 = vmatpush2.msra.mxu0 0.0
    %3688 = vmatprep.subr.mxu0 0.0
    %3689 = vmatpush2.msra.mxu0 0.0
    %3690 = vmatprep.subr.mxu0 0.0
    %3691 = vmatpush2.msra.mxu0 0.0
    %3692 = vmatprep.subr.mxu0 0.0
    %3693 = vmatpush2.msra.mxu0 0.0
    %3694 = vmatprep.subr.mxu0 0.0
    %3695 = vmatpush2.msra.mxu0 0.0
    %3696 = vmatprep.subr.mxu0 0.0
    %3697 = vmatpush2.msra.mxu0 0.0
    %3698 = vmatprep.subr.mxu0 0.0
    %3699 = vmatpush2.msra.mxu0 0.0
    %3700 = vmatprep.subr.mxu0 0.0
    %3701 = vmatpush2.msra.mxu0 0.0
    %3702 = vmatprep.subr.mxu0 0.0
    %3703 = vmatpush2.msra.mxu0 0.0
    %3704 = vmatprep.subr.mxu0 0.0
    %3705 = vmatpush2.msra.mxu0 0.0
    %3706 = vmatprep.subr.mxu0 0.0
    %3707 = vmatpush2.msra.mxu0 0.0
    %3708 = vmatprep.subr.mxu0 0.0
    %3709 = vmatpush2.msra.mxu0 0.0
    %3710 = vmatprep.mubr.f32.mxu0 0.0
    %3711 = vmatmul.mubr.f32.gmra.mxu0 %v3623
    %v3712 = vpop.f32.mrf.mxu0
    %v3713 = vadd.f32 0.0, %v3712
    %v3714 = vpop.f32.mrf.mxu0
    %3715 = vmatprep.mubr.f32.mxu0 0.0
    %3716 = vmatmul.mubr.f32.gmra.mxu0 %v3624
    %v3717 = vpop.f32.mrf.mxu0
    %v3718 = vadd.f32 0.0, %v3717
    %v3719 = vpop.f32.mrf.mxu0
    %3720 = vmatprep.mubr.f32.mxu0 0.0
    %3721 = vmatmul.mubr.f32.gmra.mxu0 %v3625
    %v3722 = vpop.f32.mrf.mxu0
    %v3723 = vadd.f32 0.0, %v3722
    %v3724 = vpop.f32.mrf.mxu0
    %3725 = vmatprep.mubr.f32.mxu0 0.0
    %3726 = vmatmul.mubr.f32.gmra.mxu0 %v3626
    %v3727 = vpop.f32.mrf.mxu0
    %v3728 = vadd.f32 0.0, %v3727
    %v3729 = vpop.f32.mrf.mxu0
    %3730 = vmatprep.mubr.f32.mxu0 0.0
    %3731 = vmatmul.mubr.f32.gmra.mxu0 %v3627
    %v3732 = vpop.f32.mrf.mxu0
    %v3733 = vadd.f32 0.0, %v3732
    %v3734 = vpop.f32.mrf.mxu0
    %3735 = vmatprep.mubr.f32.mxu0 0.0
    %3736 = vmatmul.mubr.f32.gmra.mxu0 %v3628
    %v3737 = vpop.f32.mrf.mxu0
    %v3738 = vadd.f32 0.0, %v3737
    %v3739 = vpop.f32.mrf.mxu0
    %3740 = vmatprep.mubr.f32.mxu0 0.0
    %3741 = vmatmul.mubr.f32.gmra.mxu0 %v3629
    %v3742 = vpop.f32.mrf.mxu0
    %v3743 = vadd.f32 0.0, %v3742
    %v3744 = vpop.f32.mrf.mxu0
    %3745 = vdwg.mxu0
    %3746 = vmatprep.subr.mxu0 0.0
    %3747 = vmatpush1.msra.mxu0 %v3622
    %3748 = vmatprep.subr.mxu0 0.0
    %3749 = vmatpush1.msra.mxu0 %v3621
    %3750 = vmatprep.subr.mxu0 0.0
    %3751 = vmatpush1.msra.mxu0 %v3620
    %3752 = vmatprep.subr.mxu0 0.0
    %3753 = vmatpush1.msra.mxu0 %v3619
    %3754 = vmatprep.subr.mxu0 0.0
    %3755 = vmatpush1.msra.mxu0 %v3618
    %3756 = vmatprep.subr.mxu0 0.0
    %3757 = vmatpush1.msra.mxu0 %v3617
    %3758 = vmatprep.subr.mxu0 0.0
    %3759 = vmatpush1.msra.mxu0 %v3616
    %3760 = vmatprep.subr.mxu0 0.0
    %3761 = vmatpush1.msra.mxu0 %v3615
    %3762 = vmatprep.subr.mxu0 0.0
    %3763 = vmatpush1.msra.mxu0 %v3614
    %3764 = vmatprep.subr.mxu0 0.0
    %3765 = vmatpush1.msra.mxu0 %v3613
    %3766 = vmatprep.subr.mxu0 0.0
    %3767 = vmatpush1.msra.mxu0 %v3612
    %3768 = vmatprep.subr.mxu0 0.0
    %3769 = vmatpush1.msra.mxu0 %v3611
    %3770 = vmatprep.subr.mxu0 0.0
    %3771 = vmatpush1.msra.mxu0 %v3610
    %3772 = vmatprep.subr.mxu0 0.0
    %3773 = vmatpush1.msra.mxu0 %v3609
    %3774 = vmatprep.subr.mxu0 0.0
    %3775 = vmatpush1.msra.mxu0 %v3608
    %3776 = vmatprep.subr.mxu0 0.0
    %3777 = vmatpush1.msra.mxu0 %v3607
    %3778 = vmatprep.subr.mxu0 0.0
    %3779 = vmatpush2.msra.mxu0 0.0
    %3780 = vmatprep.subr.mxu0 0.0
    %3781 = vmatpush2.msra.mxu0 0.0
    %3782 = vmatprep.subr.mxu0 0.0
    %3783 = vmatpush2.msra.mxu0 0.0
    %3784 = vmatprep.subr.mxu0 0.0
    %3785 = vmatpush2.msra.mxu0 0.0
    %3786 = vmatprep.subr.mxu0 0.0
    %3787 = vmatpush2.msra.mxu0 0.0
    %3788 = vmatprep.subr.mxu0 0.0
    %3789 = vmatpush2.msra.mxu0 0.0
    %3790 = vmatprep.subr.mxu0 0.0
    %3791 = vmatpush2.msra.mxu0 0.0
    %3792 = vmatprep.subr.mxu0 0.0
    %3793 = vmatpush2.msra.mxu0 0.0
    %3794 = vmatprep.subr.mxu0 0.0
    %3795 = vmatpush2.msra.mxu0 0.0
    %3796 = vmatprep.subr.mxu0 0.0
    %3797 = vmatpush2.msra.mxu0 0.0
    %3798 = vmatprep.subr.mxu0 0.0
    %3799 = vmatpush2.msra.mxu0 0.0
    %3800 = vmatprep.subr.mxu0 0.0
    %3801 = vmatpush2.msra.mxu0 0.0
    %3802 = vmatprep.subr.mxu0 0.0
    %3803 = vmatpush2.msra.mxu0 0.0
    %3804 = vmatprep.subr.mxu0 0.0
    %3805 = vmatpush2.msra.mxu0 0.0
    %3806 = vmatprep.subr.mxu0 0.0
    %3807 = vmatpush2.msra.mxu0 0.0
    %3808 = vmatprep.subr.mxu0 0.0
    %3809 = vmatpush2.msra.mxu0 0.0
    %3810 = vmatprep.mubr.f32.mxu0 0.0
    %3811 = vmatmul.mubr.f32.gmra.mxu0 %v3600
    %v3812 = vpop.f32.mrf.mxu0
    %v3813 = vadd.f32 %v3713, %v3812
    %v3814 = vpop.f32.mrf.mxu0
    %3815 = vmatprep.mubr.f32.mxu0 0.0
    %3816 = vmatmul.mubr.f32.gmra.mxu0 %v3601
    %v3817 = vpop.f32.mrf.mxu0
    %v3818 = vadd.f32 %v3718, %v3817
    %v3819 = vpop.f32.mrf.mxu0
    %3820 = vmatprep.mubr.f32.mxu0 0.0
    %3821 = vmatmul.mubr.f32.gmra.mxu0 %v3602
    %v3822 = vpop.f32.mrf.mxu0
    %v3823 = vadd.f32 %v3723, %v3822
    %v3824 = vpop.f32.mrf.mxu0
    %3825 = vmatprep.mubr.f32.mxu0 0.0
    %3826 = vmatmul.mubr.f32.gmra.mxu0 %v3603
    %v3827 = vpop.f32.mrf.mxu0
    %v3828 = vadd.f32 %v3728, %v3827
    %v3829 = vpop.f32.mrf.mxu0
    %3830 = vmatprep.mubr.f32.mxu0 0.0
    %3831 = vmatmul.mubr.f32.gmra.mxu0 %v3604
    %v3832 = vpop.f32.mrf.mxu0
    %v3833 = vadd.f32 %v3733, %v3832
    %v3834 = vpop.f32.mrf.mxu0
    %3835 = vmatprep.mubr.f32.mxu0 0.0
    %3836 = vmatmul.mubr.f32.gmra.mxu0 %v3605
    %v3837 = vpop.f32.mrf.mxu0
    %v3838 = vadd.f32 %v3738, %v3837
    %v3839 = vpop.f32.mrf.mxu0
    %3840 = vmatprep.mubr.f32.mxu0 0.0
    %3841 = vmatmul.mubr.f32.gmra.mxu0 %v3606
    %v3842 = vpop.f32.mrf.mxu0
    %v3843 = vadd.f32 %v3743, %v3842
    %v3844 = vpop.f32.mrf.mxu0
    %3845 = vdwg.mxu0
    %v3846 = vld [vmem:[%s4] sm:$0x1]
    %v3848 = vlaneseq
    %v3849 = vshrl.u32 %v3848, 7
    %v3850 = vsub.s32 0, %v3849
    %v3851 = vrot.slane %v3846, %v3850
    %v3853 = vadd.f32 %v3813, %v3851
    %v3854 = vadd.f32 %v3818, %v3851
    %v3855 = vadd.f32 %v3823, %v3851
    %v3856 = vadd.f32 %v3828, %v3851
    %v3857 = vadd.f32 %v3833, %v3851
    %v3858 = vadd.f32 %v3838, %v3851
    %v3859 = vadd.f32 %v3843, %v3851
    %v3860 = vmax.f32 %v3853, 0.0
    %v3861 = vmax.f32 %v3854, 0.0
    %v3862 = vmax.f32 %v3855, 0.0
    %v3863 = vmax.f32 %v3856, 0.0
    %v3864 = vmax.f32 %v3857, 0.0
    %v3865 = vmax.f32 %v3858, 0.0
    %v3866 = vmax.f32 %v3859, 0.0
    %3867 = vst.msk [vmem:[#allocation5] sm:$0xff] %vm2190, %v3860
    %3868 = vst.msk [vmem:[#allocation5 + $0x8] sm:$0xff] %vm2190, %v3861
    %3869 = vst.msk [vmem:[#allocation5 + $0x10] sm:$0xff] %vm2190, %v3862
    %3870 = vst.msk [vmem:[#allocation5 + $0x18] sm:$0xff] %vm2190, %v3863
    %3871 = vst.msk [vmem:[#allocation5 + $0x20] sm:$0xff] %vm2190, %v3864
    %3872 = vst.msk [vmem:[#allocation5 + $0x28] sm:$0xff] %vm2190, %v3865
    %3873 = vst.msk [vmem:[#allocation5 + $0x30] sm:$0xf] %vm2627, %v3866
    %v3874 = vld [vmem:[#allocation5] ss:$2 sm:$0xff]
    %v3875 = vld [vmem:[%s2212] ss:$2 sm:$0xff]
    %v3876 = vld [vmem:[%s2214] ss:$2 sm:$0xff]
    %v3877 = vld [vmem:[%s2216] ss:$2 sm:$0x3]
    %v3878 = vld [vmem:[%s2230] ss:$2 sm:$0xff]
    %v3879 = vld [vmem:[%s2232] ss:$2 sm:$0xff]
    %v3880 = vld [vmem:[%s2234] ss:$2 sm:$0xff]
    %v3881 = vld [vmem:[%s2236] ss:$2 sm:$0x3]
    %v3882 = vmax.f32 %v3874, %v3878
    %v3883 = vmax.f32 %v3875, %v3879
    %v3884 = vmax.f32 %v3876, %v3880
    %v3885 = vmax.f32 %v3877, %v3881
    %v3886 = vld [vmem:[%s5] sm:$0xff]
    %v3887 = vld [vmem:[%s5 + $0x8] sm:$0xff]
    %v3888 = vld [vmem:[%s5 + $0x10] sm:$0xff]
    %v3889 = vld [vmem:[%s5 + $0x18] sm:$0xff]
    %v3890 = vld [vmem:[%s5 + $0x20] sm:$0xff]
    %v3891 = vld [vmem:[%s5 + $0x28] sm:$0xff]
    %v3892 = vld [vmem:[%s5 + $0x30] sm:$0xff]
    %v3893 = vld [vmem:[%s5 + $0x38] sm:$0xff]
    %v3894 = vld [vmem:[%s5 + $0x40] sm:$0xff]
    %v3895 = vld [vmem:[%s5 + $0x48] sm:$0x7]
    %v3896 = vmul.f32 %v3886, %v3496
    %v3897 = vmul.f32 %v3887, %v3497
    %v3898 = vmul.f32 %v3888, %v3498
    %v3899 = vmul.f32 %v3889, %v3499
    %v3900 = vmul.f32 %v3890, %v3500
    %v3901 = vmul.f32 %v3891, %v3501
    %v3902 = vmul.f32 %v3892, %v3502
    %v3903 = vmul.f32 %v3893, %v3503
    %v3904 = vmul.f32 %v3894, %v3504
    %v3905 = vmul.f32 %v3895, %v3505
    %v3906 = vsel %vm2190, %v3896, 0.0
    %v3907 = vsel %vm2190, %v3897, 0.0
    %v3908 = vadd.f32 %v3906, %v3907
    %v3909 = vsel %vm2190, %v3898, 0.0
    %v3910 = vadd.f32 %v3908, %v3909
    %v3911 = vsel %vm2190, %v3899, 0.0
    %v3912 = vadd.f32 %v3910, %v3911
    %v3913 = vsel %vm2190, %v3900, 0.0
    %v3914 = vadd.f32 %v3912, %v3913
    %v3915 = vsel %vm2190, %v3901, 0.0
    %v3916 = vadd.f32 %v3914, %v3915
    %v3917 = vsel %vm2190, %v3902, 0.0
    %v3918 = vadd.f32 %v3916, %v3917
    %v3919 = vsel %vm2190, %v3903, 0.0
    %v3920 = vadd.f32 %v3918, %v3919
    %v3921 = vsel %vm2190, %v3904, 0.0
    %v3922 = vadd.f32 %v3920, %v3921
    %v3923 = vsel %vm2678, %v3905, 0.0
    %v3924 = vadd.f32 %v3922, %v3923
    %3925 = vadd.xlane.f32.xlu0 %v3924
    %v3926 = vpop.xlane.xlu0 %3925
    %v3927 = vrot.slane %v3926, 4
    %v3928 = vadd.f32 %v3926, %v3927
    %v3929 = vrot.slane %v3928, 2
    %v3930 = vadd.f32 %v3928, %v3929
    %v3931 = vrot.slane %v3930, 1
    %v3932 = vadd.f32 %v3930, %v3931
    %s3933 = vtos %v3932
    %s3934 = sld [smem:[#allocation6]]
    %s3935 = sadd.f32 %s3933, %s3934
    %v3936 = vld [vmem:[%s6] sm:$0xff]
    %v3937 = vld [vmem:[%s6 + $0x8] sm:$0xff]
    %v3938 = vld [vmem:[%s6 + $0x10] sm:$0xff]
    %v3939 = vld [vmem:[%s6 + $0x18] sm:$0x3]
    %v3940 = vmul.f32 %v3936, %v3882
    %v3941 = vmul.f32 %v3937, %v3883
    %v3942 = vmul.f32 %v3938, %v3884
    %v3943 = vmul.f32 %v3939, %v3885
    %v3944 = vsel %vm2190, %v3940, 0.0
    %v3945 = vsel %vm2190, %v3941, 0.0
    %v3946 = vadd.f32 %v3944, %v3945
    %v3947 = vsel %vm2190, %v3942, 0.0
    %v3948 = vadd.f32 %v3946, %v3947
    %v3949 = vsel %vm2705, %v3943, 0.0
    %v3950 = vadd.f32 %v3948, %v3949
    %3951 = vadd.xlane.f32.xlu0 %v3950
    %v3952 = vpop.xlane.xlu0 %3951
    %v3953 = vrot.slane %v3952, 4
    %v3954 = vadd.f32 %v3952, %v3953
    %v3955 = vrot.slane %v3954, 2
    %v3956 = vadd.f32 %v3954, %v3955
    %v3957 = vrot.slane %v3956, 1
    %v3958 = vadd.f32 %v3956, %v3957
    %s3959 = vtos %v3958
    %s3960 = sld [smem:[#allocation6 + $0x1]]
    %s3961 = sadd.f32 %s3959, %s3960
    %v3962 = vld [vmem:[%s2719] sm:$0xff]
    %v3963 = vld [vmem:[%s2719 + $0x8] sm:$0xff]
    %v3964 = vld [vmem:[%s2719 + $0x10] sm:$0xff]
    %v3965 = vld [vmem:[%s2719 + $0x18] sm:$0x3]
    %v3966 = vmul.f32 %v3962, %v3882
    %v3967 = vmul.f32 %v3963, %v3883
    %v3968 = vmul.f32 %v3964, %v3884
    %v3969 = vmul.f32 %v3965, %v3885
    %v3970 = vsel %vm2190, %v3966, 0.0
    %v3971 = vsel %vm2190, %v3967, 0.0
    %v3972 = vadd.f32 %v3970, %v3971
    %v3973 = vsel %vm2190, %v3968, 0.0
    %v3974 = vadd.f32 %v3972, %v3973
    %v3975 = vsel %vm2705, %v3969, 0.0
    %v3976 = vadd.f32 %v3974, %v3975
    %3977 = vadd.xlane.f32.xlu0 %v3976
    %v3978 = vpop.xlane.xlu0 %3977
    %v3979 = vrot.slane %v3978, 4
    %v3980 = vadd.f32 %v3978, %v3979
    %v3981 = vrot.slane %v3980, 2
    %v3982 = vadd.f32 %v3980, %v3981
    %v3983 = vrot.slane %v3982, 1
    %v3984 = vadd.f32 %v3982, %v3983
    %s3985 = vtos %v3984
    %s3986 = sld [smem:[#allocation6 + $0x2]]
    %s3987 = sadd.f32 %s3985, %s3986
    %s3988 = smul.f32 %s3935, %s3961
    %s3989 = smul.f32 %s3935, %s3987
    %v3990 = vstv %s3988
    %v3991 = vstv %s3989
    %v3992 = vsel %vm2746, %v3990, %v3991
    %3993 = vst.msk [vmem:[#allocation9 + $0x1] sm:$0x1] %vm2752, %v3992
    // Predicated region
    $region38: #{tpu_custom_call.1} parent=1 // pred_check
      _
    $region39: #{tpu_custom_call.1} parent=1 // pred_check_branch
      %3995 = sbr.rel (0) target = $region41
    $region40: #{tpu_custom_call.1} parent=1 // pred_region
      %s3997 = ssub.s32 32, 32
      %3998 = vsyncadd [#allocation7], %s3997
      %s4000 = sshll.u32 [#allocation9], 4
      %s4001 = int_to_ptr.vmem [resolvable:$true] %s4000
      %4003 = dma.vmem_to_hbm [thread:$0]  %s4001, 32, %s8, [#allocation7]
    $region41: #{tpu_custom_call.1} parent=1 // pred_fallthru
      _
    // Predicated region
    $region42: #{tpu_custom_call.1} parent=1 // pred_check
      _
    $region43: #{tpu_custom_call.1} parent=1 // pred_check_branch
      %4005 = sbr.rel (0) target = $region45
    $region44: #{tpu_custom_call.1} parent=1 // pred_region
      %4006 = dma.done [#allocation7], 32
    $region45: #{tpu_custom_call.1} parent=1 // pred_fallthru
      _
    %4007 = vsyncpa [#allocation7], 1
    %4008 = vsyncpa [#allocation8], 1

</llo_original>
